<compile_context>
chip_gen: v6e
topology: v6e:2x2x1
jax: 0.10.0
libtpu: 0.0.40
codegen_flags: <defaults>
</compile_context>

<pallas_src>
import functools
import numpy as np
import jax
import jax.numpy as jnp
from jax import lax
from jax.experimental import pallas as pl
from jax.experimental.pallas import tpu as pltpu


# --------------------------- shared in-kernel conv ---------------------------
def _im2col_conv3x3(src, w, b, *, relu):
    """3x3 / stride-1 conv as one im2col matmul.

    src : (N, H+2, W+2, Cin) f32, zero halo border already in place
    w   : (9*Cin, Cout)      bf16, tap-major (kh, kw, cin) rows
    b   : (1, Cout)          f32
    returns (N, H, W, Cout)  f32
    """
    N, Hp, Wp, Cin = src.shape
    H, W = Hp - 2, Wp - 2
    taps = [src[:, kh:kh + H, kw:kw + W, :]
            for kh in range(3) for kw in range(3)]
    patch = jnp.concatenate(taps, axis=-1)                     # (N, H, W, 9*Cin)
    patch = patch.reshape(N * H * W, 9 * Cin).astype(jnp.bfloat16)
    acc = jnp.dot(patch, w, preferred_element_type=jnp.float32)  # (M, Cout) f32
    acc = acc + b.astype(jnp.float32)
    if relu:
        acc = jnp.maximum(acc, 0.0)
    return acc.reshape(N, H, W, -1)


# --------------------- fused conv_in + residual-block chain -------------------
def _backbone_kernel(H, W, xp_ref, w_ref, b_ref, o_ref, carry_ref, h_ref):
    """Grid axis = conv-layer chain. Step 0: conv_in (+ReLU). Steps 1..nb:
    residual block l-1 (conv+ReLU, conv, +carry). Carry / h live in VMEM
    scratch in padded form (zero halo is written once and never touched)."""
    l = pl.program_id(0)
    nl = pl.num_programs(0)

    w_pair = w_ref[0]            # (2, 9*C, C) bf16   (streamed per layer)
    b_pair = b_ref[0]            # (2, C)      f32

    @pl.when(l == 0)
    def _conv_in():
        carry_ref[...] = jnp.zeros_like(carry_ref)   # zero halo once
        h_ref[...] = jnp.zeros_like(h_ref)
        y = _im2col_conv3x3(xp_ref[...], w_pair[0], b_pair[0:1], relu=True)
        carry_ref[:, 1:H + 1, 1:W + 1, :] = y

    @pl.when(l > 0)
    def _resblock():
        c = carry_ref[...]
        h = _im2col_conv3x3(c, w_pair[0], b_pair[0:1], relu=True)
        h_ref[:, 1:H + 1, 1:W + 1, :] = h
        y = _im2col_conv3x3(h_ref[...], w_pair[1], b_pair[1:2], relu=False)
        carry_ref[:, 1:H + 1, 1:W + 1, :] = y + c[:, 1:H + 1, 1:W + 1, :]

    @pl.when(l == nl - 1)
    def _emit():
        o_ref[...] = carry_ref[...]


def fused_backbone(xp, wstack, bstack):
    """xp: (N, H+2, W+2, nf) f32 padded input (channels already padded to nf).
    wstack: (nb+1, 2, 9*nf, nf) bf16; bstack: (nb+1, 2, nf) f32."""
    N, Hp, Wp, C = xp.shape
    H, W = Hp - 2, Wp - 2
    nsteps = wstack.shape[0]
    K = wstack.shape[2]
    kernel = functools.partial(_backbone_kernel, H, W)
    return pl.pallas_call(
        kernel,
        out_shape=jax.ShapeDtypeStruct((N, Hp, Wp, C), jnp.float32),
        grid=(nsteps,),
        in_specs=[
            pl.BlockSpec((N, Hp, Wp, C), lambda l: (0, 0, 0, 0)),   # resident
            pl.BlockSpec((1, 2, K, C), lambda l: (l, 0, 0, 0)),     # streamed
            pl.BlockSpec((1, 2, C), lambda l: (l, 0, 0)),           # streamed
        ],
        out_specs=pl.BlockSpec((N, Hp, Wp, C), lambda l: (0, 0, 0, 0)),
        scratch_shapes=[pltpu.VMEM((N, Hp, Wp, C), jnp.float32),    # carry
                        pltpu.VMEM((N, Hp, Wp, C), jnp.float32)],   # h
        compiler_params=pltpu.CompilerParams(
            dimension_semantics=("arbitrary",),        # layer chain is sequential
            vmem_limit_bytes=48 * 1024 * 1024),
    )(xp, wstack, bstack)


# ------------------ PixelShuffle(4)+ReLU+conv_out (subpixel conv) -------------
def _convout_kernel(xp_ref, w_ref, b_ref, o_ref):
    # ReLU commutes with PixelShuffle, so apply it on the pre-shuffle features.
    src = jnp.maximum(xp_ref[...], 0.0)
    o_ref[...] = _im2col_conv3x3(src, w_ref[...], b_ref[...], relu=False)


def subpixel_conv_out(feat_p, w_sub, b_sub):
    """feat_p: (N, H+2, W+2, nf) f32 padded; w_sub: (9*nf, out_nc*r*r) bf16;
    b_sub: (1, out_nc*r*r) f32. Returns (N, H, W, out_nc*r*r) f32."""
    N, Hp, Wp, C = feat_p.shape
    H, W = Hp - 2, Wp - 2
    K, Cout = w_sub.shape
    return pl.pallas_call(
        _convout_kernel,
        out_shape=jax.ShapeDtypeStruct((N, H, W, Cout), jnp.float32),
        grid=(1,),
        in_specs=[pl.BlockSpec((N, Hp, Wp, C), lambda i: (0, 0, 0, 0)),
                  pl.BlockSpec((K, Cout), lambda i: (0, 0)),
                  pl.BlockSpec((1, Cout), lambda i: (0, 0))],
        out_specs=pl.BlockSpec((N, H, W, Cout), lambda i: (0, 0, 0, 0)),
        compiler_params=pltpu.CompilerParams(
            dimension_semantics=("arbitrary",)),
    )(feat_p, w_sub, b_sub)


# --------------------------------- glue ops -----------------------------------
def pixel_shuffle_nhwc(x, r):
    """NHWC equivalent of torch.nn.PixelShuffle(r) applied on NCHW tensors."""
    N, H, W, Crr = x.shape
    C = Crr // (r * r)
    x = x.reshape(N, H, W, C, r, r)
    x = jnp.transpose(x, (0, 1, 4, 2, 5, 3))
    return x.reshape(N, H * r, W * r, C)


def make_subpixel_weight(w_out, r):
    """Fold Conv2d(cin, out_nc, 3, pad=1) applied AFTER PixelShuffle(r) into an
    exactly-equivalent 3x3 conv applied BEFORE the shuffle.
    w_out: (out_nc, cin, 3, 3)  ->  (out_nc*r*r, cin*r*r, 3, 3)."""
    out_nc, cin, KH, KW = w_out.shape
    w_sub = np.zeros((out_nc * r * r, cin * r * r, KH, KW), np.float32)
    for co in range(out_nc):
        for dy in range(r):
            for dx in range(r):
                o = co * r * r + dy * r + dx
                for kh in range(KH):
                    t = dy + kh - 1
                    di, a = t // r, t % r
                    for kw in range(KW):
                        s = dx + kw - 1
                        dj, b = s // r, s % r
                        for ci in range(cin):
                            q = ci * r * r + a * r + b
                            w_sub[o, q, di + 1, dj + 1] += w_out[co, ci, kh, kw]
    return w_sub


# ------------------------------ weight packing ---------------------------------
def pack_params(params, scale=4):
    """One-time host-side packing into the layouts the kernels consume."""
    nf = params["w_in"].shape[0]
    cin0 = params["w_in"].shape[1]
    assert cin0 <= nf, "conv_in channel padding assumes cin <= nf"

    def to_mat(w):  # (Cout, Cin, 3, 3) -> (9*Cin, Cout), tap-major rows
        cout, cin = w.shape[0], w.shape[1]
        return jnp.transpose(w, (2, 3, 1, 0)).reshape(9 * cin, cout)

    # conv_in: zero-pad Cin up to nf so every layer is a (9*nf -> nf) matmul
    w_in = jnp.pad(params["w_in"], ((0, 0), (0, nf - cin0), (0, 0), (0, 0)))
    w_in_mat = to_mat(w_in)                              # (9*nf, nf)
    w1_mat = jax.vmap(to_mat)(params["w1"])              # (nb, 9*nf, nf)
    w2_mat = jax.vmap(to_mat)(params["w2"])              # (nb, 9*nf, nf)

    w0 = jnp.stack([w_in_mat, jnp.zeros_like(w_in_mat)], axis=0)[None]
    wb = jnp.stack([w1_mat, w2_mat], axis=1)
    wstack = jnp.concatenate([w0, wb], axis=0).astype(jnp.bfloat16)  # (nb+1,2,9nf,nf)

    b0 = jnp.stack([params["b_in"], jnp.zeros_like(params["b_in"])], axis=0)[None]
    bb = jnp.stack([params["b1"], params["b2"]], axis=1)
    bstack = jnp.concatenate([b0, bb], axis=0).astype(jnp.float32)   # (nb+1,2,nf)

    # conv_out folded through PixelShuffle(scale) -> subpixel conv (nf -> out_nc*r*r)
    w_sub_np = make_subpixel_weight(np.asarray(params["w_out"]), scale)
    w_sub = jnp.asarray(
        np.transpose(w_sub_np, (2, 3, 1, 0)).reshape(9 * nf, -1)).astype(jnp.bfloat16)
    b_sub = jnp.asarray(
        np.repeat(np.asarray(params["b_out"]), scale * scale)[None, :]).astype(jnp.float32)

    return {"wstack": wstack, "bstack": bstack, "w_sub": w_sub, "b_sub": b_sub}


# ------------------------------- FRNet forward --------------------------------
@functools.partial(jax.jit, static_argnames=("scale",))
def forward_pallas(x_nchw, packed, scale=4):
    wstack, bstack = packed["wstack"], packed["bstack"]
    w_sub, b_sub = packed["w_sub"], packed["b_sub"]
    nf = wstack.shape[-1]
    N, C0, H, W = x_nchw.shape

    x = jnp.transpose(x_nchw, (0, 2, 3, 1))                       # NCHW -> NHWC
    # single pad for the whole network: 1-px spatial halo + channel pad to nf
    xp = jnp.pad(x, ((0, 0), (1, 1), (1, 1), (0, nf - C0)))

    feat = fused_backbone(xp, wstack, bstack)                     # (N,H+2,W+2,nf)
    y = subpixel_conv_out(feat, w_sub, b_sub)                     # (N,H,W,out*r*r)
    y = pixel_shuffle_nhwc(y, scale)                              # (N,rH,rW,out)
    return jnp.transpose(y, (0, 3, 1, 2))                         # NHWC -> NCHW
    # TODO(synk): for real image sizes, add a spatial-tile grid axis marked
    # "parallel" (v7x megacore) and re-derive the tile for 64 MiB VMEM.


# --------------------------- reference (pure JAX) ------------------------------
# Mirrors the kernel's numerics: bf16 MXU inputs, f32 accumulation / elementwise.
def conv3x3_ref(x, w, b):
    y = lax.conv_general_dilated(
        x.astype(jnp.bfloat16),
        jnp.transpose(w, (2, 3, 1, 0)).astype(jnp.bfloat16),
        (1, 1), "SAME",
        dimension_numbers=("NHWC", "HWIO", "NHWC"),
        preferred_element_type=jnp.float32)
    return y + b.reshape(1, 1, 1, -1)


def forward_ref(x_nchw, params, scale=4):
    x = jnp.transpose(x_nchw, (0, 2, 3, 1))
    out = jax.nn.relu(conv3x3_ref(x, params["w_in"], params["b_in"]))
    nb = params["w1"].shape[0]
    for i in range(nb):
        h = jax.nn.relu(conv3x3_ref(out, params["w1"][i], params["b1"][i]))
        out = conv3x3_ref(h, params["w2"][i], params["b2"][i]) + out
    out = jax.nn.relu(pixel_shuffle_nhwc(out, scale))
    out = conv3x3_ref(out, params["w_out"], params["b_out"])
    return jnp.transpose(out, (0, 3, 1, 2))


# ------------------------------- parameters ------------------------------------
def init_params(key, in_nc=3, out_nc=3, nf=64, nb=16, scale=4):
    cin0 = (scale ** 2 + 1) * in_nc                 # (4*4+1)*in_nc, as in SRNet.conv_in
    ks = jax.random.split(key, 10)
    s = 0.03
    return {
        "w_in": s * jax.random.normal(ks[0], (nf, cin0, 3, 3), jnp.float32),
        "b_in": s * jax.random.normal(ks[1], (nf,), jnp.float32),
        "w1":   s * jax.random.normal(ks[2], (nb, nf, nf, 3, 3), jnp.float32),
        "b1":   s * jax.random.normal(ks[3], (nb, nf), jnp.float32),
        "w2":   s * jax.random.normal(ks[4], (nb, nf, nf, 3, 3), jnp.float32),
        "b2":   s * jax.random.normal(ks[5], (nb, nf), jnp.float32),
        "w_out": s * jax.random.normal(ks[6], (out_nc, nf // (scale ** 2), 3, 3), jnp.float32),
        "b_out": s * jax.random.normal(ks[7], (out_nc,), jnp.float32),
    }


# ----------------------------------- main ---------------------------------------
if __name__ == "__main__":
    in_nc, out_nc, nf, nb, scale = 3, 3, 64, 16, 4
    N, H, W = 2, 8, 8

    key = jax.random.PRNGKey(0)
    kx, kp = jax.random.split(key)
    x = jax.random.normal(kx, (N, (scale ** 2 + 1) * in_nc, H, W), jnp.float32)
    params = init_params(kp, in_nc, out_nc, nf, nb, scale)
    packed = pack_params(params, scale=scale)

    y = jax.block_until_ready(forward_pallas(x, packed, scale=scale))
    assert y.shape == (N, out_nc, H * scale, W * scale), y.shape

    y_ref = jax.block_until_ready(forward_ref(x, params, scale=scale))
    np.testing.assert_allclose(np.asarray(y), np.asarray(y_ref), rtol=2e-3, atol=2e-3)

    print("KERNEL_OK")
</pallas_src>

<mosaic_0001>
module attributes {stable_mosaic.version = 11 : i64} {
  func.func @_backbone_kernel(%arg0: i32, %arg1: memref<2x10x10x64xf32, #tpu.memory_space<vmem>>, %arg2: memref<1x2x576x64xbf16, #tpu.memory_space<vmem>>, %arg3: memref<1x2x64xf32, #tpu.memory_space<vmem>>, %arg4: memref<2x10x10x64xf32, #tpu.memory_space<vmem>>, %arg5: memref<2x10x10x64xf32, #tpu.memory_space<vmem>>, %arg6: memref<2x10x10x64xf32, #tpu.memory_space<vmem>>) attributes {dimension_semantics = [#tpu.dimension_semantics<arbitrary>], iteration_bounds = array<i64: 17>, scalar_prefetch = 0 : i64, scratch_operands = 2 : i64, tpu.core_type = #tpu.core_type<tc>, window_params = [{pipeline_mode = #tpu.pipeline_mode<synchronous>, transform_indices = @transform_0, window_bounds = array<i64: 2, 10, 10, 64>}, {transform_indices = @transform_1, window_bounds = array<i64: 1, 2, 576, 64>}, {transform_indices = @transform_2, window_bounds = array<i64: 1, 2, 64>}, {pipeline_mode = #tpu.pipeline_mode<synchronous>, transform_indices = @transform_3, window_bounds = array<i64: 2, 10, 10, 64>}]} {
    %c0 = arith.constant 0 : index
    %c0_0 = arith.constant 0 : index
    %c0_1 = arith.constant 0 : index
    %c0_2 = arith.constant 0 : index
    %0 = vector.load %arg2[%c0, %c0_0, %c0_1, %c0_2] : memref<1x2x576x64xbf16, #tpu.memory_space<vmem>>, vector<1x2x576x64xbf16>
    %1 = vector.shape_cast %0 : vector<1x2x576x64xbf16> to vector<2x576x64xbf16>
    %c0_3 = arith.constant 0 : index
    %c0_4 = arith.constant 0 : index
    %c0_5 = arith.constant 0 : index
    %2 = vector.load %arg3[%c0_3, %c0_4, %c0_5] : memref<1x2x64xf32, #tpu.memory_space<vmem>>, vector<1x2x64xf32>
    %3 = vector.shape_cast %2 : vector<1x2x64xf32> to vector<2x64xf32>
    %c0_i32 = arith.constant 0 : i32
    %4 = arith.cmpi eq, %arg0, %c0_i32 : i32
    %5 = arith.extui %4 : i1 to i32
    %c0_i32_6 = arith.constant 0 : i32
    %6 = arith.cmpi ne, %5, %c0_i32_6 : i32
    scf.if %6 {
      %cst = arith.constant 0.000000e+00 : f32
      %13 = vector.broadcast %cst : f32 to vector<2x10x10x64xf32>
      %c0_10 = arith.constant 0 : index
      %c0_11 = arith.constant 0 : index
      %c0_12 = arith.constant 0 : index
      %c0_13 = arith.constant 0 : index
      %14 = vector.load %arg5[%c0_10, %c0_11, %c0_12, %c0_13] : memref<2x10x10x64xf32, #tpu.memory_space<vmem>>, vector<2x10x10x64xf32>
      tpu.vector_store %arg5[%c0_10, %c0_11, %c0_12, %c0_13], %13 {strides = array<i32>} : memref<2x10x10x64xf32, #tpu.memory_space<vmem>>, vector<2x10x10x64xf32>,
      %cst_14 = arith.constant 0.000000e+00 : f32
      %15 = vector.broadcast %cst_14 : f32 to vector<2x10x10x64xf32>
      %c0_15 = arith.constant 0 : index
      %c0_16 = arith.constant 0 : index
      %c0_17 = arith.constant 0 : index
      %c0_18 = arith.constant 0 : index
      %16 = vector.load %arg6[%c0_15, %c0_16, %c0_17, %c0_18] : memref<2x10x10x64xf32, #tpu.memory_space<vmem>>, vector<2x10x10x64xf32>
      tpu.vector_store %arg6[%c0_15, %c0_16, %c0_17, %c0_18], %15 {strides = array<i32>} : memref<2x10x10x64xf32, #tpu.memory_space<vmem>>, vector<2x10x10x64xf32>,
      %c0_19 = arith.constant 0 : index
      %c0_20 = arith.constant 0 : index
      %c0_21 = arith.constant 0 : index
      %c0_22 = arith.constant 0 : index
      %17 = vector.load %arg1[%c0_19, %c0_20, %c0_21, %c0_22] : memref<2x10x10x64xf32, #tpu.memory_space<vmem>>, vector<2x10x10x64xf32>
      %18 = vector.extract_strided_slice %1 {offsets = [0, 0, 0], sizes = [1, 576, 64], strides = [1, 1, 1]} : vector<2x576x64xbf16> to vector<1x576x64xbf16>
      %19 = vector.shape_cast %18 : vector<1x576x64xbf16> to vector<576x64xbf16>
      %20 = vector.extract_strided_slice %3 {offsets = [0, 0], sizes = [1, 64], strides = [1, 1]} : vector<2x64xf32> to vector<1x64xf32>
      %21 = vector.extract_strided_slice %17 {offsets = [0, 0, 0, 0], sizes = [2, 8, 8, 64], strides = [1, 1, 1, 1]} : vector<2x10x10x64xf32> to vector<2x8x8x64xf32>
      %22 = vector.extract_strided_slice %17 {offsets = [0, 0, 1, 0], sizes = [2, 8, 8, 64], strides = [1, 1, 1, 1]} : vector<2x10x10x64xf32> to vector<2x8x8x64xf32>
      %23 = vector.extract_strided_slice %17 {offsets = [0, 0, 2, 0], sizes = [2, 8, 8, 64], strides = [1, 1, 1, 1]} : vector<2x10x10x64xf32> to vector<2x8x8x64xf32>
      %24 = vector.extract_strided_slice %17 {offsets = [0, 1, 0, 0], sizes = [2, 8, 8, 64], strides = [1, 1, 1, 1]} : vector<2x10x10x64xf32> to vector<2x8x8x64xf32>
      %25 = vector.extract_strided_slice %17 {offsets = [0, 1, 1, 0], sizes = [2, 8, 8, 64], strides = [1, 1, 1, 1]} : vector<2x10x10x64xf32> to vector<2x8x8x64xf32>
      %26 = vector.extract_strided_slice %17 {offsets = [0, 1, 2, 0], sizes = [2, 8, 8, 64], strides = [1, 1, 1, 1]} : vector<2x10x10x64xf32> to vector<2x8x8x64xf32>
      %27 = vector.extract_strided_slice %17 {offsets = [0, 2, 0, 0], sizes = [2, 8, 8, 64], strides = [1, 1, 1, 1]} : vector<2x10x10x64xf32> to vector<2x8x8x64xf32>
      %28 = vector.extract_strided_slice %17 {offsets = [0, 2, 1, 0], sizes = [2, 8, 8, 64], strides = [1, 1, 1, 1]} : vector<2x10x10x64xf32> to vector<2x8x8x64xf32>
      %29 = vector.extract_strided_slice %17 {offsets = [0, 2, 2, 0], sizes = [2, 8, 8, 64], strides = [1, 1, 1, 1]} : vector<2x10x10x64xf32> to vector<2x8x8x64xf32>
      %30 = tpu.concatenate %21, %22, %23, %24, %25, %26, %27, %28, %29 in 3 : vector<2x8x8x64xf32>, vector<2x8x8x64xf32>, vector<2x8x8x64xf32>, vector<2x8x8x64xf32>, vector<2x8x8x64xf32>, vector<2x8x8x64xf32>, vector<2x8x8x64xf32>, vector<2x8x8x64xf32>, vector<2x8x8x64xf32> -> vector<2x8x8x576xf32>
      %31 = vector.shape_cast %30 : vector<2x8x8x576xf32> to vector<128x576xf32>
      %32 = arith.truncf %31 : vector<128x576xf32> to vector<128x576xbf16>
      %cst_23 = arith.constant dense<0.000000e+00> : vector<128x64xf32>
      %33 = tpu.matmul %32, %19, %cst_23 {dimension_numbers = #tpu.dot_dimension_numbers<[1], [0], [0], [1], [0, 0, 1, 1], [], []>} : vector<128x576xbf16>, vector<576x64xbf16>, vector<128x64xf32> -> vector<128x64xf32>
      %34 = vector.broadcast %20 : vector<1x64xf32> to vector<128x64xf32>
      %35 = arith.addf %33, %34 : vector<128x64xf32>
      %cst_24 = arith.constant 0.000000e+00 : f32
      %36 = vector.broadcast %cst_24 : f32 to vector<128x64xf32>
      %37 = arith.maximumf %35, %36 : vector<128x64xf32>
      %38 = vector.shape_cast %37 : vector<128x64xf32> to vector<2x8x8x64xf32>
      %c0_25 = arith.constant 0 : index
      %c1 = arith.constant 1 : index
      %c1_26 = arith.constant 1 : index
      %c0_27 = arith.constant 0 : index
      %39 = vector.load %arg5[%c0_25, %c1, %c1_26, %c0_27] : memref<2x10x10x64xf32, #tpu.memory_space<vmem>>, vector<2x8x8x64xf32>
      tpu.vector_store %arg5[%c0_25, %c1, %c1_26, %c0_27], %38 {strides = array<i32>} : memref<2x10x10x64xf32, #tpu.memory_space<vmem>>, vector<2x8x8x64xf32>,
    } else {
    }
    %c0_i32_7 = arith.constant 0 : i32
    %7 = arith.cmpi sgt, %arg0, %c0_i32_7 : i32
    %8 = arith.extui %7 : i1 to i32
    %c0_i32_8 = arith.constant 0 : i32
    %9 = arith.cmpi ne, %8, %c0_i32_8 : i32
    scf.if %9 {
      %c0_10 = arith.constant 0 : index
      %c0_11 = arith.constant 0 : index
      %c0_12 = arith.constant 0 : index
      %c0_13 = arith.constant 0 : index
      %13 = vector.load %arg5[%c0_10, %c0_11, %c0_12, %c0_13] : memref<2x10x10x64xf32, #tpu.memory_space<vmem>>, vector<2x10x10x64xf32>
      %14 = vector.extract_strided_slice %1 {offsets = [0, 0, 0], sizes = [1, 576, 64], strides = [1, 1, 1]} : vector<2x576x64xbf16> to vector<1x576x64xbf16>
      %15 = vector.shape_cast %14 : vector<1x576x64xbf16> to vector<576x64xbf16>
      %16 = vector.extract_strided_slice %3 {offsets = [0, 0], sizes = [1, 64], strides = [1, 1]} : vector<2x64xf32> to vector<1x64xf32>
      %17 = vector.extract_strided_slice %13 {offsets = [0, 0, 0, 0], sizes = [2, 8, 8, 64], strides = [1, 1, 1, 1]} : vector<2x10x10x64xf32> to vector<2x8x8x64xf32>
      %18 = vector.extract_strided_slice %13 {offsets = [0, 0, 1, 0], sizes = [2, 8, 8, 64], strides = [1, 1, 1, 1]} : vector<2x10x10x64xf32> to vector<2x8x8x64xf32>
      %19 = vector.extract_strided_slice %13 {offsets = [0, 0, 2, 0], sizes = [2, 8, 8, 64], strides = [1, 1, 1, 1]} : vector<2x10x10x64xf32> to vector<2x8x8x64xf32>
      %20 = vector.extract_strided_slice %13 {offsets = [0, 1, 0, 0], sizes = [2, 8, 8, 64], strides = [1, 1, 1, 1]} : vector<2x10x10x64xf32> to vector<2x8x8x64xf32>
      %21 = vector.extract_strided_slice %13 {offsets = [0, 1, 1, 0], sizes = [2, 8, 8, 64], strides = [1, 1, 1, 1]} : vector<2x10x10x64xf32> to vector<2x8x8x64xf32>
      %22 = vector.extract_strided_slice %13 {offsets = [0, 1, 2, 0], sizes = [2, 8, 8, 64], strides = [1, 1, 1, 1]} : vector<2x10x10x64xf32> to vector<2x8x8x64xf32>
      %23 = vector.extract_strided_slice %13 {offsets = [0, 2, 0, 0], sizes = [2, 8, 8, 64], strides = [1, 1, 1, 1]} : vector<2x10x10x64xf32> to vector<2x8x8x64xf32>
      %24 = vector.extract_strided_slice %13 {offsets = [0, 2, 1, 0], sizes = [2, 8, 8, 64], strides = [1, 1, 1, 1]} : vector<2x10x10x64xf32> to vector<2x8x8x64xf32>
      %25 = vector.extract_strided_slice %13 {offsets = [0, 2, 2, 0], sizes = [2, 8, 8, 64], strides = [1, 1, 1, 1]} : vector<2x10x10x64xf32> to vector<2x8x8x64xf32>
      %26 = tpu.concatenate %17, %18, %19, %20, %21, %22, %23, %24, %25 in 3 : vector<2x8x8x64xf32>, vector<2x8x8x64xf32>, vector<2x8x8x64xf32>, vector<2x8x8x64xf32>, vector<2x8x8x64xf32>, vector<2x8x8x64xf32>, vector<2x8x8x64xf32>, vector<2x8x8x64xf32>, vector<2x8x8x64xf32> -> vector<2x8x8x576xf32>
      %27 = vector.shape_cast %26 : vector<2x8x8x576xf32> to vector<128x576xf32>
      %28 = arith.truncf %27 : vector<128x576xf32> to vector<128x576xbf16>
      %cst = arith.constant dense<0.000000e+00> : vector<128x64xf32>
      %29 = tpu.matmul %28, %15, %cst {dimension_numbers = #tpu.dot_dimension_numbers<[1], [0], [0], [1], [0, 0, 1, 1], [], []>} : vector<128x576xbf16>, vector<576x64xbf16>, vector<128x64xf32> -> vector<128x64xf32>
      %30 = vector.broadcast %16 : vector<1x64xf32> to vector<128x64xf32>
      %31 = arith.addf %29, %30 : vector<128x64xf32>
      %cst_14 = arith.constant 0.000000e+00 : f32
      %32 = vector.broadcast %cst_14 : f32 to vector<128x64xf32>
      %33 = arith.maximumf %31, %32 : vector<128x64xf32>
      %34 = vector.shape_cast %33 : vector<128x64xf32> to vector<2x8x8x64xf32>
      %c0_15 = arith.constant 0 : index
      %c1 = arith.constant 1 : index
      %c1_16 = arith.constant 1 : index
      %c0_17 = arith.constant 0 : index
      %35 = vector.load %arg6[%c0_15, %c1, %c1_16, %c0_17] : memref<2x10x10x64xf32, #tpu.memory_space<vmem>>, vector<2x8x8x64xf32>
      tpu.vector_store %arg6[%c0_15, %c1, %c1_16, %c0_17], %34 {strides = array<i32>} : memref<2x10x10x64xf32, #tpu.memory_space<vmem>>, vector<2x8x8x64xf32>,
      %c0_18 = arith.constant 0 : index
      %c0_19 = arith.constant 0 : index
      %c0_20 = arith.constant 0 : index
      %c0_21 = arith.constant 0 : index
      %36 = vector.load %arg6[%c0_18, %c0_19, %c0_20, %c0_21] : memref<2x10x10x64xf32, #tpu.memory_space<vmem>>, vector<2x10x10x64xf32>
      %37 = vector.extract_strided_slice %1 {offsets = [1, 0, 0], sizes = [1, 576, 64], strides = [1, 1, 1]} : vector<2x576x64xbf16> to vector<1x576x64xbf16>
      %38 = vector.shape_cast %37 : vector<1x576x64xbf16> to vector<576x64xbf16>
      %39 = vector.extract_strided_slice %3 {offsets = [1, 0], sizes = [1, 64], strides = [1, 1]} : vector<2x64xf32> to vector<1x64xf32>
      %40 = vector.extract_strided_slice %36 {offsets = [0, 0, 0, 0], sizes = [2, 8, 8, 64], strides = [1, 1, 1, 1]} : vector<2x10x10x64xf32> to vector<2x8x8x64xf32>
      %41 = vector.extract_strided_slice %36 {offsets = [0, 0, 1, 0], sizes = [2, 8, 8, 64], strides = [1, 1, 1, 1]} : vector<2x10x10x64xf32> to vector<2x8x8x64xf32>
      %42 = vector.extract_strided_slice %36 {offsets = [0, 0, 2, 0], sizes = [2, 8, 8, 64], strides = [1, 1, 1, 1]} : vector<2x10x10x64xf32> to vector<2x8x8x64xf32>
      %43 = vector.extract_strided_slice %36 {offsets = [0, 1, 0, 0], sizes = [2, 8, 8, 64], strides = [1, 1, 1, 1]} : vector<2x10x10x64xf32> to vector<2x8x8x64xf32>
      %44 = vector.extract_strided_slice %36 {offsets = [0, 1, 1, 0], sizes = [2, 8, 8, 64], strides = [1, 1, 1, 1]} : vector<2x10x10x64xf32> to vector<2x8x8x64xf32>
      %45 = vector.extract_strided_slice %36 {offsets = [0, 1, 2, 0], sizes = [2, 8, 8, 64], strides = [1, 1, 1, 1]} : vector<2x10x10x64xf32> to vector<2x8x8x64xf32>
      %46 = vector.extract_strided_slice %36 {offsets = [0, 2, 0, 0], sizes = [2, 8, 8, 64], strides = [1, 1, 1, 1]} : vector<2x10x10x64xf32> to vector<2x8x8x64xf32>
      %47 = vector.extract_strided_slice %36 {offsets = [0, 2, 1, 0], sizes = [2, 8, 8, 64], strides = [1, 1, 1, 1]} : vector<2x10x10x64xf32> to vector<2x8x8x64xf32>
      %48 = vector.extract_strided_slice %36 {offsets = [0, 2, 2, 0], sizes = [2, 8, 8, 64], strides = [1, 1, 1, 1]} : vector<2x10x10x64xf32> to vector<2x8x8x64xf32>
      %49 = tpu.concatenate %40, %41, %42, %43, %44, %45, %46, %47, %48 in 3 : vector<2x8x8x64xf32>, vector<2x8x8x64xf32>, vector<2x8x8x64xf32>, vector<2x8x8x64xf32>, vector<2x8x8x64xf32>, vector<2x8x8x64xf32>, vector<2x8x8x64xf32>, vector<2x8x8x64xf32>, vector<2x8x8x64xf32> -> vector<2x8x8x576xf32>
      %50 = vector.shape_cast %49 : vector<2x8x8x576xf32> to vector<128x576xf32>
      %51 = arith.truncf %50 : vector<128x576xf32> to vector<128x576xbf16>
      %cst_22 = arith.constant dense<0.000000e+00> : vector<128x64xf32>
      %52 = tpu.matmul %51, %38, %cst_22 {dimension_numbers = #tpu.dot_dimension_numbers<[1], [0], [0], [1], [0, 0, 1, 1], [], []>} : vector<128x576xbf16>, vector<576x64xbf16>, vector<128x64xf32> -> vector<128x64xf32>
      %53 = vector.broadcast %39 : vector<1x64xf32> to vector<128x64xf32>
      %54 = arith.addf %52, %53 : vector<128x64xf32>
      %55 = vector.shape_cast %54 : vector<128x64xf32> to vector<2x8x8x64xf32>
      %56 = vector.extract_strided_slice %13 {offsets = [0, 1, 1, 0], sizes = [2, 8, 8, 64], strides = [1, 1, 1, 1]} : vector<2x10x10x64xf32> to vector<2x8x8x64xf32>
      %57 = arith.addf %55, %56 : vector<2x8x8x64xf32>
      %c0_23 = arith.constant 0 : index
      %c1_24 = arith.constant 1 : index
      %c1_25 = arith.constant 1 : index
      %c0_26 = arith.constant 0 : index
      %58 = vector.load %arg5[%c0_23, %c1_24, %c1_25, %c0_26] : memref<2x10x10x64xf32, #tpu.memory_space<vmem>>, vector<2x8x8x64xf32>
      tpu.vector_store %arg5[%c0_23, %c1_24, %c1_25, %c0_26], %57 {strides = array<i32>} : memref<2x10x10x64xf32, #tpu.memory_space<vmem>>, vector<2x8x8x64xf32>,
    } else {
    }
    %c16_i32 = arith.constant 16 : i32
    %10 = arith.cmpi eq, %arg0, %c16_i32 : i32
    %11 = arith.extui %10 : i1 to i32
    %c0_i32_9 = arith.constant 0 : i32
    %12 = arith.cmpi ne, %11, %c0_i32_9 : i32
    scf.if %12 {
      %c0_10 = arith.constant 0 : index
      %c0_11 = arith.constant 0 : index
      %c0_12 = arith.constant 0 : index
      %c0_13 = arith.constant 0 : index
      %13 = vector.load %arg5[%c0_10, %c0_11, %c0_12, %c0_13] : memref<2x10x10x64xf32, #tpu.memory_space<vmem>>, vector<2x10x10x64xf32>
      %c0_14 = arith.constant 0 : index
      %c0_15 = arith.constant 0 : index
      %c0_16 = arith.constant 0 : index
      %c0_17 = arith.constant 0 : index
      %14 = vector.load %arg4[%c0_14, %c0_15, %c0_16, %c0_17] : memref<2x10x10x64xf32, #tpu.memory_space<vmem>>, vector<2x10x10x64xf32>
      tpu.vector_store %arg4[%c0_14, %c0_15, %c0_16, %c0_17], %13 {strides = array<i32>} : memref<2x10x10x64xf32, #tpu.memory_space<vmem>>, vector<2x10x10x64xf32>,
    } else {
    }
    return
  }
  func.func @transform_0(%arg0: i32) -> (i32, i32, i32, i32) {
    %c0_i32 = arith.constant 0 : i32
    %c0_i32_0 = arith.constant 0 : i32
    %c0_i32_1 = arith.constant 0 : i32
    %c0_i32_2 = arith.constant 0 : i32
    %c0_i32_3 = arith.constant 0 : i32
    return %c0_i32, %c0_i32_0, %c0_i32_1, %c0_i32_2 : i32, i32, i32, i32
  }
  func.func @transform_1(%arg0: i32) -> (i32, i32, i32, i32) {
    %c0_i32 = arith.constant 0 : i32
    %c0_i32_0 = arith.constant 0 : i32
    %c0_i32_1 = arith.constant 0 : i32
    %c0_i32_2 = arith.constant 0 : i32
    return %arg0, %c0_i32, %c0_i32_0, %c0_i32_1 : i32, i32, i32, i32
  }
  func.func @transform_2(%arg0: i32) -> (i32, i32, i32) {
    %c0_i32 = arith.constant 0 : i32
    %c0_i32_0 = arith.constant 0 : i32
    %c0_i32_1 = arith.constant 0 : i32
    return %arg0, %c0_i32, %c0_i32_0 : i32, i32, i32
  }
  func.func @transform_3(%arg0: i32) -> (i32, i32, i32, i32) {
    %c0_i32 = arith.constant 0 : i32
    %c0_i32_0 = arith.constant 0 : i32
    %c0_i32_1 = arith.constant 0 : i32
    %c0_i32_2 = arith.constant 0 : i32
    %c0_i32_3 = arith.constant 0 : i32
    return %c0_i32, %c0_i32_0, %c0_i32_1, %c0_i32_2 : i32, i32, i32, i32
  }
}

module attributes {stable_mosaic.version = 11 : i64} {
  func.func @_convout_kernel(%arg0: i32, %arg1: memref<2x10x10x64xf32, #tpu.memory_space<vmem>>, %arg2: memref<576x48xbf16, #tpu.memory_space<vmem>>, %arg3: memref<1x48xf32, #tpu.memory_space<vmem>>, %arg4: memref<2x8x8x48xf32, #tpu.memory_space<vmem>>) attributes {dimension_semantics = [#tpu.dimension_semantics<arbitrary>], iteration_bounds = array<i64: 1>, scalar_prefetch = 0 : i64, scratch_operands = 0 : i64, tpu.core_type = #tpu.core_type<tc>, window_params = [{pipeline_mode = #tpu.pipeline_mode<synchronous>, transform_indices = @transform_0, window_bounds = array<i64: 2, 10, 10, 64>}, {pipeline_mode = #tpu.pipeline_mode<synchronous>, transform_indices = @transform_1, window_bounds = array<i64: 576, 48>}, {pipeline_mode = #tpu.pipeline_mode<synchronous>, transform_indices = @transform_2, window_bounds = array<i64: 1, 48>}, {pipeline_mode = #tpu.pipeline_mode<synchronous>, transform_indices = @transform_3, window_bounds = array<i64: 2, 8, 8, 48>}]} {
    %c0 = arith.constant 0 : index
    %c0_0 = arith.constant 0 : index
    %c0_1 = arith.constant 0 : index
    %c0_2 = arith.constant 0 : index
    %0 = vector.load %arg1[%c0, %c0_0, %c0_1, %c0_2] : memref<2x10x10x64xf32, #tpu.memory_space<vmem>>, vector<2x10x10x64xf32>
    %cst = arith.constant 0.000000e+00 : f32
    %1 = vector.broadcast %cst : f32 to vector<2x10x10x64xf32>
    %2 = arith.maximumf %0, %1 : vector<2x10x10x64xf32>
    %c0_3 = arith.constant 0 : index
    %c0_4 = arith.constant 0 : index
    %3 = vector.load %arg2[%c0_3, %c0_4] : memref<576x48xbf16, #tpu.memory_space<vmem>>, vector<576x48xbf16>
    %c0_5 = arith.constant 0 : index
    %c0_6 = arith.constant 0 : index
    %4 = vector.load %arg3[%c0_5, %c0_6] : memref<1x48xf32, #tpu.memory_space<vmem>>, vector<1x48xf32>
    %5 = vector.extract_strided_slice %2 {offsets = [0, 0, 0, 0], sizes = [2, 8, 8, 64], strides = [1, 1, 1, 1]} : vector<2x10x10x64xf32> to vector<2x8x8x64xf32>
    %6 = vector.extract_strided_slice %2 {offsets = [0, 0, 1, 0], sizes = [2, 8, 8, 64], strides = [1, 1, 1, 1]} : vector<2x10x10x64xf32> to vector<2x8x8x64xf32>
    %7 = vector.extract_strided_slice %2 {offsets = [0, 0, 2, 0], sizes = [2, 8, 8, 64], strides = [1, 1, 1, 1]} : vector<2x10x10x64xf32> to vector<2x8x8x64xf32>
    %8 = vector.extract_strided_slice %2 {offsets = [0, 1, 0, 0], sizes = [2, 8, 8, 64], strides = [1, 1, 1, 1]} : vector<2x10x10x64xf32> to vector<2x8x8x64xf32>
    %9 = vector.extract_strided_slice %2 {offsets = [0, 1, 1, 0], sizes = [2, 8, 8, 64], strides = [1, 1, 1, 1]} : vector<2x10x10x64xf32> to vector<2x8x8x64xf32>
    %10 = vector.extract_strided_slice %2 {offsets = [0, 1, 2, 0], sizes = [2, 8, 8, 64], strides = [1, 1, 1, 1]} : vector<2x10x10x64xf32> to vector<2x8x8x64xf32>
    %11 = vector.extract_strided_slice %2 {offsets = [0, 2, 0, 0], sizes = [2, 8, 8, 64], strides = [1, 1, 1, 1]} : vector<2x10x10x64xf32> to vector<2x8x8x64xf32>
    %12 = vector.extract_strided_slice %2 {offsets = [0, 2, 1, 0], sizes = [2, 8, 8, 64], strides = [1, 1, 1, 1]} : vector<2x10x10x64xf32> to vector<2x8x8x64xf32>
    %13 = vector.extract_strided_slice %2 {offsets = [0, 2, 2, 0], sizes = [2, 8, 8, 64], strides = [1, 1, 1, 1]} : vector<2x10x10x64xf32> to vector<2x8x8x64xf32>
    %14 = tpu.concatenate %5, %6, %7, %8, %9, %10, %11, %12, %13 in 3 : vector<2x8x8x64xf32>, vector<2x8x8x64xf32>, vector<2x8x8x64xf32>, vector<2x8x8x64xf32>, vector<2x8x8x64xf32>, vector<2x8x8x64xf32>, vector<2x8x8x64xf32>, vector<2x8x8x64xf32>, vector<2x8x8x64xf32> -> vector<2x8x8x576xf32>
    %15 = vector.shape_cast %14 : vector<2x8x8x576xf32> to vector<128x576xf32>
    %16 = arith.truncf %15 : vector<128x576xf32> to vector<128x576xbf16>
    %cst_7 = arith.constant dense<0.000000e+00> : vector<128x48xf32>
    %17 = tpu.matmul %16, %3, %cst_7 {dimension_numbers = #tpu.dot_dimension_numbers<[1], [0], [0], [1], [0, 0, 1, 1], [], []>} : vector<128x576xbf16>, vector<576x48xbf16>, vector<128x48xf32> -> vector<128x48xf32>
    %18 = vector.broadcast %4 : vector<1x48xf32> to vector<128x48xf32>
    %19 = arith.addf %17, %18 : vector<128x48xf32>
    %20 = vector.shape_cast %19 : vector<128x48xf32> to vector<2x8x8x48xf32>
    %c0_8 = arith.constant 0 : index
    %c0_9 = arith.constant 0 : index
    %c0_10 = arith.constant 0 : index
    %c0_11 = arith.constant 0 : index
    %21 = vector.load %arg4[%c0_8, %c0_9, %c0_10, %c0_11] : memref<2x8x8x48xf32, #tpu.memory_space<vmem>>, vector<2x8x8x48xf32>
    tpu.vector_store %arg4[%c0_8, %c0_9, %c0_10, %c0_11], %20 {strides = array<i32>} : memref<2x8x8x48xf32, #tpu.memory_space<vmem>>, vector<2x8x8x48xf32>,
    return
  }
  func.func @transform_0(%arg0: i32) -> (i32, i32, i32, i32) {
    %c0_i32 = arith.constant 0 : i32
    %c0_i32_0 = arith.constant 0 : i32
    %c0_i32_1 = arith.constant 0 : i32
    %c0_i32_2 = arith.constant 0 : i32
    %c0_i32_3 = arith.constant 0 : i32
    return %c0_i32, %c0_i32_0, %c0_i32_1, %c0_i32_2 : i32, i32, i32, i32
  }
  func.func @transform_1(%arg0: i32) -> (i32, i32) {
    %c0_i32 = arith.constant 0 : i32
    %c0_i32_0 = arith.constant 0 : i32
    %c0_i32_1 = arith.constant 0 : i32
    return %c0_i32, %c0_i32_0 : i32, i32
  }
  func.func @transform_2(%arg0: i32) -> (i32, i32) {
    %c0_i32 = arith.constant 0 : i32
    %c0_i32_0 = arith.constant 0 : i32
    %c0_i32_1 = arith.constant 0 : i32
    return %c0_i32, %c0_i32_0 : i32, i32
  }
  func.func @transform_3(%arg0: i32) -> (i32, i32, i32, i32) {
    %c0_i32 = arith.constant 0 : i32
    %c0_i32_0 = arith.constant 0 : i32
    %c0_i32_1 = arith.constant 0 : i32
    %c0_i32_2 = arith.constant 0 : i32
    %c0_i32_3 = arith.constant 0 : i32
    return %c0_i32, %c0_i32_0, %c0_i32_1, %c0_i32_2 : i32, i32, i32, i32
  }
}

</mosaic_0001>

<llo_original>
// kernel: forward_pallas.3
$region0: #{forward_pallas.3}
  #allocation0 [shape = 'u32[]', space=smem, size = 0x4, offset = 0x4, fixed_abs, tag = 'smem constant byte address 0x4 - core index']
  #allocation1 [shape = 'u32[144,128]{1,0:T(1,128)}', space=vmem, size = 0x12000, scoped, tag = 'internal scratch']
  %s0 = inlined_call_operand.vmem [shape: f32[2,10,10,64], index: 0, kind: input, shape index: {}]
  %s1 = inlined_call_operand.vmem [shape: bf16[576,48], index: 1, kind: input, shape index: {}]
  %s2 = inlined_call_operand.vmem [shape: f32[1,48], index: 2, kind: input, shape index: {}]
  %s3 = inlined_call_operand.vmem [shape: f32[2,8,8,48], index: 3, kind: output, shape index: {}]
  %s4 = sld [smem:[#allocation0]]
  $region22: #{forward_pallas.3} parent=0
    _
  %s6 = ssub.s32 1, %s4
  %s7 = scalar_select 0, %s6, %s4
  // Predicated region
  $region2: #{forward_pallas.3} parent=0 // pred_check
    _
  $region3: #{forward_pallas.3} parent=0 // pred_check_branch
    %9 = sbr.rel (0) target = $region5
  $region4: #{forward_pallas.3} parent=0 // pred_region
    _
  $region5: #{forward_pallas.3} parent=0 // pred_fallthru
    _
  // Predicated region
  $region6: #{forward_pallas.3} parent=0 // pred_check
    _
  $region7: #{forward_pallas.3} parent=0 // pred_check_branch
    %11 = sbr.rel (0) target = $region9
  $region8: #{forward_pallas.3} parent=0 // pred_region
    _
  $region9: #{forward_pallas.3} parent=0 // pred_fallthru
    _
  // Predicated region
  $region10: #{forward_pallas.3} parent=0 // pred_check
    _
  $region11: #{forward_pallas.3} parent=0 // pred_check_branch
    %13 = sbr.rel (0) target = $region13
  $region12: #{forward_pallas.3} parent=0 // pred_region
    _
  $region13: #{forward_pallas.3} parent=0 // pred_fallthru
    _
  %v15 = vld [vmem:[%s0] sm:$0xff]
  %v16 = vld [vmem:[%s0 + $0x8] sm:$0x3]
  %v17 = vld [vmem:[%s0 + $0x10] sm:$0xff]
  %v18 = vld [vmem:[%s0 + $0x18] sm:$0x3]
  %v19 = vld [vmem:[%s0 + $0x20] sm:$0xff]
  %v20 = vld [vmem:[%s0 + $0x28] sm:$0x3]
  %v21 = vld [vmem:[%s0 + $0x30] sm:$0xff]
  %v22 = vld [vmem:[%s0 + $0x38] sm:$0x3]
  %v23 = vld [vmem:[%s0 + $0x40] sm:$0xff]
  %v24 = vld [vmem:[%s0 + $0x48] sm:$0x3]
  %v25 = vld [vmem:[%s0 + $0x50] sm:$0xff]
  %v26 = vld [vmem:[%s0 + $0x58] sm:$0x3]
  %v27 = vld [vmem:[%s0 + $0x60] sm:$0xff]
  %v28 = vld [vmem:[%s0 + $0x68] sm:$0x3]
  %v29 = vld [vmem:[%s0 + $0x70] sm:$0xff]
  %v30 = vld [vmem:[%s0 + $0x78] sm:$0x3]
  %v31 = vld [vmem:[%s0 + $0x80] sm:$0xff]
  %v32 = vld [vmem:[%s0 + $0x88] sm:$0x3]
  %v33 = vld [vmem:[%s0 + $0x90] sm:$0xff]
  %v34 = vld [vmem:[%s0 + $0x98] sm:$0x3]
  %v35 = vld [vmem:[%s0 + $0xa0] sm:$0xff]
  %v36 = vld [vmem:[%s0 + $0xa8] sm:$0x3]
  %v37 = vld [vmem:[%s0 + $0xb0] sm:$0xff]
  %v38 = vld [vmem:[%s0 + $0xb8] sm:$0x3]
  %v39 = vld [vmem:[%s0 + $0xc0] sm:$0xff]
  %v40 = vld [vmem:[%s0 + $0xc8] sm:$0x3]
  %v41 = vld [vmem:[%s0 + $0xd0] sm:$0xff]
  %v42 = vld [vmem:[%s0 + $0xd8] sm:$0x3]
  %v43 = vld [vmem:[%s0 + $0xe0] sm:$0xff]
  %v44 = vld [vmem:[%s0 + $0xe8] sm:$0x3]
  %v45 = vld [vmem:[%s0 + $0xf0] sm:$0xff]
  %v46 = vld [vmem:[%s0 + $0xf8] sm:$0x3]
  %v47 = vld [vmem:[%s0 + $0x100] sm:$0xff]
  %v48 = vld [vmem:[%s0 + $0x108] sm:$0x3]
  %v49 = vld [vmem:[%s0 + $0x110] sm:$0xff]
  %v50 = vld [vmem:[%s0 + $0x118] sm:$0x3]
  %v51 = vld [vmem:[%s0 + $0x120] sm:$0xff]
  %v52 = vld [vmem:[%s0 + $0x128] sm:$0x3]
  %v53 = vld [vmem:[%s0 + $0x130] sm:$0xff]
  %v54 = vld [vmem:[%s0 + $0x138] sm:$0x3]
  %v55 = vmax.f32 %v15, 0.0
  %v56 = vmax.f32 %v16, 0.0
  %v57 = vmax.f32 %v17, 0.0
  %v58 = vmax.f32 %v18, 0.0
  %v59 = vmax.f32 %v19, 0.0
  %v60 = vmax.f32 %v20, 0.0
  %v61 = vmax.f32 %v21, 0.0
  %v62 = vmax.f32 %v22, 0.0
  %v63 = vmax.f32 %v23, 0.0
  %v64 = vmax.f32 %v24, 0.0
  %v65 = vmax.f32 %v25, 0.0
  %v66 = vmax.f32 %v26, 0.0
  %v67 = vmax.f32 %v27, 0.0
  %v68 = vmax.f32 %v28, 0.0
  %v69 = vmax.f32 %v29, 0.0
  %v70 = vmax.f32 %v30, 0.0
  %v71 = vmax.f32 %v31, 0.0
  %v72 = vmax.f32 %v32, 0.0
  %v73 = vmax.f32 %v33, 0.0
  %v74 = vmax.f32 %v34, 0.0
  %v75 = vmax.f32 %v35, 0.0
  %v76 = vmax.f32 %v36, 0.0
  %v77 = vmax.f32 %v37, 0.0
  %v78 = vmax.f32 %v38, 0.0
  %v79 = vmax.f32 %v39, 0.0
  %v80 = vmax.f32 %v40, 0.0
  %v81 = vmax.f32 %v41, 0.0
  %v82 = vmax.f32 %v42, 0.0
  %v83 = vmax.f32 %v43, 0.0
  %v84 = vmax.f32 %v44, 0.0
  %v85 = vmax.f32 %v45, 0.0
  %v86 = vmax.f32 %v46, 0.0
  %v87 = vmax.f32 %v47, 0.0
  %v88 = vmax.f32 %v48, 0.0
  %v89 = vmax.f32 %v49, 0.0
  %v90 = vmax.f32 %v50, 0.0
  %v91 = vmax.f32 %v51, 0.0
  %v92 = vmax.f32 %v52, 0.0
  %v93 = vmax.f32 %v53, 0.0
  %v94 = vmax.f32 %v54, 0.0
  %v95 = vld [vmem:[%s1] sm:$0xf]
  %v96 = vld [vmem:[%s1 + $0x4] sm:$0xf]
  %v97 = vld [vmem:[%s1 + $0x8] sm:$0xf]
  %v98 = vld [vmem:[%s1 + $0xc] sm:$0xf]
  %v99 = vld [vmem:[%s1 + $0x10] sm:$0xf]
  %v100 = vld [vmem:[%s1 + $0x14] sm:$0xf]
  %v101 = vld [vmem:[%s1 + $0x18] sm:$0xf]
  %v102 = vld [vmem:[%s1 + $0x1c] sm:$0xf]
  %v103 = vld [vmem:[%s1 + $0x20] sm:$0xf]
  %v104 = vld [vmem:[%s1 + $0x24] sm:$0xf]
  %v105 = vld [vmem:[%s1 + $0x28] sm:$0xf]
  %v106 = vld [vmem:[%s1 + $0x2c] sm:$0xf]
  %v107 = vld [vmem:[%s1 + $0x30] sm:$0xf]
  %v108 = vld [vmem:[%s1 + $0x34] sm:$0xf]
  %v109 = vld [vmem:[%s1 + $0x38] sm:$0xf]
  %v110 = vld [vmem:[%s1 + $0x3c] sm:$0xf]
  %v111 = vld [vmem:[%s1 + $0x40] sm:$0xf]
  %v112 = vld [vmem:[%s1 + $0x44] sm:$0xf]
  %v113 = vld [vmem:[%s1 + $0x48] sm:$0xf]
  %v114 = vld [vmem:[%s1 + $0x4c] sm:$0xf]
  %v115 = vld [vmem:[%s1 + $0x50] sm:$0xf]
  %v116 = vld [vmem:[%s1 + $0x54] sm:$0xf]
  %v117 = vld [vmem:[%s1 + $0x58] sm:$0xf]
  %v118 = vld [vmem:[%s1 + $0x5c] sm:$0xf]
  %v119 = vld [vmem:[%s1 + $0x60] sm:$0xf]
  %v120 = vld [vmem:[%s1 + $0x64] sm:$0xf]
  %v121 = vld [vmem:[%s1 + $0x68] sm:$0xf]
  %v122 = vld [vmem:[%s1 + $0x6c] sm:$0xf]
  %v123 = vld [vmem:[%s1 + $0x70] sm:$0xf]
  %v124 = vld [vmem:[%s1 + $0x74] sm:$0xf]
  %v125 = vld [vmem:[%s1 + $0x78] sm:$0xf]
  %v126 = vld [vmem:[%s1 + $0x7c] sm:$0xf]
  %v127 = vld [vmem:[%s1 + $0x80] sm:$0xf]
  %v128 = vld [vmem:[%s1 + $0x84] sm:$0xf]
  %v129 = vld [vmem:[%s1 + $0x88] sm:$0xf]
  %v130 = vld [vmem:[%s1 + $0x8c] sm:$0xf]
  %v131 = vld [vmem:[%s1 + $0x90] sm:$0xf]
  %v132 = vld [vmem:[%s1 + $0x94] sm:$0xf]
  %v133 = vld [vmem:[%s1 + $0x98] sm:$0xf]
  %v134 = vld [vmem:[%s1 + $0x9c] sm:$0xf]
  %v135 = vld [vmem:[%s1 + $0xa0] sm:$0xf]
  %v136 = vld [vmem:[%s1 + $0xa4] sm:$0xf]
  %v137 = vld [vmem:[%s1 + $0xa8] sm:$0xf]
  %v138 = vld [vmem:[%s1 + $0xac] sm:$0xf]
  %v139 = vld [vmem:[%s1 + $0xb0] sm:$0xf]
  %v140 = vld [vmem:[%s1 + $0xb4] sm:$0xf]
  %v141 = vld [vmem:[%s1 + $0xb8] sm:$0xf]
  %v142 = vld [vmem:[%s1 + $0xbc] sm:$0xf]
  %v143 = vld [vmem:[%s1 + $0xc0] sm:$0xf]
  %v144 = vld [vmem:[%s1 + $0xc4] sm:$0xf]
  %v145 = vld [vmem:[%s1 + $0xc8] sm:$0xf]
  %v146 = vld [vmem:[%s1 + $0xcc] sm:$0xf]
  %v147 = vld [vmem:[%s1 + $0xd0] sm:$0xf]
  %v148 = vld [vmem:[%s1 + $0xd4] sm:$0xf]
  %v149 = vld [vmem:[%s1 + $0xd8] sm:$0xf]
  %v150 = vld [vmem:[%s1 + $0xdc] sm:$0xf]
  %v151 = vld [vmem:[%s1 + $0xe0] sm:$0xf]
  %v152 = vld [vmem:[%s1 + $0xe4] sm:$0xf]
  %v153 = vld [vmem:[%s1 + $0xe8] sm:$0xf]
  %v154 = vld [vmem:[%s1 + $0xec] sm:$0xf]
  %v155 = vld [vmem:[%s1 + $0xf0] sm:$0xf]
  %v156 = vld [vmem:[%s1 + $0xf4] sm:$0xf]
  %v157 = vld [vmem:[%s1 + $0xf8] sm:$0xf]
  %v158 = vld [vmem:[%s1 + $0xfc] sm:$0xf]
  %v159 = vld [vmem:[%s1 + $0x100] sm:$0xf]
  %v160 = vld [vmem:[%s1 + $0x104] sm:$0xf]
  %v161 = vld [vmem:[%s1 + $0x108] sm:$0xf]
  %v162 = vld [vmem:[%s1 + $0x10c] sm:$0xf]
  %v163 = vld [vmem:[%s1 + $0x110] sm:$0xf]
  %v164 = vld [vmem:[%s1 + $0x114] sm:$0xf]
  %v165 = vld [vmem:[%s1 + $0x118] sm:$0xf]
  %v166 = vld [vmem:[%s1 + $0x11c] sm:$0xf]
  %v167 = vld [vmem:[%s2] sm:$0x1]
  %vm200 = vcmask 1046528
  %v201 = vrot.slane %v55, 1
  %v202 = vrot.slane %v56, 1
  %v203 = vsel %vm200, %v201, %v202
  %v204 = vrot.slane %v57, 1
  %v205 = vrot.slane %v58, 1
  %v206 = vsel %vm200, %v204, %v205
  %v207 = vrot.slane %v59, 1
  %v208 = vrot.slane %v60, 1
  %v209 = vsel %vm200, %v207, %v208
  %v210 = vrot.slane %v61, 1
  %v211 = vrot.slane %v62, 1
  %v212 = vsel %vm200, %v210, %v211
  %v213 = vrot.slane %v63, 1
  %v214 = vrot.slane %v64, 1
  %v215 = vsel %vm200, %v213, %v214
  %v216 = vrot.slane %v65, 1
  %v217 = vrot.slane %v66, 1
  %v218 = vsel %vm200, %v216, %v217
  %v219 = vrot.slane %v67, 1
  %v220 = vrot.slane %v68, 1
  %v221 = vsel %vm200, %v219, %v220
  %v222 = vrot.slane %v69, 1
  %v223 = vrot.slane %v70, 1
  %v224 = vsel %vm200, %v222, %v223
  %v225 = vrot.slane %v75, 1
  %v226 = vrot.slane %v76, 1
  %v227 = vsel %vm200, %v225, %v226
  %v228 = vrot.slane %v77, 1
  %v229 = vrot.slane %v78, 1
  %v230 = vsel %vm200, %v228, %v229
  %v231 = vrot.slane %v79, 1
  %v232 = vrot.slane %v80, 1
  %v233 = vsel %vm200, %v231, %v232
  %v234 = vrot.slane %v81, 1
  %v235 = vrot.slane %v82, 1
  %v236 = vsel %vm200, %v234, %v235
  %v237 = vrot.slane %v83, 1
  %v238 = vrot.slane %v84, 1
  %v239 = vsel %vm200, %v237, %v238
  %v240 = vrot.slane %v85, 1
  %v241 = vrot.slane %v86, 1
  %v242 = vsel %vm200, %v240, %v241
  %v243 = vrot.slane %v87, 1
  %v244 = vrot.slane %v88, 1
  %v245 = vsel %vm200, %v243, %v244
  %v246 = vrot.slane %v89, 1
  %v247 = vrot.slane %v90, 1
  %v248 = vsel %vm200, %v246, %v247
  %249 = vrot.lane.b32.xlu0 %v203, 64
  %v250 = vpop.permute.xlu0 %249
  %251 = vrot.lane.b32.xlu0 %v206, 64
  %v252 = vpop.permute.xlu0 %251
  %253 = vrot.lane.b32.xlu0 %v209, 64
  %v254 = vpop.permute.xlu0 %253
  %255 = vrot.lane.b32.xlu0 %v212, 64
  %v256 = vpop.permute.xlu0 %255
  %257 = vrot.lane.b32.xlu0 %v215, 64
  %v258 = vpop.permute.xlu0 %257
  %259 = vrot.lane.b32.xlu0 %v218, 64
  %v260 = vpop.permute.xlu0 %259
  %261 = vrot.lane.b32.xlu0 %v221, 64
  %v262 = vpop.permute.xlu0 %261
  %263 = vrot.lane.b32.xlu0 %v224, 64
  %v264 = vpop.permute.xlu0 %263
  %265 = vrot.lane.b32.xlu0 %v227, 64
  %v266 = vpop.permute.xlu0 %265
  %267 = vrot.lane.b32.xlu0 %v230, 64
  %v268 = vpop.permute.xlu0 %267
  %269 = vrot.lane.b32.xlu0 %v233, 64
  %v270 = vpop.permute.xlu0 %269
  %271 = vrot.lane.b32.xlu0 %v236, 64
  %v272 = vpop.permute.xlu0 %271
  %273 = vrot.lane.b32.xlu0 %v239, 64
  %v274 = vpop.permute.xlu0 %273
  %275 = vrot.lane.b32.xlu0 %v242, 64
  %v276 = vpop.permute.xlu0 %275
  %277 = vrot.lane.b32.xlu0 %v245, 64
  %v278 = vpop.permute.xlu0 %277
  %279 = vrot.lane.b32.xlu0 %v248, 64
  %v280 = vpop.permute.xlu0 %279
  %vm297 = vcmask 1045504
  %v298 = vrot.slane %v55, 2
  %v299 = vrot.slane %v56, 2
  %v300 = vsel %vm297, %v298, %v299
  %v301 = vrot.slane %v57, 2
  %v302 = vrot.slane %v58, 2
  %v303 = vsel %vm297, %v301, %v302
  %v304 = vrot.slane %v59, 2
  %v305 = vrot.slane %v60, 2
  %v306 = vsel %vm297, %v304, %v305
  %v307 = vrot.slane %v61, 2
  %v308 = vrot.slane %v62, 2
  %v309 = vsel %vm297, %v307, %v308
  %v310 = vrot.slane %v63, 2
  %v311 = vrot.slane %v64, 2
  %v312 = vsel %vm297, %v310, %v311
  %v313 = vrot.slane %v65, 2
  %v314 = vrot.slane %v66, 2
  %v315 = vsel %vm297, %v313, %v314
  %v316 = vrot.slane %v67, 2
  %v317 = vrot.slane %v68, 2
  %v318 = vsel %vm297, %v316, %v317
  %v319 = vrot.slane %v69, 2
  %v320 = vrot.slane %v70, 2
  %v321 = vsel %vm297, %v319, %v320
  %v322 = vrot.slane %v75, 2
  %v323 = vrot.slane %v76, 2
  %v324 = vsel %vm297, %v322, %v323
  %v325 = vrot.slane %v77, 2
  %v326 = vrot.slane %v78, 2
  %v327 = vsel %vm297, %v325, %v326
  %v328 = vrot.slane %v79, 2
  %v329 = vrot.slane %v80, 2
  %v330 = vsel %vm297, %v328, %v329
  %v331 = vrot.slane %v81, 2
  %v332 = vrot.slane %v82, 2
  %v333 = vsel %vm297, %v331, %v332
  %v334 = vrot.slane %v83, 2
  %v335 = vrot.slane %v84, 2
  %v336 = vsel %vm297, %v334, %v335
  %v337 = vrot.slane %v85, 2
  %v338 = vrot.slane %v86, 2
  %v339 = vsel %vm297, %v337, %v338
  %v340 = vrot.slane %v87, 2
  %v341 = vrot.slane %v88, 2
  %v342 = vsel %vm297, %v340, %v341
  %v343 = vrot.slane %v89, 2
  %v344 = vrot.slane %v90, 2
  %v345 = vsel %vm297, %v343, %v344
  %364 = vrot.lane.b32.xlu0 %v57, 64
  %v365 = vpop.permute.xlu0 %364
  %366 = vrot.lane.b32.xlu0 %v59, 64
  %v367 = vpop.permute.xlu0 %366
  %368 = vrot.lane.b32.xlu0 %v61, 64
  %v369 = vpop.permute.xlu0 %368
  %370 = vrot.lane.b32.xlu0 %v63, 64
  %v371 = vpop.permute.xlu0 %370
  %372 = vrot.lane.b32.xlu0 %v65, 64
  %v373 = vpop.permute.xlu0 %372
  %374 = vrot.lane.b32.xlu0 %v67, 64
  %v375 = vpop.permute.xlu0 %374
  %376 = vrot.lane.b32.xlu0 %v69, 64
  %v377 = vpop.permute.xlu0 %376
  %378 = vrot.lane.b32.xlu0 %v71, 64
  %v379 = vpop.permute.xlu0 %378
  %380 = vrot.lane.b32.xlu0 %v77, 64
  %v381 = vpop.permute.xlu0 %380
  %382 = vrot.lane.b32.xlu0 %v79, 64
  %v383 = vpop.permute.xlu0 %382
  %384 = vrot.lane.b32.xlu0 %v81, 64
  %v385 = vpop.permute.xlu0 %384
  %386 = vrot.lane.b32.xlu0 %v83, 64
  %v387 = vpop.permute.xlu0 %386
  %388 = vrot.lane.b32.xlu0 %v85, 64
  %v389 = vpop.permute.xlu0 %388
  %390 = vrot.lane.b32.xlu0 %v87, 64
  %v391 = vpop.permute.xlu0 %390
  %392 = vrot.lane.b32.xlu0 %v89, 64
  %v393 = vpop.permute.xlu0 %392
  %394 = vrot.lane.b32.xlu0 %v91, 64
  %v395 = vpop.permute.xlu0 %394
  %v414 = vrot.slane %v71, 1
  %v415 = vrot.slane %v72, 1
  %v416 = vsel %vm200, %v414, %v415
  %v417 = vrot.slane %v91, 1
  %v418 = vrot.slane %v92, 1
  %v419 = vsel %vm200, %v417, %v418
  %v436 = vrot.slane %v71, 2
  %v437 = vrot.slane %v72, 2
  %v438 = vsel %vm297, %v436, %v437
  %v439 = vrot.slane %v91, 2
  %v440 = vrot.slane %v92, 2
  %v441 = vsel %vm297, %v439, %v440
  %442 = vrot.lane.b32.xlu0 %v303, 64
  %v443 = vpop.permute.xlu0 %442
  %444 = vrot.lane.b32.xlu0 %v306, 64
  %v445 = vpop.permute.xlu0 %444
  %446 = vrot.lane.b32.xlu0 %v309, 64
  %v447 = vpop.permute.xlu0 %446
  %448 = vrot.lane.b32.xlu0 %v312, 64
  %v449 = vpop.permute.xlu0 %448
  %450 = vrot.lane.b32.xlu0 %v315, 64
  %v451 = vpop.permute.xlu0 %450
  %452 = vrot.lane.b32.xlu0 %v318, 64
  %v453 = vpop.permute.xlu0 %452
  %454 = vrot.lane.b32.xlu0 %v321, 64
  %v455 = vpop.permute.xlu0 %454
  %456 = vrot.lane.b32.xlu0 %v438, 64
  %v457 = vpop.permute.xlu0 %456
  %458 = vrot.lane.b32.xlu0 %v327, 64
  %v459 = vpop.permute.xlu0 %458
  %460 = vrot.lane.b32.xlu0 %v330, 64
  %v461 = vpop.permute.xlu0 %460
  %462 = vrot.lane.b32.xlu0 %v333, 64
  %v463 = vpop.permute.xlu0 %462
  %464 = vrot.lane.b32.xlu0 %v336, 64
  %v465 = vpop.permute.xlu0 %464
  %466 = vrot.lane.b32.xlu0 %v339, 64
  %v467 = vpop.permute.xlu0 %466
  %468 = vrot.lane.b32.xlu0 %v342, 64
  %v469 = vpop.permute.xlu0 %468
  %470 = vrot.lane.b32.xlu0 %v345, 64
  %v471 = vpop.permute.xlu0 %470
  %472 = vrot.lane.b32.xlu0 %v441, 64
  %v473 = vpop.permute.xlu0 %472
  %v494 = vrot.slane %v73, 1
  %v495 = vrot.slane %v74, 1
  %v496 = vsel %vm200, %v494, %v495
  %v497 = vrot.slane %v93, 1
  %v498 = vrot.slane %v94, 1
  %v499 = vsel %vm200, %v497, %v498
  %500 = vrot.lane.b32.xlu0 %v416, 64
  %v501 = vpop.permute.xlu0 %500
  %502 = vrot.lane.b32.xlu0 %v496, 64
  %v503 = vpop.permute.xlu0 %502
  %504 = vrot.lane.b32.xlu0 %v419, 64
  %v505 = vpop.permute.xlu0 %504
  %506 = vrot.lane.b32.xlu0 %v499, 64
  %v507 = vpop.permute.xlu0 %506
  %v512 = vrot.slane %v73, 2
  %v513 = vrot.slane %v74, 2
  %v514 = vsel %vm297, %v512, %v513
  %v515 = vrot.slane %v93, 2
  %v516 = vrot.slane %v94, 2
  %v517 = vsel %vm297, %v515, %v516
  %vm522 = vcmask 523264
  %v523 = vsel %vm522, %v55, %v250
  %v524 = vsel %vm522, %v57, %v252
  %v525 = vsel %vm522, %v59, %v254
  %v526 = vsel %vm522, %v61, %v256
  %v527 = vsel %vm522, %v63, %v258
  %v528 = vsel %vm522, %v65, %v260
  %v529 = vsel %vm522, %v67, %v262
  %v530 = vsel %vm522, %v69, %v264
  %v531 = vsel %vm522, %v75, %v266
  %v532 = vsel %vm522, %v77, %v268
  %v533 = vsel %vm522, %v79, %v270
  %v534 = vsel %vm522, %v81, %v272
  %v535 = vsel %vm522, %v83, %v274
  %v536 = vsel %vm522, %v85, %v276
  %v537 = vsel %vm522, %v87, %v278
  %v538 = vsel %vm522, %v89, %v280
  %v539 = vsel %vm522, %v300, %v365
  %v540 = vsel %vm522, %v303, %v367
  %v541 = vsel %vm522, %v306, %v369
  %v542 = vsel %vm522, %v309, %v371
  %v543 = vsel %vm522, %v312, %v373
  %v544 = vsel %vm522, %v315, %v375
  %v545 = vsel %vm522, %v318, %v377
  %v546 = vsel %vm522, %v321, %v379
  %v547 = vsel %vm522, %v324, %v381
  %v548 = vsel %vm522, %v327, %v383
  %v549 = vsel %vm522, %v330, %v385
  %v550 = vsel %vm522, %v333, %v387
  %v551 = vsel %vm522, %v336, %v389
  %v552 = vsel %vm522, %v339, %v391
  %v553 = vsel %vm522, %v342, %v393
  %v554 = vsel %vm522, %v345, %v395
  %v555 = vsel %vm522, %v206, %v443
  %v556 = vsel %vm522, %v209, %v445
  %v557 = vsel %vm522, %v212, %v447
  %v558 = vsel %vm522, %v215, %v449
  %v559 = vsel %vm522, %v218, %v451
  %v560 = vsel %vm522, %v221, %v453
  %v561 = vsel %vm522, %v224, %v455
  %v562 = vsel %vm522, %v416, %v457
  %v563 = vsel %vm522, %v230, %v459
  %v564 = vsel %vm522, %v233, %v461
  %v565 = vsel %vm522, %v236, %v463
  %v566 = vsel %vm522, %v239, %v465
  %v567 = vsel %vm522, %v242, %v467
  %v568 = vsel %vm522, %v245, %v469
  %v569 = vsel %vm522, %v248, %v471
  %v570 = vsel %vm522, %v419, %v473
  %v571 = vsel %vm522, %v71, %v501
  %v572 = vsel %vm522, %v73, %v503
  %v573 = vsel %vm522, %v91, %v505
  %v574 = vsel %vm522, %v93, %v507
  %v575 = vpack.c.bf16 %v524, %v523
  %v576 = vpack.c.bf16 %v540, %v539
  %v577 = vpack.c.bf16 %v556, %v555
  %v578 = vpack.c.bf16 %v526, %v525
  %v579 = vpack.c.bf16 %v309, %v306
  %v580 = vpack.c.bf16 %v542, %v541
  %v581 = vpack.c.bf16 %v558, %v557
  %v582 = vpack.c.bf16 %v528, %v527
  %v583 = vpack.c.bf16 %v315, %v312
  %v584 = vpack.c.bf16 %v544, %v543
  %v585 = vpack.c.bf16 %v560, %v559
  %v586 = vpack.c.bf16 %v530, %v529
  %v587 = vpack.c.bf16 %v321, %v318
  %v588 = vpack.c.bf16 %v546, %v545
  %v589 = vpack.c.bf16 %v562, %v561
  %v590 = vpack.c.bf16 %v572, %v571
  %v591 = vpack.c.bf16 %v514, %v438
  %v592 = vpack.c.bf16 %v532, %v531
  %v593 = vpack.c.bf16 %v548, %v547
  %v594 = vpack.c.bf16 %v564, %v563
  %v595 = vpack.c.bf16 %v534, %v533
  %v596 = vpack.c.bf16 %v333, %v330
  %v597 = vpack.c.bf16 %v550, %v549
  %v598 = vpack.c.bf16 %v566, %v565
  %v599 = vpack.c.bf16 %v536, %v535
  %v600 = vpack.c.bf16 %v339, %v336
  %v601 = vpack.c.bf16 %v552, %v551
  %v602 = vpack.c.bf16 %v568, %v567
  %v603 = vpack.c.bf16 %v538, %v537
  %v604 = vpack.c.bf16 %v345, %v342
  %v605 = vpack.c.bf16 %v554, %v553
  %v606 = vpack.c.bf16 %v570, %v569
  %v607 = vpack.c.bf16 %v574, %v573
  %v608 = vpack.c.bf16 %v517, %v441
  %v610 = vlaneseq
  %v611 = vshrl.u32 %v610, 7
  %v612 = vsub.s32 0, %v611
  %v613 = vrot.slane %v167, %v612
  %v687 = vunpack.c.l.b16 %v95
  %v688 = vunpack.c.l.b16 %v96
  %v689 = vunpack.c.l.b16 %v97
  %v690 = vunpack.c.l.b16 %v98
  %v691 = vunpack.c.l.b16 %v99
  %v692 = vunpack.c.l.b16 %v100
  %v693 = vunpack.c.l.b16 %v101
  %v694 = vunpack.c.l.b16 %v102
  %v695 = vunpack.c.l.b16 %v103
  %v696 = vunpack.c.l.b16 %v104
  %v697 = vunpack.c.l.b16 %v105
  %v698 = vunpack.c.l.b16 %v106
  %v699 = vunpack.c.l.b16 %v107
  %v700 = vunpack.c.l.b16 %v108
  %v701 = vunpack.c.l.b16 %v109
  %v702 = vunpack.c.l.b16 %v110
  %v703 = vunpack.c.l.b16 %v111
  %v704 = vunpack.c.l.b16 %v112
  %v705 = vunpack.c.l.b16 %v113
  %v706 = vunpack.c.l.b16 %v114
  %v707 = vunpack.c.l.b16 %v115
  %v708 = vunpack.c.l.b16 %v116
  %v709 = vunpack.c.l.b16 %v117
  %v710 = vunpack.c.l.b16 %v118
  %v711 = vunpack.c.l.b16 %v119
  %v712 = vunpack.c.l.b16 %v120
  %v713 = vunpack.c.l.b16 %v121
  %v714 = vunpack.c.l.b16 %v122
  %v715 = vunpack.c.l.b16 %v123
  %v716 = vunpack.c.l.b16 %v124
  %v717 = vunpack.c.l.b16 %v125
  %v718 = vunpack.c.l.b16 %v126
  %v719 = vunpack.c.l.b16 %v127
  %v720 = vunpack.c.l.b16 %v128
  %v721 = vunpack.c.l.b16 %v129
  %v722 = vunpack.c.l.b16 %v130
  %v723 = vunpack.c.l.b16 %v131
  %v724 = vunpack.c.l.b16 %v132
  %v725 = vunpack.c.l.b16 %v133
  %v726 = vunpack.c.l.b16 %v134
  %v727 = vunpack.c.l.b16 %v135
  %v728 = vunpack.c.l.b16 %v136
  %v729 = vunpack.c.l.b16 %v137
  %v730 = vunpack.c.l.b16 %v138
  %v731 = vunpack.c.l.b16 %v139
  %v732 = vunpack.c.l.b16 %v140
  %v733 = vunpack.c.l.b16 %v141
  %v734 = vunpack.c.l.b16 %v142
  %v735 = vunpack.c.l.b16 %v143
  %v736 = vunpack.c.l.b16 %v144
  %v737 = vunpack.c.l.b16 %v145
  %v738 = vunpack.c.l.b16 %v146
  %v739 = vunpack.c.l.b16 %v147
  %v740 = vunpack.c.l.b16 %v148
  %v741 = vunpack.c.l.b16 %v149
  %v742 = vunpack.c.l.b16 %v150
  %v743 = vunpack.c.l.b16 %v151
  %v744 = vunpack.c.l.b16 %v152
  %v745 = vunpack.c.l.b16 %v153
  %v746 = vunpack.c.l.b16 %v154
  %v747 = vunpack.c.l.b16 %v155
  %v748 = vunpack.c.l.b16 %v156
  %v749 = vunpack.c.l.b16 %v157
  %v750 = vunpack.c.l.b16 %v158
  %v751 = vunpack.c.l.b16 %v159
  %v752 = vunpack.c.l.b16 %v160
  %v753 = vunpack.c.l.b16 %v161
  %v754 = vunpack.c.l.b16 %v162
  %v755 = vunpack.c.l.b16 %v163
  %v756 = vunpack.c.l.b16 %v164
  %v757 = vunpack.c.l.b16 %v165
  %v758 = vunpack.c.l.b16 %v166
  %v759 = vpack.c.b16 %v688, %v687
  %v760 = vpack.c.b16 %v690, %v689
  %v761 = vpack.c.b16 %v692, %v691
  %v762 = vpack.c.b16 %v694, %v693
  %v763 = vpack.c.b16 %v696, %v695
  %v764 = vpack.c.b16 %v698, %v697
  %v765 = vpack.c.b16 %v700, %v699
  %v766 = vpack.c.b16 %v702, %v701
  %v767 = vpack.c.b16 %v704, %v703
  %v768 = vpack.c.b16 %v706, %v705
  %v769 = vpack.c.b16 %v708, %v707
  %v770 = vpack.c.b16 %v710, %v709
  %v771 = vpack.c.b16 %v712, %v711
  %v772 = vpack.c.b16 %v714, %v713
  %v773 = vpack.c.b16 %v716, %v715
  %v774 = vpack.c.b16 %v718, %v717
  %v775 = vpack.c.b16 %v720, %v719
  %v776 = vpack.c.b16 %v722, %v721
  %v777 = vpack.c.b16 %v724, %v723
  %v778 = vpack.c.b16 %v726, %v725
  %v779 = vpack.c.b16 %v728, %v727
  %v780 = vpack.c.b16 %v730, %v729
  %v781 = vpack.c.b16 %v732, %v731
  %v782 = vpack.c.b16 %v734, %v733
  %v783 = vpack.c.b16 %v736, %v735
  %v784 = vpack.c.b16 %v738, %v737
  %v785 = vpack.c.b16 %v740, %v739
  %v786 = vpack.c.b16 %v742, %v741
  %v787 = vpack.c.b16 %v744, %v743
  %v788 = vpack.c.b16 %v746, %v745
  %v789 = vpack.c.b16 %v748, %v747
  %v790 = vpack.c.b16 %v750, %v749
  %v791 = vpack.c.b16 %v752, %v751
  %v792 = vpack.c.b16 %v754, %v753
  %v793 = vpack.c.b16 %v756, %v755
  %v794 = vpack.c.b16 %v758, %v757
  %v832 = vsel %vm522, %v579, 0
  %v835 = vsel %vm522, %v583, 0
  %v838 = vsel %vm522, %v587, 0
  %v841 = vsel %vm522, %v591, 0
  %v844 = vsel %vm522, %v596, 0
  %v847 = vsel %vm522, %v600, 0
  %v850 = vsel %vm522, %v604, 0
  %v853 = vsel %vm522, %v608, 0
  %855 = vmatprep.subr.bf16.mxu0 0
  %856 = vmatpush1.bf16.msra.mxu0 %v766
  %857 = vmatprep.subr.bf16.mxu0 0
  %858 = vmatpush1.bf16.msra.mxu0 %v765
  %859 = vmatprep.subr.bf16.mxu0 0
  %860 = vmatpush1.bf16.msra.mxu0 %v764
  %861 = vmatprep.subr.bf16.mxu0 0
  %862 = vmatpush1.bf16.msra.mxu0 %v763
  %863 = vmatprep.subr.bf16.mxu0 0
  %864 = vmatpush1.bf16.msra.mxu0 %v762
  %865 = vmatprep.subr.bf16.mxu0 0
  %866 = vmatpush1.bf16.msra.mxu0 %v761
  %867 = vmatprep.subr.bf16.mxu0 0
  %868 = vmatpush1.bf16.msra.mxu0 %v760
  %869 = vmatprep.subr.bf16.mxu0 0
  %870 = vmatpush1.bf16.msra.mxu0 %v759
  %871 = vmatprep.subr.bf16.mxu0 0
  %872 = vmatpush2.bf16.msra.mxu0 %v774
  %873 = vmatprep.subr.bf16.mxu0 0
  %874 = vmatpush2.bf16.msra.mxu0 %v773
  %875 = vmatprep.subr.bf16.mxu0 0
  %876 = vmatpush2.bf16.msra.mxu0 %v772
  %877 = vmatprep.subr.bf16.mxu0 0
  %878 = vmatpush2.bf16.msra.mxu0 %v771
  %879 = vmatprep.subr.bf16.mxu0 0
  %880 = vmatpush2.bf16.msra.mxu0 %v770
  %881 = vmatprep.subr.bf16.mxu0 0
  %882 = vmatpush2.bf16.msra.mxu0 %v769
  %883 = vmatprep.subr.bf16.mxu0 0
  %884 = vmatpush2.bf16.msra.mxu0 %v768
  %885 = vmatprep.subr.bf16.mxu0 0
  %886 = vmatpush2.bf16.msra.mxu0 %v767
  %887 = vmatprep.mubr.bf16.mxu0 %v576
  %888 = vmatmul.mubr.bf16.gmra.mxu0 %v575
  %v889 = vpop.f32.mrf.mxu0
  %v890 = vadd.f32 %v613, %v889
  %v891 = vpop.f32.mrf.mxu0
  %v892 = vpop.f32.mrf.mxu0
  %v893 = vadd.f32 %v613, %v892
  %v894 = vpop.f32.mrf.mxu0
  %895 = vmatprep.mubr.bf16.mxu0 %v580
  %896 = vmatmul.mubr.bf16.gmra.mxu0 %v578
  %v897 = vpop.f32.mrf.mxu0
  %v898 = vadd.f32 %v613, %v897
  %v899 = vpop.f32.mrf.mxu0
  %v900 = vpop.f32.mrf.mxu0
  %v901 = vadd.f32 %v613, %v900
  %v902 = vpop.f32.mrf.mxu0
  %903 = vmatprep.mubr.bf16.mxu0 %v584
  %904 = vmatmul.mubr.bf16.gmra.mxu0 %v582
  %v905 = vpop.f32.mrf.mxu0
  %v906 = vadd.f32 %v613, %v905
  %v907 = vpop.f32.mrf.mxu0
  %v908 = vpop.f32.mrf.mxu0
  %v909 = vadd.f32 %v613, %v908
  %v910 = vpop.f32.mrf.mxu0
  %911 = vmatprep.mubr.bf16.mxu0 %v588
  %912 = vmatmul.mubr.bf16.gmra.mxu0 %v586
  %v913 = vpop.f32.mrf.mxu0
  %v914 = vadd.f32 %v613, %v913
  %v915 = vpop.f32.mrf.mxu0
  %v916 = vpop.f32.mrf.mxu0
  %v917 = vadd.f32 %v613, %v916
  %v918 = vpop.f32.mrf.mxu0
  %919 = vmatprep.mubr.bf16.mxu0 %v593
  %920 = vmatmul.mubr.bf16.gmra.mxu0 %v592
  %v921 = vpop.f32.mrf.mxu0
  %v922 = vadd.f32 %v613, %v921
  %v923 = vpop.f32.mrf.mxu0
  %v924 = vpop.f32.mrf.mxu0
  %v925 = vadd.f32 %v613, %v924
  %v926 = vpop.f32.mrf.mxu0
  %927 = vmatprep.mubr.bf16.mxu0 %v597
  %928 = vmatmul.mubr.bf16.gmra.mxu0 %v595
  %v929 = vpop.f32.mrf.mxu0
  %v930 = vadd.f32 %v613, %v929
  %v931 = vpop.f32.mrf.mxu0
  %v932 = vpop.f32.mrf.mxu0
  %v933 = vadd.f32 %v613, %v932
  %v934 = vpop.f32.mrf.mxu0
  %935 = vmatprep.mubr.bf16.mxu0 %v601
  %936 = vmatmul.mubr.bf16.gmra.mxu0 %v599
  %v937 = vpop.f32.mrf.mxu0
  %v938 = vadd.f32 %v613, %v937
  %v939 = vpop.f32.mrf.mxu0
  %v940 = vpop.f32.mrf.mxu0
  %v941 = vadd.f32 %v613, %v940
  %v942 = vpop.f32.mrf.mxu0
  %943 = vmatprep.mubr.bf16.mxu0 %v605
  %944 = vmatmul.mubr.bf16.gmra.mxu0 %v603
  %v945 = vpop.f32.mrf.mxu0
  %v946 = vadd.f32 %v613, %v945
  %v947 = vpop.f32.mrf.mxu0
  %v948 = vpop.f32.mrf.mxu0
  %v949 = vadd.f32 %v613, %v948
  %v950 = vpop.f32.mrf.mxu0
  %951 = vdwg.mxu0
  %952 = vmatprep.subr.bf16.mxu0 0
  %953 = vmatpush1.bf16.msra.mxu0 %v782
  %954 = vmatprep.subr.bf16.mxu0 0
  %955 = vmatpush1.bf16.msra.mxu0 %v781
  %956 = vmatprep.subr.bf16.mxu0 0
  %957 = vmatpush1.bf16.msra.mxu0 %v780
  %958 = vmatprep.subr.bf16.mxu0 0
  %959 = vmatpush1.bf16.msra.mxu0 %v779
  %960 = vmatprep.subr.bf16.mxu0 0
  %961 = vmatpush1.bf16.msra.mxu0 %v778
  %962 = vmatprep.subr.bf16.mxu0 0
  %963 = vmatpush1.bf16.msra.mxu0 %v777
  %964 = vmatprep.subr.bf16.mxu0 0
  %965 = vmatpush1.bf16.msra.mxu0 %v776
  %966 = vmatprep.subr.bf16.mxu0 0
  %967 = vmatpush1.bf16.msra.mxu0 %v775
  %968 = vmatprep.subr.bf16.mxu0 0
  %969 = vmatpush2.bf16.msra.mxu0 %v790
  %970 = vmatprep.subr.bf16.mxu0 0
  %971 = vmatpush2.bf16.msra.mxu0 %v789
  %972 = vmatprep.subr.bf16.mxu0 0
  %973 = vmatpush2.bf16.msra.mxu0 %v788
  %974 = vmatprep.subr.bf16.mxu0 0
  %975 = vmatpush2.bf16.msra.mxu0 %v787
  %976 = vmatprep.subr.bf16.mxu0 0
  %977 = vmatpush2.bf16.msra.mxu0 %v786
  %978 = vmatprep.subr.bf16.mxu0 0
  %979 = vmatpush2.bf16.msra.mxu0 %v785
  %980 = vmatprep.subr.bf16.mxu0 0
  %981 = vmatpush2.bf16.msra.mxu0 %v784
  %982 = vmatprep.subr.bf16.mxu0 0
  %983 = vmatpush2.bf16.msra.mxu0 %v783
  %984 = vmatprep.mubr.bf16.mxu0 %v578
  %985 = vmatmul.mubr.bf16.gmra.mxu0 %v577
  %v986 = vpop.f32.mrf.mxu0
  %v987 = vadd.f32 %v890, %v986
  %v988 = vpop.f32.mrf.mxu0
  %v989 = vpop.f32.mrf.mxu0
  %v990 = vadd.f32 %v893, %v989
  %v991 = vpop.f32.mrf.mxu0
  %992 = vmatprep.mubr.bf16.mxu0 %v582
  %993 = vmatmul.mubr.bf16.gmra.mxu0 %v581
  %v994 = vpop.f32.mrf.mxu0
  %v995 = vadd.f32 %v898, %v994
  %v996 = vpop.f32.mrf.mxu0
  %v997 = vpop.f32.mrf.mxu0
  %v998 = vadd.f32 %v901, %v997
  %v999 = vpop.f32.mrf.mxu0
  %1000 = vmatprep.mubr.bf16.mxu0 %v586
  %1001 = vmatmul.mubr.bf16.gmra.mxu0 %v585
  %v1002 = vpop.f32.mrf.mxu0
  %v1003 = vadd.f32 %v906, %v1002
  %v1004 = vpop.f32.mrf.mxu0
  %v1005 = vpop.f32.mrf.mxu0
  %v1006 = vadd.f32 %v909, %v1005
  %v1007 = vpop.f32.mrf.mxu0
  %1008 = vmatprep.mubr.bf16.mxu0 %v590
  %1009 = vmatmul.mubr.bf16.gmra.mxu0 %v589
  %v1010 = vpop.f32.mrf.mxu0
  %v1011 = vadd.f32 %v914, %v1010
  %v1012 = vpop.f32.mrf.mxu0
  %v1013 = vpop.f32.mrf.mxu0
  %v1014 = vadd.f32 %v917, %v1013
  %v1015 = vpop.f32.mrf.mxu0
  %1016 = vmatprep.mubr.bf16.mxu0 %v595
  %1017 = vmatmul.mubr.bf16.gmra.mxu0 %v594
  %v1018 = vpop.f32.mrf.mxu0
  %v1019 = vadd.f32 %v922, %v1018
  %v1020 = vpop.f32.mrf.mxu0
  %v1021 = vpop.f32.mrf.mxu0
  %v1022 = vadd.f32 %v925, %v1021
  %v1023 = vpop.f32.mrf.mxu0
  %1024 = vmatprep.mubr.bf16.mxu0 %v599
  %1025 = vmatmul.mubr.bf16.gmra.mxu0 %v598
  %v1026 = vpop.f32.mrf.mxu0
  %v1027 = vadd.f32 %v930, %v1026
  %v1028 = vpop.f32.mrf.mxu0
  %v1029 = vpop.f32.mrf.mxu0
  %v1030 = vadd.f32 %v933, %v1029
  %v1031 = vpop.f32.mrf.mxu0
  %1032 = vmatprep.mubr.bf16.mxu0 %v603
  %1033 = vmatmul.mubr.bf16.gmra.mxu0 %v602
  %v1034 = vpop.f32.mrf.mxu0
  %v1035 = vadd.f32 %v938, %v1034
  %v1036 = vpop.f32.mrf.mxu0
  %v1037 = vpop.f32.mrf.mxu0
  %v1038 = vadd.f32 %v941, %v1037
  %v1039 = vpop.f32.mrf.mxu0
  %1040 = vmatprep.mubr.bf16.mxu0 %v607
  %1041 = vmatmul.mubr.bf16.gmra.mxu0 %v606
  %v1042 = vpop.f32.mrf.mxu0
  %v1043 = vadd.f32 %v946, %v1042
  %v1044 = vpop.f32.mrf.mxu0
  %v1045 = vpop.f32.mrf.mxu0
  %v1046 = vadd.f32 %v949, %v1045
  %v1047 = vpop.f32.mrf.mxu0
  %1048 = vdwg.mxu0
  %1049 = vmatprep.subr.bf16.mxu0 0
  %1050 = vmatpush1.bf16.msra.mxu0 0
  %1051 = vmatprep.subr.bf16.mxu0 0
  %1052 = vmatpush1.bf16.msra.mxu0 0
  %1053 = vmatprep.subr.bf16.mxu0 0
  %1054 = vmatpush1.bf16.msra.mxu0 0
  %1055 = vmatprep.subr.bf16.mxu0 0
  %1056 = vmatpush1.bf16.msra.mxu0 0
  %1057 = vmatprep.subr.bf16.mxu0 0
  %1058 = vmatpush1.bf16.msra.mxu0 %v794
  %1059 = vmatprep.subr.bf16.mxu0 0
  %1060 = vmatpush1.bf16.msra.mxu0 %v793
  %1061 = vmatprep.subr.bf16.mxu0 0
  %1062 = vmatpush1.bf16.msra.mxu0 %v792
  %1063 = vmatprep.subr.bf16.mxu0 0
  %1064 = vmatpush1.bf16.msra.mxu0 %v791
  %1065 = vmatprep.subr.bf16.mxu0 0
  %1066 = vmatpush2.bf16.msra.mxu0 0
  %1067 = vmatprep.subr.bf16.mxu0 0
  %1068 = vmatpush2.bf16.msra.mxu0 0
  %1069 = vmatprep.subr.bf16.mxu0 0
  %1070 = vmatpush2.bf16.msra.mxu0 0
  %1071 = vmatprep.subr.bf16.mxu0 0
  %1072 = vmatpush2.bf16.msra.mxu0 0
  %1073 = vmatprep.subr.bf16.mxu0 0
  %1074 = vmatpush2.bf16.msra.mxu0 0
  %1075 = vmatprep.subr.bf16.mxu0 0
  %1076 = vmatpush2.bf16.msra.mxu0 0
  %1077 = vmatprep.subr.bf16.mxu0 0
  %1078 = vmatpush2.bf16.msra.mxu0 0
  %1079 = vmatprep.subr.bf16.mxu0 0
  %1080 = vmatpush2.bf16.msra.mxu0 0
  %1081 = vmatprep.mubr.bf16.mxu0 0
  %1082 = vmatmul.mubr.bf16.gmra.mxu0 %v832
  %v1083 = vpop.f32.mrf.mxu0
  %v1084 = vadd.f32 %v987, %v1083
  %v1085 = vpop.f32.mrf.mxu0
  %v1086 = vpop.f32.mrf.mxu0
  %v1087 = vadd.f32 %v990, %v1086
  %v1088 = vpop.f32.mrf.mxu0
  %1089 = vmatprep.mubr.bf16.mxu0 0
  %1090 = vmatmul.mubr.bf16.gmra.mxu0 %v835
  %v1091 = vpop.f32.mrf.mxu0
  %v1092 = vadd.f32 %v995, %v1091
  %v1093 = vpop.f32.mrf.mxu0
  %v1094 = vpop.f32.mrf.mxu0
  %v1095 = vadd.f32 %v998, %v1094
  %v1096 = vpop.f32.mrf.mxu0
  %1097 = vmatprep.mubr.bf16.mxu0 0
  %1098 = vmatmul.mubr.bf16.gmra.mxu0 %v838
  %v1099 = vpop.f32.mrf.mxu0
  %v1100 = vadd.f32 %v1003, %v1099
  %v1101 = vpop.f32.mrf.mxu0
  %v1102 = vpop.f32.mrf.mxu0
  %v1103 = vadd.f32 %v1006, %v1102
  %v1104 = vpop.f32.mrf.mxu0
  %1105 = vmatprep.mubr.bf16.mxu0 0
  %1106 = vmatmul.mubr.bf16.gmra.mxu0 %v841
  %v1107 = vpop.f32.mrf.mxu0
  %v1108 = vadd.f32 %v1011, %v1107
  %v1109 = vpop.f32.mrf.mxu0
  %v1110 = vpop.f32.mrf.mxu0
  %v1111 = vadd.f32 %v1014, %v1110
  %v1112 = vpop.f32.mrf.mxu0
  %1113 = vmatprep.mubr.bf16.mxu0 0
  %1114 = vmatmul.mubr.bf16.gmra.mxu0 %v844
  %v1115 = vpop.f32.mrf.mxu0
  %v1116 = vadd.f32 %v1019, %v1115
  %v1117 = vpop.f32.mrf.mxu0
  %v1118 = vpop.f32.mrf.mxu0
  %v1119 = vadd.f32 %v1022, %v1118
  %v1120 = vpop.f32.mrf.mxu0
  %1121 = vmatprep.mubr.bf16.mxu0 0
  %1122 = vmatmul.mubr.bf16.gmra.mxu0 %v847
  %v1123 = vpop.f32.mrf.mxu0
  %v1124 = vadd.f32 %v1027, %v1123
  %v1125 = vpop.f32.mrf.mxu0
  %v1126 = vpop.f32.mrf.mxu0
  %v1127 = vadd.f32 %v1030, %v1126
  %v1128 = vpop.f32.mrf.mxu0
  %1129 = vmatprep.mubr.bf16.mxu0 0
  %1130 = vmatmul.mubr.bf16.gmra.mxu0 %v850
  %v1131 = vpop.f32.mrf.mxu0
  %v1132 = vadd.f32 %v1035, %v1131
  %v1133 = vpop.f32.mrf.mxu0
  %v1134 = vpop.f32.mrf.mxu0
  %v1135 = vadd.f32 %v1038, %v1134
  %v1136 = vpop.f32.mrf.mxu0
  %1137 = vmatprep.mubr.bf16.mxu0 0
  %1138 = vmatmul.mubr.bf16.gmra.mxu0 %v853
  %v1139 = vpop.f32.mrf.mxu0
  %v1140 = vadd.f32 %v1043, %v1139
  %v1141 = vpop.f32.mrf.mxu0
  %v1142 = vpop.f32.mrf.mxu0
  %v1143 = vadd.f32 %v1046, %v1142
  %v1144 = vpop.f32.mrf.mxu0
  %1145 = vdwg.mxu0
  %vm1146 = vcmask 392192
  %1147 = vst.msk [vmem:[%s3] sm:$0xff] %vm1146, %v1084
  %1148 = vst.msk [vmem:[%s3 + $0x8] sm:$0xff] %vm1146, %v1087
  %1149 = vst.msk [vmem:[%s3 + $0x10] sm:$0xff] %vm1146, %v1092
  %1150 = vst.msk [vmem:[%s3 + $0x18] sm:$0xff] %vm1146, %v1095
  %1151 = vst.msk [vmem:[%s3 + $0x20] sm:$0xff] %vm1146, %v1100
  %1152 = vst.msk [vmem:[%s3 + $0x28] sm:$0xff] %vm1146, %v1103
  %1153 = vst.msk [vmem:[%s3 + $0x30] sm:$0xff] %vm1146, %v1108
  %1154 = vst.msk [vmem:[%s3 + $0x38] sm:$0xff] %vm1146, %v1111
  %1155 = vst.msk [vmem:[%s3 + $0x40] sm:$0xff] %vm1146, %v1116
  %1156 = vst.msk [vmem:[%s3 + $0x48] sm:$0xff] %vm1146, %v1119
  %1157 = vst.msk [vmem:[%s3 + $0x50] sm:$0xff] %vm1146, %v1124
  %1158 = vst.msk [vmem:[%s3 + $0x58] sm:$0xff] %vm1146, %v1127
  %1159 = vst.msk [vmem:[%s3 + $0x60] sm:$0xff] %vm1146, %v1132
  %1160 = vst.msk [vmem:[%s3 + $0x68] sm:$0xff] %vm1146, %v1135
  %1161 = vst.msk [vmem:[%s3 + $0x70] sm:$0xff] %vm1146, %v1140
  %1162 = vst.msk [vmem:[%s3 + $0x78] sm:$0xff] %vm1146, %v1143
  // Predicated region
  $region14: #{forward_pallas.3} parent=0 // pred_check
    _
  $region15: #{forward_pallas.3} parent=0 // pred_check_branch
    %1164 = sbr.rel (0) target = $region17
  $region16: #{forward_pallas.3} parent=0 // pred_region
    _
  $region17: #{forward_pallas.3} parent=0 // pred_fallthru
    _
  // Predicated region
  $region18: #{forward_pallas.3} parent=0 // pred_check
    _
  $region19: #{forward_pallas.3} parent=0 // pred_check_branch
    %1166 = sbr.rel (0) target = $region21
  $region20: #{forward_pallas.3} parent=0 // pred_region
    _
  $region21: #{forward_pallas.3} parent=0 // pred_fallthru
    _

// kernel: forward_pallas.2
$region0: #{forward_pallas.2}
  #allocation0 [shape = 'u32[]', space=smem, size = 0x4, offset = 0x4, fixed_abs, tag = 'smem constant byte address 0x4 - core index']
  #allocation1 [shape = 'u32[144,128]{1,0:T(1,128)}', space=vmem, size = 0x12000, scoped, tag = 'internal scratch']
  #allocation2 [shape = 'f32[2,10,10,64]{3,2,1,0:T(8,128)}', space=vmem, size = 0x28000, scoped, tag = 'scratch operand']
  #allocation3 [shape = 'f32[2,10,10,64]{3,2,1,0:T(8,128)}', space=vmem, size = 0x28000, scoped, tag = 'scratch operand']
  %s0 = inlined_call_operand.vmem [shape: f32[2,10,10,64], index: 0, kind: input, shape index: {}]
  %s1 = inlined_call_operand.vmem [shape: bf16[17,2,576,64], index: 1, kind: input, shape index: {}]
  %s2 = inlined_call_operand.vmem [shape: f32[17,2,64], index: 2, kind: input, shape index: {}]
  %s3 = inlined_call_operand.vmem [shape: f32[2,10,10,64], index: 3, kind: output, shape index: {}]
  %s4 = sld [smem:[#allocation0]]
  $region57: #{forward_pallas.2} parent=0
    _
  %s6 = ssub.s32 1, %s4
  %s7 = scalar_select 0, %s6, %s4
  loop: start=0, step=1, limit=19
  $region2: #{forward_pallas.2} parent=0 // loop_pre_header
    _
  $region3: #{forward_pallas.2} parent=0 // loop_header
    %s9 = sphi 0, %s13
    %p10 = scmp.ge.s32.totalorder %s9, 19
    %s17 = sphi 0, %s17
    %s19 = sphi 0, %s17
    %s20 = sphi 0, %s19
    %s34 = sphi 0, %s20
    %s40 = sphi 0, %s42
    %s43 = sphi 0, %s40
    %s44 = sphi 0, %s43
    %s60 = sphi 0, %s44
    %s66 = sphi 0, %s68
    %s69 = sphi 0, %s66
    %s70 = sphi 0, %s69
    %s86 = sphi 0, %s70
    %s90 = sphi 0, %s90
    %s92 = sphi 0, %s90
    %s93 = sphi 0, %s92
    %s107 = sphi 0, %s93
  $region4: #{forward_pallas.2} parent=0 // loop_header_branch
    %12 = sbr.rel (%p10) target = $region8
  $region5: #{forward_pallas.2} parent=0 // loop_body
    %s14 = ssub.s32 %s9, 1
    %s15 = ssub.s32 %s9, 2
    %s16 = sadd.s32 %s9, 1
    %s18 = sadd.s32 %s17, 1
    %p21 = scmp.eq.s32.totalorder %s9, 16
    %p22 = scmp.ne.s32.totalorder %s17, %s19
    %p23 = scmp.eq.s32.totalorder %s9, 0
    %p24 = por %p22, %p23
    %p25 = scmp.ne.s32.totalorder %s17, %s19
    %p26 = scmp.eq.s32.totalorder %s14, 16
    %p27 = por %p25, %p26
    %p28 = scmp.ne.s32.totalorder %s19, %s20
    %p29 = scmp.eq.s32.totalorder %s14, 0
    %p30 = por %p28, %p29
    %p31 = scmp.ne.s32.totalorder %s19, %s20
    %p32 = scmp.eq.s32.totalorder %s15, 16
    %p33 = por %p31, %p32
    %p35 = scmp.ne.s32.totalorder %s20, %s34
    %p36 = scmp.eq.s32.totalorder %s15, 0
    %p37 = por %p35, %p36
    %s38 = ssub.s32 %s9, %s16
    %p39 = scmp.eq.s32.totalorder %s38, 0
    %s41 = sadd.s32 %s40, 1
    %s42 = scalar_select %p39, %s40, %s41
    %p45 = pneg %p39
    %p46 = scmp.eq.s32.totalorder %s9, 16
    %p47 = por %p45, %p46
    %p48 = scmp.ne.s32.totalorder %s40, %s43
    %p49 = scmp.eq.s32.totalorder %s9, 0
    %p50 = por %p48, %p49
    %p51 = scmp.ne.s32.totalorder %s40, %s43
    %p52 = scmp.eq.s32.totalorder %s14, 16
    %p53 = por %p51, %p52
    %p54 = scmp.ne.s32.totalorder %s43, %s44
    %p55 = scmp.eq.s32.totalorder %s14, 0
    %p56 = por %p54, %p55
    %p57 = scmp.ne.s32.totalorder %s43, %s44
    %p58 = scmp.eq.s32.totalorder %s15, 16
    %p59 = por %p57, %p58
    %p61 = scmp.ne.s32.totalorder %s44, %s60
    %p62 = scmp.eq.s32.totalorder %s15, 0
    %p63 = por %p61, %p62
    %s64 = ssub.s32 %s9, %s16
    %p65 = scmp.eq.s32.totalorder %s64, 0
    %s67 = sadd.s32 %s66, 1
    %s68 = scalar_select %p65, %s66, %s67
    %p71 = pneg %p65
    %p72 = scmp.eq.s32.totalorder %s9, 16
    %p73 = por %p71, %p72
    %p74 = scmp.ne.s32.totalorder %s66, %s69
    %p75 = scmp.eq.s32.totalorder %s9, 0
    %p76 = por %p74, %p75
    %p77 = scmp.ne.s32.totalorder %s66, %s69
    %p78 = scmp.eq.s32.totalorder %s14, 16
    %p79 = por %p77, %p78
    %p80 = scmp.ne.s32.totalorder %s69, %s70
    %p81 = scmp.eq.s32.totalorder %s14, 0
    %p82 = por %p80, %p81
    %p83 = scmp.ne.s32.totalorder %s69, %s70
    %p84 = scmp.eq.s32.totalorder %s15, 16
    %p85 = por %p83, %p84
    %p87 = scmp.ne.s32.totalorder %s70, %s86
    %p88 = scmp.eq.s32.totalorder %s15, 0
    %p89 = por %p87, %p88
    %s91 = sadd.s32 %s90, 1
    %p94 = scmp.eq.s32.totalorder %s9, 16
    %p95 = scmp.ne.s32.totalorder %s90, %s92
    %p96 = scmp.eq.s32.totalorder %s9, 0
    %p97 = por %p95, %p96
    %p98 = scmp.ne.s32.totalorder %s90, %s92
    %p99 = scmp.eq.s32.totalorder %s14, 16
    %p100 = por %p98, %p99
    %p101 = scmp.ne.s32.totalorder %s92, %s93
    %p102 = scmp.eq.s32.totalorder %s14, 0
    %p103 = por %p101, %p102
    %p104 = scmp.ne.s32.totalorder %s92, %s93
    %p105 = scmp.eq.s32.totalorder %s15, 16
    %p106 = por %p104, %p105
    %p108 = scmp.ne.s32.totalorder %s93, %s107
    %p109 = scmp.eq.s32.totalorder %s15, 0
    %p110 = por %p108, %p109
    %p111 = scmp.le.s32.totalorder 1, %s9
    %p112 = scmp.lt.s32.totalorder %s9, 18
    %p113 = pnand %p111, %p112
    %p114 = pneg %p113
    // Predicated region
    $region9: #{forward_pallas.2} parent=5 // pred_check
      _
    $region10: #{forward_pallas.2} parent=5 // pred_check_branch
      %116 = sbr.rel (%p113) target = $region12
    $region11: #{forward_pallas.2} parent=5 // pred_region
      %s117 = ssub.s32 %s9, 1
      // Predicated region
      $region13: #{forward_pallas.2} parent=11 // pred_check
        %p118 = pneg %p30
      $region14: #{forward_pallas.2} parent=11 // pred_check_branch
        %120 = sbr.rel (%p118) target = $region16
      $region15: #{forward_pallas.2} parent=11 // pred_region
        _
      $region16: #{forward_pallas.2} parent=11 // pred_fallthru
        _
    $region12: #{forward_pallas.2} parent=5 // pred_fallthru
      _
    %p121 = scmp.lt.s32.totalorder %s9, 17
    // Predicated region
    $region17: #{forward_pallas.2} parent=5 // pred_check
      %p122 = pneg %p121
    $region18: #{forward_pallas.2} parent=5 // pred_check_branch
      %124 = sbr.rel (%p122) target = $region20
    $region19: #{forward_pallas.2} parent=5 // pred_region
      // Predicated region
      $region21: #{forward_pallas.2} parent=19 // pred_check
        %p125 = pneg %p50
      $region22: #{forward_pallas.2} parent=19 // pred_check_branch
        %127 = sbr.rel (%p125) target = $region24
      $region23: #{forward_pallas.2} parent=19 // pred_region
        %p128 = scmp.lt.s32.totalorder %s9, 16
        %s129 = scalar_select %p128, %s9, 16
        %s130 = smul.addr %s129, 144
        %s131 = smul.addr %s130, 4
        %s132 = scalar_lea.vmem %s1, %s131
      $region24: #{forward_pallas.2} parent=19 // pred_fallthru
        _
      // Predicated region
      $region25: #{forward_pallas.2} parent=19 // pred_check
        %p133 = pneg %p76
      $region26: #{forward_pallas.2} parent=19 // pred_check_branch
        %135 = sbr.rel (%p133) target = $region28
      $region27: #{forward_pallas.2} parent=19 // pred_region
        %p136 = scmp.lt.s32.totalorder %s9, 16
        %s137 = scalar_select %p136, %s9, 16
        %s138 = smul.addr %s137, 2
        %s139 = scalar_lea.vmem %s2, %s138
      $region28: #{forward_pallas.2} parent=19 // pred_fallthru
        _
    $region20: #{forward_pallas.2} parent=5 // pred_fallthru
      _
    %p140 = scmp.le.s32.totalorder 1, %s9
    %p141 = scmp.lt.s32.totalorder %s9, 18
    %p142 = pnand %p140, %p141
    %p143 = pneg %p142
    // Predicated region
    $region29: #{forward_pallas.2} parent=5 // pred_check
      _
    $region30: #{forward_pallas.2} parent=5 // pred_check_branch
      %145 = sbr.rel (%p142) target = $region32
    $region31: #{forward_pallas.2} parent=5 // pred_region
      %s146 = ssub.s32 %s9, 1
      %p147 = pneg %p30
      %p148 = pneg %p27
      %p149 = scmp.lt.s32.totalorder %s14, 16
      %s150 = scalar_select %p149, %s14, 16
      %s151 = smul.addr %s150, 144
      %s152 = smul.addr %s151, 4
      %s153 = scalar_lea.vmem %s1, %s152
      %p154 = pneg %p56
      %p155 = pneg %p53
      %p156 = scmp.lt.s32.totalorder %s14, 16
      %s157 = scalar_select %p156, %s14, 16
      %s158 = smul.addr %s157, 2
      %s159 = scalar_lea.vmem %s2, %s158
      %p160 = pneg %p82
      %p161 = pneg %p79
      %p162 = pneg %p103
      %p163 = pneg %p100
      %p164 = scmp.lt.s32.totalorder %s14, 16
      %s165 = scalar_select %p164, %s14, 16
      %s166 = smul.addr %s165, 144
      %s167 = smul.addr %s166, 4
      %s168 = scalar_lea.vmem %s1, %s167
      %p169 = scmp.lt.s32.totalorder %s14, 16
      %s170 = scalar_select %p169, %s14, 16
      %s171 = smul.addr %s170, 2
      %s172 = scalar_lea.vmem %s2, %s171
      %v174 = vld [vmem:[%s168] sm:$0xf]
      %v175 = vld [vmem:[%s168 + $0x4] sm:$0xf]
      %v176 = vld [vmem:[%s168 + $0x8] sm:$0xf]
      %v177 = vld [vmem:[%s168 + $0xc] sm:$0xf]
      %v178 = vld [vmem:[%s168 + $0x10] sm:$0xf]
      %v179 = vld [vmem:[%s168 + $0x14] sm:$0xf]
      %v180 = vld [vmem:[%s168 + $0x18] sm:$0xf]
      %v181 = vld [vmem:[%s168 + $0x1c] sm:$0xf]
      %v182 = vld [vmem:[%s168 + $0x20] sm:$0xf]
      %v183 = vld [vmem:[%s168 + $0x24] sm:$0xf]
      %v184 = vld [vmem:[%s168 + $0x28] sm:$0xf]
      %v185 = vld [vmem:[%s168 + $0x2c] sm:$0xf]
      %v186 = vld [vmem:[%s168 + $0x30] sm:$0xf]
      %v187 = vld [vmem:[%s168 + $0x34] sm:$0xf]
      %v188 = vld [vmem:[%s168 + $0x38] sm:$0xf]
      %v189 = vld [vmem:[%s168 + $0x3c] sm:$0xf]
      %v190 = vld [vmem:[%s168 + $0x40] sm:$0xf]
      %v191 = vld [vmem:[%s168 + $0x44] sm:$0xf]
      %v192 = vld [vmem:[%s168 + $0x48] sm:$0xf]
      %v193 = vld [vmem:[%s168 + $0x4c] sm:$0xf]
      %v194 = vld [vmem:[%s168 + $0x50] sm:$0xf]
      %v195 = vld [vmem:[%s168 + $0x54] sm:$0xf]
      %v196 = vld [vmem:[%s168 + $0x58] sm:$0xf]
      %v197 = vld [vmem:[%s168 + $0x5c] sm:$0xf]
      %v198 = vld [vmem:[%s168 + $0x60] sm:$0xf]
      %v199 = vld [vmem:[%s168 + $0x64] sm:$0xf]
      %v200 = vld [vmem:[%s168 + $0x68] sm:$0xf]
      %v201 = vld [vmem:[%s168 + $0x6c] sm:$0xf]
      %v202 = vld [vmem:[%s168 + $0x70] sm:$0xf]
      %v203 = vld [vmem:[%s168 + $0x74] sm:$0xf]
      %v204 = vld [vmem:[%s168 + $0x78] sm:$0xf]
      %v205 = vld [vmem:[%s168 + $0x7c] sm:$0xf]
      %v206 = vld [vmem:[%s168 + $0x80] sm:$0xf]
      %v207 = vld [vmem:[%s168 + $0x84] sm:$0xf]
      %v208 = vld [vmem:[%s168 + $0x88] sm:$0xf]
      %v209 = vld [vmem:[%s168 + $0x8c] sm:$0xf]
      %v210 = vld [vmem:[%s168 + $0x90] sm:$0xf]
      %v211 = vld [vmem:[%s168 + $0x94] sm:$0xf]
      %v212 = vld [vmem:[%s168 + $0x98] sm:$0xf]
      %v213 = vld [vmem:[%s168 + $0x9c] sm:$0xf]
      %v214 = vld [vmem:[%s168 + $0xa0] sm:$0xf]
      %v215 = vld [vmem:[%s168 + $0xa4] sm:$0xf]
      %v216 = vld [vmem:[%s168 + $0xa8] sm:$0xf]
      %v217 = vld [vmem:[%s168 + $0xac] sm:$0xf]
      %v218 = vld [vmem:[%s168 + $0xb0] sm:$0xf]
      %v219 = vld [vmem:[%s168 + $0xb4] sm:$0xf]
      %v220 = vld [vmem:[%s168 + $0xb8] sm:$0xf]
      %v221 = vld [vmem:[%s168 + $0xbc] sm:$0xf]
      %v222 = vld [vmem:[%s168 + $0xc0] sm:$0xf]
      %v223 = vld [vmem:[%s168 + $0xc4] sm:$0xf]
      %v224 = vld [vmem:[%s168 + $0xc8] sm:$0xf]
      %v225 = vld [vmem:[%s168 + $0xcc] sm:$0xf]
      %v226 = vld [vmem:[%s168 + $0xd0] sm:$0xf]
      %v227 = vld [vmem:[%s168 + $0xd4] sm:$0xf]
      %v228 = vld [vmem:[%s168 + $0xd8] sm:$0xf]
      %v229 = vld [vmem:[%s168 + $0xdc] sm:$0xf]
      %v230 = vld [vmem:[%s168 + $0xe0] sm:$0xf]
      %v231 = vld [vmem:[%s168 + $0xe4] sm:$0xf]
      %v232 = vld [vmem:[%s168 + $0xe8] sm:$0xf]
      %v233 = vld [vmem:[%s168 + $0xec] sm:$0xf]
      %v234 = vld [vmem:[%s168 + $0xf0] sm:$0xf]
      %v235 = vld [vmem:[%s168 + $0xf4] sm:$0xf]
      %v236 = vld [vmem:[%s168 + $0xf8] sm:$0xf]
      %v237 = vld [vmem:[%s168 + $0xfc] sm:$0xf]
      %v238 = vld [vmem:[%s168 + $0x100] sm:$0xf]
      %v239 = vld [vmem:[%s168 + $0x104] sm:$0xf]
      %v240 = vld [vmem:[%s168 + $0x108] sm:$0xf]
      %v241 = vld [vmem:[%s168 + $0x10c] sm:$0xf]
      %v242 = vld [vmem:[%s168 + $0x110] sm:$0xf]
      %v243 = vld [vmem:[%s168 + $0x114] sm:$0xf]
      %v244 = vld [vmem:[%s168 + $0x118] sm:$0xf]
      %v245 = vld [vmem:[%s168 + $0x11c] sm:$0xf]
      %v246 = vld [vmem:[%s168 + $0x120] sm:$0xf]
      %v247 = vld [vmem:[%s168 + $0x124] sm:$0xf]
      %v248 = vld [vmem:[%s168 + $0x128] sm:$0xf]
      %v249 = vld [vmem:[%s168 + $0x12c] sm:$0xf]
      %v250 = vld [vmem:[%s168 + $0x130] sm:$0xf]
      %v251 = vld [vmem:[%s168 + $0x134] sm:$0xf]
      %v252 = vld [vmem:[%s168 + $0x138] sm:$0xf]
      %v253 = vld [vmem:[%s168 + $0x13c] sm:$0xf]
      %v254 = vld [vmem:[%s168 + $0x140] sm:$0xf]
      %v255 = vld [vmem:[%s168 + $0x144] sm:$0xf]
      %v256 = vld [vmem:[%s168 + $0x148] sm:$0xf]
      %v257 = vld [vmem:[%s168 + $0x14c] sm:$0xf]
      %v258 = vld [vmem:[%s168 + $0x150] sm:$0xf]
      %v259 = vld [vmem:[%s168 + $0x154] sm:$0xf]
      %v260 = vld [vmem:[%s168 + $0x158] sm:$0xf]
      %v261 = vld [vmem:[%s168 + $0x15c] sm:$0xf]
      %v262 = vld [vmem:[%s168 + $0x160] sm:$0xf]
      %v263 = vld [vmem:[%s168 + $0x164] sm:$0xf]
      %v264 = vld [vmem:[%s168 + $0x168] sm:$0xf]
      %v265 = vld [vmem:[%s168 + $0x16c] sm:$0xf]
      %v266 = vld [vmem:[%s168 + $0x170] sm:$0xf]
      %v267 = vld [vmem:[%s168 + $0x174] sm:$0xf]
      %v268 = vld [vmem:[%s168 + $0x178] sm:$0xf]
      %v269 = vld [vmem:[%s168 + $0x17c] sm:$0xf]
      %v270 = vld [vmem:[%s168 + $0x180] sm:$0xf]
      %v271 = vld [vmem:[%s168 + $0x184] sm:$0xf]
      %v272 = vld [vmem:[%s168 + $0x188] sm:$0xf]
      %v273 = vld [vmem:[%s168 + $0x18c] sm:$0xf]
      %v274 = vld [vmem:[%s168 + $0x190] sm:$0xf]
      %v275 = vld [vmem:[%s168 + $0x194] sm:$0xf]
      %v276 = vld [vmem:[%s168 + $0x198] sm:$0xf]
      %v277 = vld [vmem:[%s168 + $0x19c] sm:$0xf]
      %v278 = vld [vmem:[%s168 + $0x1a0] sm:$0xf]
      %v279 = vld [vmem:[%s168 + $0x1a4] sm:$0xf]
      %v280 = vld [vmem:[%s168 + $0x1a8] sm:$0xf]
      %v281 = vld [vmem:[%s168 + $0x1ac] sm:$0xf]
      %v282 = vld [vmem:[%s168 + $0x1b0] sm:$0xf]
      %v283 = vld [vmem:[%s168 + $0x1b4] sm:$0xf]
      %v284 = vld [vmem:[%s168 + $0x1b8] sm:$0xf]
      %v285 = vld [vmem:[%s168 + $0x1bc] sm:$0xf]
      %v286 = vld [vmem:[%s168 + $0x1c0] sm:$0xf]
      %v287 = vld [vmem:[%s168 + $0x1c4] sm:$0xf]
      %v288 = vld [vmem:[%s168 + $0x1c8] sm:$0xf]
      %v289 = vld [vmem:[%s168 + $0x1cc] sm:$0xf]
      %v290 = vld [vmem:[%s168 + $0x1d0] sm:$0xf]
      %v291 = vld [vmem:[%s168 + $0x1d4] sm:$0xf]
      %v292 = vld [vmem:[%s168 + $0x1d8] sm:$0xf]
      %v293 = vld [vmem:[%s168 + $0x1dc] sm:$0xf]
      %v294 = vld [vmem:[%s168 + $0x1e0] sm:$0xf]
      %v295 = vld [vmem:[%s168 + $0x1e4] sm:$0xf]
      %v296 = vld [vmem:[%s168 + $0x1e8] sm:$0xf]
      %v297 = vld [vmem:[%s168 + $0x1ec] sm:$0xf]
      %v298 = vld [vmem:[%s168 + $0x1f0] sm:$0xf]
      %v299 = vld [vmem:[%s168 + $0x1f4] sm:$0xf]
      %v300 = vld [vmem:[%s168 + $0x1f8] sm:$0xf]
      %v301 = vld [vmem:[%s168 + $0x1fc] sm:$0xf]
      %v302 = vld [vmem:[%s168 + $0x200] sm:$0xf]
      %v303 = vld [vmem:[%s168 + $0x204] sm:$0xf]
      %v304 = vld [vmem:[%s168 + $0x208] sm:$0xf]
      %v305 = vld [vmem:[%s168 + $0x20c] sm:$0xf]
      %v306 = vld [vmem:[%s168 + $0x210] sm:$0xf]
      %v307 = vld [vmem:[%s168 + $0x214] sm:$0xf]
      %v308 = vld [vmem:[%s168 + $0x218] sm:$0xf]
      %v309 = vld [vmem:[%s168 + $0x21c] sm:$0xf]
      %v310 = vld [vmem:[%s168 + $0x220] sm:$0xf]
      %v311 = vld [vmem:[%s168 + $0x224] sm:$0xf]
      %v312 = vld [vmem:[%s168 + $0x228] sm:$0xf]
      %v313 = vld [vmem:[%s168 + $0x22c] sm:$0xf]
      %v314 = vld [vmem:[%s168 + $0x230] sm:$0xf]
      %v315 = vld [vmem:[%s168 + $0x234] sm:$0xf]
      %v316 = vld [vmem:[%s168 + $0x238] sm:$0xf]
      %v317 = vld [vmem:[%s168 + $0x23c] sm:$0xf]
      %v318 = vld [vmem:[%s172] sm:$0x3]
      %p319 = scmp.eq.s32.totalorder %s14, 0
      // Predicated region
      $region33: #{forward_pallas.2} parent=31 // pred_check
        %p320 = pneg %p319
      $region34: #{forward_pallas.2} parent=31 // pred_check_branch
        %322 = sbr.rel (%p320) target = $region36
      $region35: #{forward_pallas.2} parent=31 // pred_region
        %vm323 = vcmask 523264
        %324 = vst.msk [vmem:[#allocation2] sm:$0xff] %vm323, 0.0
        %vm325 = vcmask 517120
        %326 = vst.msk [vmem:[#allocation2 + $0x8] sm:$0x3] %vm325, 0.0
        %327 = vst.msk [vmem:[#allocation2 + $0x10] sm:$0xff] %vm323, 0.0
        %328 = vst.msk [vmem:[#allocation2 + $0x18] sm:$0x3] %vm325, 0.0
        %329 = vst.msk [vmem:[#allocation2 + $0x20] sm:$0xff] %vm323, 0.0
        %330 = vst.msk [vmem:[#allocation2 + $0x28] sm:$0x3] %vm325, 0.0
        %331 = vst.msk [vmem:[#allocation2 + $0x30] sm:$0xff] %vm323, 0.0
        %332 = vst.msk [vmem:[#allocation2 + $0x38] sm:$0x3] %vm325, 0.0
        %333 = vst.msk [vmem:[#allocation2 + $0x40] sm:$0xff] %vm323, 0.0
        %334 = vst.msk [vmem:[#allocation2 + $0x48] sm:$0x3] %vm325, 0.0
        %335 = vst.msk [vmem:[#allocation2 + $0x50] sm:$0xff] %vm323, 0.0
        %336 = vst.msk [vmem:[#allocation2 + $0x58] sm:$0x3] %vm325, 0.0
        %337 = vst.msk [vmem:[#allocation2 + $0x60] sm:$0xff] %vm323, 0.0
        %338 = vst.msk [vmem:[#allocation2 + $0x68] sm:$0x3] %vm325, 0.0
        %339 = vst.msk [vmem:[#allocation2 + $0x70] sm:$0xff] %vm323, 0.0
        %340 = vst.msk [vmem:[#allocation2 + $0x78] sm:$0x3] %vm325, 0.0
        %341 = vst.msk [vmem:[#allocation2 + $0x80] sm:$0xff] %vm323, 0.0
        %342 = vst.msk [vmem:[#allocation2 + $0x88] sm:$0x3] %vm325, 0.0
        %343 = vst.msk [vmem:[#allocation2 + $0x90] sm:$0xff] %vm323, 0.0
        %344 = vst.msk [vmem:[#allocation2 + $0x98] sm:$0x3] %vm325, 0.0
        %345 = vst.msk [vmem:[#allocation2 + $0xa0] sm:$0xff] %vm323, 0.0
        %346 = vst.msk [vmem:[#allocation2 + $0xa8] sm:$0x3] %vm325, 0.0
        %347 = vst.msk [vmem:[#allocation2 + $0xb0] sm:$0xff] %vm323, 0.0
        %348 = vst.msk [vmem:[#allocation2 + $0xb8] sm:$0x3] %vm325, 0.0
        %349 = vst.msk [vmem:[#allocation2 + $0xc0] sm:$0xff] %vm323, 0.0
        %350 = vst.msk [vmem:[#allocation2 + $0xc8] sm:$0x3] %vm325, 0.0
        %351 = vst.msk [vmem:[#allocation2 + $0xd0] sm:$0xff] %vm323, 0.0
        %352 = vst.msk [vmem:[#allocation2 + $0xd8] sm:$0x3] %vm325, 0.0
        %353 = vst.msk [vmem:[#allocation2 + $0xe0] sm:$0xff] %vm323, 0.0
        %354 = vst.msk [vmem:[#allocation2 + $0xe8] sm:$0x3] %vm325, 0.0
        %355 = vst.msk [vmem:[#allocation2 + $0xf0] sm:$0xff] %vm323, 0.0
        %356 = vst.msk [vmem:[#allocation2 + $0xf8] sm:$0x3] %vm325, 0.0
        %357 = vst.msk [vmem:[#allocation2 + $0x100] sm:$0xff] %vm323, 0.0
        %358 = vst.msk [vmem:[#allocation2 + $0x108] sm:$0x3] %vm325, 0.0
        %359 = vst.msk [vmem:[#allocation2 + $0x110] sm:$0xff] %vm323, 0.0
        %360 = vst.msk [vmem:[#allocation2 + $0x118] sm:$0x3] %vm325, 0.0
        %361 = vst.msk [vmem:[#allocation2 + $0x120] sm:$0xff] %vm323, 0.0
        %362 = vst.msk [vmem:[#allocation2 + $0x128] sm:$0x3] %vm325, 0.0
        %363 = vst.msk [vmem:[#allocation2 + $0x130] sm:$0xff] %vm323, 0.0
        %364 = vst.msk [vmem:[#allocation2 + $0x138] sm:$0x3] %vm325, 0.0
        %365 = vst.msk [vmem:[#allocation3] sm:$0xff] %vm323, 0.0
        %366 = vst.msk [vmem:[#allocation3 + $0x8] sm:$0x3] %vm325, 0.0
        %367 = vst.msk [vmem:[#allocation3 + $0x10] sm:$0xff] %vm323, 0.0
        %368 = vst.msk [vmem:[#allocation3 + $0x18] sm:$0x3] %vm325, 0.0
        %369 = vst.msk [vmem:[#allocation3 + $0x20] sm:$0xff] %vm323, 0.0
        %370 = vst.msk [vmem:[#allocation3 + $0x28] sm:$0x3] %vm325, 0.0
        %371 = vst.msk [vmem:[#allocation3 + $0x30] sm:$0xff] %vm323, 0.0
        %372 = vst.msk [vmem:[#allocation3 + $0x38] sm:$0x3] %vm325, 0.0
        %373 = vst.msk [vmem:[#allocation3 + $0x40] sm:$0xff] %vm323, 0.0
        %374 = vst.msk [vmem:[#allocation3 + $0x48] sm:$0x3] %vm325, 0.0
        %375 = vst.msk [vmem:[#allocation3 + $0x50] sm:$0xff] %vm323, 0.0
        %376 = vst.msk [vmem:[#allocation3 + $0x58] sm:$0x3] %vm325, 0.0
        %377 = vst.msk [vmem:[#allocation3 + $0x60] sm:$0xff] %vm323, 0.0
        %378 = vst.msk [vmem:[#allocation3 + $0x68] sm:$0x3] %vm325, 0.0
        %379 = vst.msk [vmem:[#allocation3 + $0x70] sm:$0xff] %vm323, 0.0
        %380 = vst.msk [vmem:[#allocation3 + $0x78] sm:$0x3] %vm325, 0.0
        %381 = vst.msk [vmem:[#allocation3 + $0x80] sm:$0xff] %vm323, 0.0
        %382 = vst.msk [vmem:[#allocation3 + $0x88] sm:$0x3] %vm325, 0.0
        %383 = vst.msk [vmem:[#allocation3 + $0x90] sm:$0xff] %vm323, 0.0
        %384 = vst.msk [vmem:[#allocation3 + $0x98] sm:$0x3] %vm325, 0.0
        %385 = vst.msk [vmem:[#allocation3 + $0xa0] sm:$0xff] %vm323, 0.0
        %386 = vst.msk [vmem:[#allocation3 + $0xa8] sm:$0x3] %vm325, 0.0
        %387 = vst.msk [vmem:[#allocation3 + $0xb0] sm:$0xff] %vm323, 0.0
        %388 = vst.msk [vmem:[#allocation3 + $0xb8] sm:$0x3] %vm325, 0.0
        %389 = vst.msk [vmem:[#allocation3 + $0xc0] sm:$0xff] %vm323, 0.0
        %390 = vst.msk [vmem:[#allocation3 + $0xc8] sm:$0x3] %vm325, 0.0
        %391 = vst.msk [vmem:[#allocation3 + $0xd0] sm:$0xff] %vm323, 0.0
        %392 = vst.msk [vmem:[#allocation3 + $0xd8] sm:$0x3] %vm325, 0.0
        %393 = vst.msk [vmem:[#allocation3 + $0xe0] sm:$0xff] %vm323, 0.0
        %394 = vst.msk [vmem:[#allocation3 + $0xe8] sm:$0x3] %vm325, 0.0
        %395 = vst.msk [vmem:[#allocation3 + $0xf0] sm:$0xff] %vm323, 0.0
        %396 = vst.msk [vmem:[#allocation3 + $0xf8] sm:$0x3] %vm325, 0.0
        %397 = vst.msk [vmem:[#allocation3 + $0x100] sm:$0xff] %vm323, 0.0
        %398 = vst.msk [vmem:[#allocation3 + $0x108] sm:$0x3] %vm325, 0.0
        %399 = vst.msk [vmem:[#allocation3 + $0x110] sm:$0xff] %vm323, 0.0
        %400 = vst.msk [vmem:[#allocation3 + $0x118] sm:$0x3] %vm325, 0.0
        %401 = vst.msk [vmem:[#allocation3 + $0x120] sm:$0xff] %vm323, 0.0
        %402 = vst.msk [vmem:[#allocation3 + $0x128] sm:$0x3] %vm325, 0.0
        %403 = vst.msk [vmem:[#allocation3 + $0x130] sm:$0xff] %vm323, 0.0
        %404 = vst.msk [vmem:[#allocation3 + $0x138] sm:$0x3] %vm325, 0.0
        %v405 = vld [vmem:[%s0] sm:$0xff]
        %v406 = vld [vmem:[%s0 + $0x8] sm:$0x3]
        %v407 = vld [vmem:[%s0 + $0x10] sm:$0xff]
        %v408 = vld [vmem:[%s0 + $0x18] sm:$0x3]
        %v409 = vld [vmem:[%s0 + $0x20] sm:$0xff]
        %v410 = vld [vmem:[%s0 + $0x28] sm:$0x3]
        %v411 = vld [vmem:[%s0 + $0x30] sm:$0xff]
        %v412 = vld [vmem:[%s0 + $0x38] sm:$0x3]
        %v413 = vld [vmem:[%s0 + $0x40] sm:$0xff]
        %v414 = vld [vmem:[%s0 + $0x48] sm:$0x3]
        %v415 = vld [vmem:[%s0 + $0x50] sm:$0xff]
        %v416 = vld [vmem:[%s0 + $0x58] sm:$0x3]
        %v417 = vld [vmem:[%s0 + $0x60] sm:$0xff]
        %v418 = vld [vmem:[%s0 + $0x68] sm:$0x3]
        %v419 = vld [vmem:[%s0 + $0x70] sm:$0xff]
        %v420 = vld [vmem:[%s0 + $0x78] sm:$0x3]
        %v421 = vld [vmem:[%s0 + $0x80] sm:$0xff]
        %v422 = vld [vmem:[%s0 + $0x88] sm:$0x3]
        %v423 = vld [vmem:[%s0 + $0x90] sm:$0xff]
        %v424 = vld [vmem:[%s0 + $0x98] sm:$0x3]
        %v425 = vld [vmem:[%s0 + $0xa0] sm:$0xff]
        %v426 = vld [vmem:[%s0 + $0xa8] sm:$0x3]
        %v427 = vld [vmem:[%s0 + $0xb0] sm:$0xff]
        %v428 = vld [vmem:[%s0 + $0xb8] sm:$0x3]
        %v429 = vld [vmem:[%s0 + $0xc0] sm:$0xff]
        %v430 = vld [vmem:[%s0 + $0xc8] sm:$0x3]
        %v431 = vld [vmem:[%s0 + $0xd0] sm:$0xff]
        %v432 = vld [vmem:[%s0 + $0xd8] sm:$0x3]
        %v433 = vld [vmem:[%s0 + $0xe0] sm:$0xff]
        %v434 = vld [vmem:[%s0 + $0xe8] sm:$0x3]
        %v435 = vld [vmem:[%s0 + $0xf0] sm:$0xff]
        %v436 = vld [vmem:[%s0 + $0xf8] sm:$0x3]
        %v437 = vld [vmem:[%s0 + $0x100] sm:$0xff]
        %v438 = vld [vmem:[%s0 + $0x108] sm:$0x3]
        %v439 = vld [vmem:[%s0 + $0x110] sm:$0xff]
        %v440 = vld [vmem:[%s0 + $0x118] sm:$0x3]
        %v441 = vld [vmem:[%s0 + $0x120] sm:$0xff]
        %v442 = vld [vmem:[%s0 + $0x128] sm:$0x3]
        %v443 = vld [vmem:[%s0 + $0x130] sm:$0xff]
        %v444 = vld [vmem:[%s0 + $0x138] sm:$0x3]
        %vm477 = vcmask 1046528
        %v478 = vrot.slane %v405, 1
        %v479 = vrot.slane %v406, 1
        %v480 = vsel %vm477, %v478, %v479
        %v481 = vrot.slane %v407, 1
        %v482 = vrot.slane %v408, 1
        %v483 = vsel %vm477, %v481, %v482
        %v484 = vrot.slane %v409, 1
        %v485 = vrot.slane %v410, 1
        %v486 = vsel %vm477, %v484, %v485
        %v487 = vrot.slane %v411, 1
        %v488 = vrot.slane %v412, 1
        %v489 = vsel %vm477, %v487, %v488
        %v490 = vrot.slane %v413, 1
        %v491 = vrot.slane %v414, 1
        %v492 = vsel %vm477, %v490, %v491
        %v493 = vrot.slane %v415, 1
        %v494 = vrot.slane %v416, 1
        %v495 = vsel %vm477, %v493, %v494
        %v496 = vrot.slane %v417, 1
        %v497 = vrot.slane %v418, 1
        %v498 = vsel %vm477, %v496, %v497
        %v499 = vrot.slane %v419, 1
        %v500 = vrot.slane %v420, 1
        %v501 = vsel %vm477, %v499, %v500
        %v502 = vrot.slane %v425, 1
        %v503 = vrot.slane %v426, 1
        %v504 = vsel %vm477, %v502, %v503
        %v505 = vrot.slane %v427, 1
        %v506 = vrot.slane %v428, 1
        %v507 = vsel %vm477, %v505, %v506
        %v508 = vrot.slane %v429, 1
        %v509 = vrot.slane %v430, 1
        %v510 = vsel %vm477, %v508, %v509
        %v511 = vrot.slane %v431, 1
        %v512 = vrot.slane %v432, 1
        %v513 = vsel %vm477, %v511, %v512
        %v514 = vrot.slane %v433, 1
        %v515 = vrot.slane %v434, 1
        %v516 = vsel %vm477, %v514, %v515
        %v517 = vrot.slane %v435, 1
        %v518 = vrot.slane %v436, 1
        %v519 = vsel %vm477, %v517, %v518
        %v520 = vrot.slane %v437, 1
        %v521 = vrot.slane %v438, 1
        %v522 = vsel %vm477, %v520, %v521
        %v523 = vrot.slane %v439, 1
        %v524 = vrot.slane %v440, 1
        %v525 = vsel %vm477, %v523, %v524
        %526 = vrot.lane.b32.xlu0 %v480, 64
        %v527 = vpop.permute.xlu0 %526
        %528 = vrot.lane.b32.xlu0 %v483, 64
        %v529 = vpop.permute.xlu0 %528
        %530 = vrot.lane.b32.xlu0 %v486, 64
        %v531 = vpop.permute.xlu0 %530
        %532 = vrot.lane.b32.xlu0 %v489, 64
        %v533 = vpop.permute.xlu0 %532
        %534 = vrot.lane.b32.xlu0 %v492, 64
        %v535 = vpop.permute.xlu0 %534
        %536 = vrot.lane.b32.xlu0 %v495, 64
        %v537 = vpop.permute.xlu0 %536
        %538 = vrot.lane.b32.xlu0 %v498, 64
        %v539 = vpop.permute.xlu0 %538
        %540 = vrot.lane.b32.xlu0 %v501, 64
        %v541 = vpop.permute.xlu0 %540
        %542 = vrot.lane.b32.xlu0 %v504, 64
        %v543 = vpop.permute.xlu0 %542
        %544 = vrot.lane.b32.xlu0 %v507, 64
        %v545 = vpop.permute.xlu0 %544
        %546 = vrot.lane.b32.xlu0 %v510, 64
        %v547 = vpop.permute.xlu0 %546
        %548 = vrot.lane.b32.xlu0 %v513, 64
        %v549 = vpop.permute.xlu0 %548
        %550 = vrot.lane.b32.xlu0 %v516, 64
        %v551 = vpop.permute.xlu0 %550
        %552 = vrot.lane.b32.xlu0 %v519, 64
        %v553 = vpop.permute.xlu0 %552
        %554 = vrot.lane.b32.xlu0 %v522, 64
        %v555 = vpop.permute.xlu0 %554
        %556 = vrot.lane.b32.xlu0 %v525, 64
        %v557 = vpop.permute.xlu0 %556
        %vm574 = vcmask 1045504
        %v575 = vrot.slane %v405, 2
        %v576 = vrot.slane %v406, 2
        %v577 = vsel %vm574, %v575, %v576
        %v578 = vrot.slane %v407, 2
        %v579 = vrot.slane %v408, 2
        %v580 = vsel %vm574, %v578, %v579
        %v581 = vrot.slane %v409, 2
        %v582 = vrot.slane %v410, 2
        %v583 = vsel %vm574, %v581, %v582
        %v584 = vrot.slane %v411, 2
        %v585 = vrot.slane %v412, 2
        %v586 = vsel %vm574, %v584, %v585
        %v587 = vrot.slane %v413, 2
        %v588 = vrot.slane %v414, 2
        %v589 = vsel %vm574, %v587, %v588
        %v590 = vrot.slane %v415, 2
        %v591 = vrot.slane %v416, 2
        %v592 = vsel %vm574, %v590, %v591
        %v593 = vrot.slane %v417, 2
        %v594 = vrot.slane %v418, 2
        %v595 = vsel %vm574, %v593, %v594
        %v596 = vrot.slane %v419, 2
        %v597 = vrot.slane %v420, 2
        %v598 = vsel %vm574, %v596, %v597
        %v599 = vrot.slane %v425, 2
        %v600 = vrot.slane %v426, 2
        %v601 = vsel %vm574, %v599, %v600
        %v602 = vrot.slane %v427, 2
        %v603 = vrot.slane %v428, 2
        %v604 = vsel %vm574, %v602, %v603
        %v605 = vrot.slane %v429, 2
        %v606 = vrot.slane %v430, 2
        %v607 = vsel %vm574, %v605, %v606
        %v608 = vrot.slane %v431, 2
        %v609 = vrot.slane %v432, 2
        %v610 = vsel %vm574, %v608, %v609
        %v611 = vrot.slane %v433, 2
        %v612 = vrot.slane %v434, 2
        %v613 = vsel %vm574, %v611, %v612
        %v614 = vrot.slane %v435, 2
        %v615 = vrot.slane %v436, 2
        %v616 = vsel %vm574, %v614, %v615
        %v617 = vrot.slane %v437, 2
        %v618 = vrot.slane %v438, 2
        %v619 = vsel %vm574, %v617, %v618
        %v620 = vrot.slane %v439, 2
        %v621 = vrot.slane %v440, 2
        %v622 = vsel %vm574, %v620, %v621
        %641 = vrot.lane.b32.xlu0 %v407, 64
        %v642 = vpop.permute.xlu0 %641
        %643 = vrot.lane.b32.xlu0 %v409, 64
        %v644 = vpop.permute.xlu0 %643
        %645 = vrot.lane.b32.xlu0 %v411, 64
        %v646 = vpop.permute.xlu0 %645
        %647 = vrot.lane.b32.xlu0 %v413, 64
        %v648 = vpop.permute.xlu0 %647
        %649 = vrot.lane.b32.xlu0 %v415, 64
        %v650 = vpop.permute.xlu0 %649
        %651 = vrot.lane.b32.xlu0 %v417, 64
        %v652 = vpop.permute.xlu0 %651
        %653 = vrot.lane.b32.xlu0 %v419, 64
        %v654 = vpop.permute.xlu0 %653
        %655 = vrot.lane.b32.xlu0 %v421, 64
        %v656 = vpop.permute.xlu0 %655
        %657 = vrot.lane.b32.xlu0 %v427, 64
        %v658 = vpop.permute.xlu0 %657
        %659 = vrot.lane.b32.xlu0 %v429, 64
        %v660 = vpop.permute.xlu0 %659
        %661 = vrot.lane.b32.xlu0 %v431, 64
        %v662 = vpop.permute.xlu0 %661
        %663 = vrot.lane.b32.xlu0 %v433, 64
        %v664 = vpop.permute.xlu0 %663
        %665 = vrot.lane.b32.xlu0 %v435, 64
        %v666 = vpop.permute.xlu0 %665
        %667 = vrot.lane.b32.xlu0 %v437, 64
        %v668 = vpop.permute.xlu0 %667
        %669 = vrot.lane.b32.xlu0 %v439, 64
        %v670 = vpop.permute.xlu0 %669
        %671 = vrot.lane.b32.xlu0 %v441, 64
        %v672 = vpop.permute.xlu0 %671
        %v691 = vrot.slane %v421, 1
        %v692 = vrot.slane %v422, 1
        %v693 = vsel %vm477, %v691, %v692
        %v694 = vrot.slane %v441, 1
        %v695 = vrot.slane %v442, 1
        %v696 = vsel %vm477, %v694, %v695
        %v713 = vrot.slane %v421, 2
        %v714 = vrot.slane %v422, 2
        %v715 = vsel %vm574, %v713, %v714
        %v716 = vrot.slane %v441, 2
        %v717 = vrot.slane %v442, 2
        %v718 = vsel %vm574, %v716, %v717
        %719 = vrot.lane.b32.xlu0 %v580, 64
        %v720 = vpop.permute.xlu0 %719
        %721 = vrot.lane.b32.xlu0 %v583, 64
        %v722 = vpop.permute.xlu0 %721
        %723 = vrot.lane.b32.xlu0 %v586, 64
        %v724 = vpop.permute.xlu0 %723
        %725 = vrot.lane.b32.xlu0 %v589, 64
        %v726 = vpop.permute.xlu0 %725
        %727 = vrot.lane.b32.xlu0 %v592, 64
        %v728 = vpop.permute.xlu0 %727
        %729 = vrot.lane.b32.xlu0 %v595, 64
        %v730 = vpop.permute.xlu0 %729
        %731 = vrot.lane.b32.xlu0 %v598, 64
        %v732 = vpop.permute.xlu0 %731
        %733 = vrot.lane.b32.xlu0 %v715, 64
        %v734 = vpop.permute.xlu0 %733
        %735 = vrot.lane.b32.xlu0 %v604, 64
        %v736 = vpop.permute.xlu0 %735
        %737 = vrot.lane.b32.xlu0 %v607, 64
        %v738 = vpop.permute.xlu0 %737
        %739 = vrot.lane.b32.xlu0 %v610, 64
        %v740 = vpop.permute.xlu0 %739
        %741 = vrot.lane.b32.xlu0 %v613, 64
        %v742 = vpop.permute.xlu0 %741
        %743 = vrot.lane.b32.xlu0 %v616, 64
        %v744 = vpop.permute.xlu0 %743
        %745 = vrot.lane.b32.xlu0 %v619, 64
        %v746 = vpop.permute.xlu0 %745
        %747 = vrot.lane.b32.xlu0 %v622, 64
        %v748 = vpop.permute.xlu0 %747
        %749 = vrot.lane.b32.xlu0 %v718, 64
        %v750 = vpop.permute.xlu0 %749
        %v771 = vrot.slane %v423, 1
        %v772 = vrot.slane %v424, 1
        %v773 = vsel %vm477, %v771, %v772
        %v774 = vrot.slane %v443, 1
        %v775 = vrot.slane %v444, 1
        %v776 = vsel %vm477, %v774, %v775
        %777 = vrot.lane.b32.xlu0 %v693, 64
        %v778 = vpop.permute.xlu0 %777
        %779 = vrot.lane.b32.xlu0 %v773, 64
        %v780 = vpop.permute.xlu0 %779
        %781 = vrot.lane.b32.xlu0 %v696, 64
        %v782 = vpop.permute.xlu0 %781
        %783 = vrot.lane.b32.xlu0 %v776, 64
        %v784 = vpop.permute.xlu0 %783
        %v789 = vrot.slane %v423, 2
        %v790 = vrot.slane %v424, 2
        %v791 = vsel %vm574, %v789, %v790
        %v792 = vrot.slane %v443, 2
        %v793 = vrot.slane %v444, 2
        %v794 = vsel %vm574, %v792, %v793
        %v799 = vsel %vm323, %v405, %v527
        %v800 = vsel %vm323, %v407, %v529
        %v801 = vsel %vm323, %v409, %v531
        %v802 = vsel %vm323, %v411, %v533
        %v803 = vsel %vm323, %v413, %v535
        %v804 = vsel %vm323, %v415, %v537
        %v805 = vsel %vm323, %v417, %v539
        %v806 = vsel %vm323, %v419, %v541
        %v807 = vsel %vm323, %v425, %v543
        %v808 = vsel %vm323, %v427, %v545
        %v809 = vsel %vm323, %v429, %v547
        %v810 = vsel %vm323, %v431, %v549
        %v811 = vsel %vm323, %v433, %v551
        %v812 = vsel %vm323, %v435, %v553
        %v813 = vsel %vm323, %v437, %v555
        %v814 = vsel %vm323, %v439, %v557
        %v815 = vsel %vm323, %v577, %v642
        %v816 = vsel %vm323, %v580, %v644
        %v817 = vsel %vm323, %v583, %v646
        %v818 = vsel %vm323, %v586, %v648
        %v819 = vsel %vm323, %v589, %v650
        %v820 = vsel %vm323, %v592, %v652
        %v821 = vsel %vm323, %v595, %v654
        %v822 = vsel %vm323, %v598, %v656
        %v823 = vsel %vm323, %v601, %v658
        %v824 = vsel %vm323, %v604, %v660
        %v825 = vsel %vm323, %v607, %v662
        %v826 = vsel %vm323, %v610, %v664
        %v827 = vsel %vm323, %v613, %v666
        %v828 = vsel %vm323, %v616, %v668
        %v829 = vsel %vm323, %v619, %v670
        %v830 = vsel %vm323, %v622, %v672
        %v831 = vsel %vm323, %v483, %v720
        %v832 = vsel %vm323, %v486, %v722
        %v833 = vsel %vm323, %v489, %v724
        %v834 = vsel %vm323, %v492, %v726
        %v835 = vsel %vm323, %v495, %v728
        %v836 = vsel %vm323, %v498, %v730
        %v837 = vsel %vm323, %v501, %v732
        %v838 = vsel %vm323, %v693, %v734
        %v839 = vsel %vm323, %v507, %v736
        %v840 = vsel %vm323, %v510, %v738
        %v841 = vsel %vm323, %v513, %v740
        %v842 = vsel %vm323, %v516, %v742
        %v843 = vsel %vm323, %v519, %v744
        %v844 = vsel %vm323, %v522, %v746
        %v845 = vsel %vm323, %v525, %v748
        %v846 = vsel %vm323, %v696, %v750
        %v847 = vsel %vm323, %v421, %v778
        %v848 = vsel %vm323, %v423, %v780
        %v849 = vsel %vm323, %v441, %v782
        %v850 = vsel %vm323, %v443, %v784
        %v851 = vpack.c.bf16 %v800, %v799
        %v852 = vpack.c.bf16 %v816, %v815
        %v853 = vpack.c.bf16 %v832, %v831
        %v854 = vpack.c.bf16 %v802, %v801
        %v855 = vpack.c.bf16 %v586, %v583
        %v856 = vpack.c.bf16 %v818, %v817
        %v857 = vpack.c.bf16 %v834, %v833
        %v858 = vpack.c.bf16 %v804, %v803
        %v859 = vpack.c.bf16 %v592, %v589
        %v860 = vpack.c.bf16 %v820, %v819
        %v861 = vpack.c.bf16 %v836, %v835
        %v862 = vpack.c.bf16 %v806, %v805
        %v863 = vpack.c.bf16 %v598, %v595
        %v864 = vpack.c.bf16 %v822, %v821
        %v865 = vpack.c.bf16 %v838, %v837
        %v866 = vpack.c.bf16 %v848, %v847
        %v867 = vpack.c.bf16 %v791, %v715
        %v868 = vpack.c.bf16 %v808, %v807
        %v869 = vpack.c.bf16 %v824, %v823
        %v870 = vpack.c.bf16 %v840, %v839
        %v871 = vpack.c.bf16 %v810, %v809
        %v872 = vpack.c.bf16 %v610, %v607
        %v873 = vpack.c.bf16 %v826, %v825
        %v874 = vpack.c.bf16 %v842, %v841
        %v875 = vpack.c.bf16 %v812, %v811
        %v876 = vpack.c.bf16 %v616, %v613
        %v877 = vpack.c.bf16 %v828, %v827
        %v878 = vpack.c.bf16 %v844, %v843
        %v879 = vpack.c.bf16 %v814, %v813
        %v880 = vpack.c.bf16 %v622, %v619
        %v881 = vpack.c.bf16 %v830, %v829
        %v882 = vpack.c.bf16 %v846, %v845
        %v883 = vpack.c.bf16 %v850, %v849
        %v884 = vpack.c.bf16 %v794, %v718
        %v885 = vlaneseq
        %v886 = vshrl.u32 %v885, 7
        %v887 = vsub.s32 0, %v886
        %v888 = vrot.slane %v318, %v887
        %v961 = vunpack.c.l.b16 %v174
        %v962 = vunpack.c.l.b16 %v175
        %v963 = vunpack.c.l.b16 %v176
        %v964 = vunpack.c.l.b16 %v177
        %v965 = vunpack.c.l.b16 %v178
        %v966 = vunpack.c.l.b16 %v179
        %v967 = vunpack.c.l.b16 %v180
        %v968 = vunpack.c.l.b16 %v181
        %v969 = vunpack.c.l.b16 %v182
        %v970 = vunpack.c.l.b16 %v183
        %v971 = vunpack.c.l.b16 %v184
        %v972 = vunpack.c.l.b16 %v185
        %v973 = vunpack.c.l.b16 %v186
        %v974 = vunpack.c.l.b16 %v187
        %v975 = vunpack.c.l.b16 %v188
        %v976 = vunpack.c.l.b16 %v189
        %v977 = vunpack.c.l.b16 %v190
        %v978 = vunpack.c.l.b16 %v191
        %v979 = vunpack.c.l.b16 %v192
        %v980 = vunpack.c.l.b16 %v193
        %v981 = vunpack.c.l.b16 %v194
        %v982 = vunpack.c.l.b16 %v195
        %v983 = vunpack.c.l.b16 %v196
        %v984 = vunpack.c.l.b16 %v197
        %v985 = vunpack.c.l.b16 %v198
        %v986 = vunpack.c.l.b16 %v199
        %v987 = vunpack.c.l.b16 %v200
        %v988 = vunpack.c.l.b16 %v201
        %v989 = vunpack.c.l.b16 %v202
        %v990 = vunpack.c.l.b16 %v203
        %v991 = vunpack.c.l.b16 %v204
        %v992 = vunpack.c.l.b16 %v205
        %v993 = vunpack.c.l.b16 %v206
        %v994 = vunpack.c.l.b16 %v207
        %v995 = vunpack.c.l.b16 %v208
        %v996 = vunpack.c.l.b16 %v209
        %v997 = vunpack.c.l.b16 %v210
        %v998 = vunpack.c.l.b16 %v211
        %v999 = vunpack.c.l.b16 %v212
        %v1000 = vunpack.c.l.b16 %v213
        %v1001 = vunpack.c.l.b16 %v214
        %v1002 = vunpack.c.l.b16 %v215
        %v1003 = vunpack.c.l.b16 %v216
        %v1004 = vunpack.c.l.b16 %v217
        %v1005 = vunpack.c.l.b16 %v218
        %v1006 = vunpack.c.l.b16 %v219
        %v1007 = vunpack.c.l.b16 %v220
        %v1008 = vunpack.c.l.b16 %v221
        %v1009 = vunpack.c.l.b16 %v222
        %v1010 = vunpack.c.l.b16 %v223
        %v1011 = vunpack.c.l.b16 %v224
        %v1012 = vunpack.c.l.b16 %v225
        %v1013 = vunpack.c.l.b16 %v226
        %v1014 = vunpack.c.l.b16 %v227
        %v1015 = vunpack.c.l.b16 %v228
        %v1016 = vunpack.c.l.b16 %v229
        %v1017 = vunpack.c.l.b16 %v230
        %v1018 = vunpack.c.l.b16 %v231
        %v1019 = vunpack.c.l.b16 %v232
        %v1020 = vunpack.c.l.b16 %v233
        %v1021 = vunpack.c.l.b16 %v234
        %v1022 = vunpack.c.l.b16 %v235
        %v1023 = vunpack.c.l.b16 %v236
        %v1024 = vunpack.c.l.b16 %v237
        %v1025 = vunpack.c.l.b16 %v238
        %v1026 = vunpack.c.l.b16 %v239
        %v1027 = vunpack.c.l.b16 %v240
        %v1028 = vunpack.c.l.b16 %v241
        %v1029 = vunpack.c.l.b16 %v242
        %v1030 = vunpack.c.l.b16 %v243
        %v1031 = vunpack.c.l.b16 %v244
        %v1032 = vunpack.c.l.b16 %v245
        %v1033 = vpack.c.b16 %v962, %v961
        %v1034 = vpack.c.b16 %v964, %v963
        %v1035 = vpack.c.b16 %v966, %v965
        %v1036 = vpack.c.b16 %v968, %v967
        %v1037 = vpack.c.b16 %v970, %v969
        %v1038 = vpack.c.b16 %v972, %v971
        %v1039 = vpack.c.b16 %v974, %v973
        %v1040 = vpack.c.b16 %v976, %v975
        %v1041 = vpack.c.b16 %v978, %v977
        %v1042 = vpack.c.b16 %v980, %v979
        %v1043 = vpack.c.b16 %v982, %v981
        %v1044 = vpack.c.b16 %v984, %v983
        %v1045 = vpack.c.b16 %v986, %v985
        %v1046 = vpack.c.b16 %v988, %v987
        %v1047 = vpack.c.b16 %v990, %v989
        %v1048 = vpack.c.b16 %v992, %v991
        %v1049 = vpack.c.b16 %v994, %v993
        %v1050 = vpack.c.b16 %v996, %v995
        %v1051 = vpack.c.b16 %v998, %v997
        %v1052 = vpack.c.b16 %v1000, %v999
        %v1053 = vpack.c.b16 %v1002, %v1001
        %v1054 = vpack.c.b16 %v1004, %v1003
        %v1055 = vpack.c.b16 %v1006, %v1005
        %v1056 = vpack.c.b16 %v1008, %v1007
        %v1057 = vpack.c.b16 %v1010, %v1009
        %v1058 = vpack.c.b16 %v1012, %v1011
        %v1059 = vpack.c.b16 %v1014, %v1013
        %v1060 = vpack.c.b16 %v1016, %v1015
        %v1061 = vpack.c.b16 %v1018, %v1017
        %v1062 = vpack.c.b16 %v1020, %v1019
        %v1063 = vpack.c.b16 %v1022, %v1021
        %v1064 = vpack.c.b16 %v1024, %v1023
        %v1065 = vpack.c.b16 %v1026, %v1025
        %v1066 = vpack.c.b16 %v1028, %v1027
        %v1067 = vpack.c.b16 %v1030, %v1029
        %v1068 = vpack.c.b16 %v1032, %v1031
        %v1106 = vsel %vm323, %v855, 0
        %v1109 = vsel %vm323, %v859, 0
        %v1112 = vsel %vm323, %v863, 0
        %v1115 = vsel %vm323, %v867, 0
        %v1118 = vsel %vm323, %v872, 0
        %v1121 = vsel %vm323, %v876, 0
        %v1124 = vsel %vm323, %v880, 0
        %v1127 = vsel %vm323, %v884, 0
        %1129 = vmatprep.subr.bf16.mxu0 0
        %1130 = vmatpush1.bf16.msra.mxu0 %v1040
        %1131 = vmatprep.subr.bf16.mxu0 0
        %1132 = vmatpush1.bf16.msra.mxu0 %v1039
        %1133 = vmatprep.subr.bf16.mxu0 0
        %1134 = vmatpush1.bf16.msra.mxu0 %v1038
        %1135 = vmatprep.subr.bf16.mxu0 0
        %1136 = vmatpush1.bf16.msra.mxu0 %v1037
        %1137 = vmatprep.subr.bf16.mxu0 0
        %1138 = vmatpush1.bf16.msra.mxu0 %v1036
        %1139 = vmatprep.subr.bf16.mxu0 0
        %1140 = vmatpush1.bf16.msra.mxu0 %v1035
        %1141 = vmatprep.subr.bf16.mxu0 0
        %1142 = vmatpush1.bf16.msra.mxu0 %v1034
        %1143 = vmatprep.subr.bf16.mxu0 0
        %1144 = vmatpush1.bf16.msra.mxu0 %v1033
        %1145 = vmatprep.subr.bf16.mxu0 0
        %1146 = vmatpush2.bf16.msra.mxu0 %v1048
        %1147 = vmatprep.subr.bf16.mxu0 0
        %1148 = vmatpush2.bf16.msra.mxu0 %v1047
        %1149 = vmatprep.subr.bf16.mxu0 0
        %1150 = vmatpush2.bf16.msra.mxu0 %v1046
        %1151 = vmatprep.subr.bf16.mxu0 0
        %1152 = vmatpush2.bf16.msra.mxu0 %v1045
        %1153 = vmatprep.subr.bf16.mxu0 0
        %1154 = vmatpush2.bf16.msra.mxu0 %v1044
        %1155 = vmatprep.subr.bf16.mxu0 0
        %1156 = vmatpush2.bf16.msra.mxu0 %v1043
        %1157 = vmatprep.subr.bf16.mxu0 0
        %1158 = vmatpush2.bf16.msra.mxu0 %v1042
        %1159 = vmatprep.subr.bf16.mxu0 0
        %1160 = vmatpush2.bf16.msra.mxu0 %v1041
        %1161 = vmatprep.mubr.bf16.mxu0 %v852
        %1162 = vmatmul.mubr.bf16.gmra.mxu0 %v851
        %v1163 = vpop.f32.mrf.mxu0
        %v1164 = vadd.f32 %v888, %v1163
        %v1165 = vpop.f32.mrf.mxu0
        %v1166 = vpop.f32.mrf.mxu0
        %v1167 = vadd.f32 %v888, %v1166
        %v1168 = vpop.f32.mrf.mxu0
        %1169 = vmatprep.mubr.bf16.mxu0 %v856
        %1170 = vmatmul.mubr.bf16.gmra.mxu0 %v854
        %v1171 = vpop.f32.mrf.mxu0
        %v1172 = vadd.f32 %v888, %v1171
        %v1173 = vpop.f32.mrf.mxu0
        %v1174 = vpop.f32.mrf.mxu0
        %v1175 = vadd.f32 %v888, %v1174
        %v1176 = vpop.f32.mrf.mxu0
        %1177 = vmatprep.mubr.bf16.mxu0 %v860
        %1178 = vmatmul.mubr.bf16.gmra.mxu0 %v858
        %v1179 = vpop.f32.mrf.mxu0
        %v1180 = vadd.f32 %v888, %v1179
        %v1181 = vpop.f32.mrf.mxu0
        %v1182 = vpop.f32.mrf.mxu0
        %v1183 = vadd.f32 %v888, %v1182
        %v1184 = vpop.f32.mrf.mxu0
        %1185 = vmatprep.mubr.bf16.mxu0 %v864
        %1186 = vmatmul.mubr.bf16.gmra.mxu0 %v862
        %v1187 = vpop.f32.mrf.mxu0
        %v1188 = vadd.f32 %v888, %v1187
        %v1189 = vpop.f32.mrf.mxu0
        %v1190 = vpop.f32.mrf.mxu0
        %v1191 = vadd.f32 %v888, %v1190
        %v1192 = vpop.f32.mrf.mxu0
        %1193 = vmatprep.mubr.bf16.mxu0 %v869
        %1194 = vmatmul.mubr.bf16.gmra.mxu0 %v868
        %v1195 = vpop.f32.mrf.mxu0
        %v1196 = vadd.f32 %v888, %v1195
        %v1197 = vpop.f32.mrf.mxu0
        %v1198 = vpop.f32.mrf.mxu0
        %v1199 = vadd.f32 %v888, %v1198
        %v1200 = vpop.f32.mrf.mxu0
        %1201 = vmatprep.mubr.bf16.mxu0 %v873
        %1202 = vmatmul.mubr.bf16.gmra.mxu0 %v871
        %v1203 = vpop.f32.mrf.mxu0
        %v1204 = vadd.f32 %v888, %v1203
        %v1205 = vpop.f32.mrf.mxu0
        %v1206 = vpop.f32.mrf.mxu0
        %v1207 = vadd.f32 %v888, %v1206
        %v1208 = vpop.f32.mrf.mxu0
        %1209 = vmatprep.mubr.bf16.mxu0 %v877
        %1210 = vmatmul.mubr.bf16.gmra.mxu0 %v875
        %v1211 = vpop.f32.mrf.mxu0
        %v1212 = vadd.f32 %v888, %v1211
        %v1213 = vpop.f32.mrf.mxu0
        %v1214 = vpop.f32.mrf.mxu0
        %v1215 = vadd.f32 %v888, %v1214
        %v1216 = vpop.f32.mrf.mxu0
        %1217 = vmatprep.mubr.bf16.mxu0 %v881
        %1218 = vmatmul.mubr.bf16.gmra.mxu0 %v879
        %v1219 = vpop.f32.mrf.mxu0
        %v1220 = vadd.f32 %v888, %v1219
        %v1221 = vpop.f32.mrf.mxu0
        %v1222 = vpop.f32.mrf.mxu0
        %v1223 = vadd.f32 %v888, %v1222
        %v1224 = vpop.f32.mrf.mxu0
        %1225 = vdwg.mxu0
        %1226 = vmatprep.subr.bf16.mxu0 0
        %1227 = vmatpush1.bf16.msra.mxu0 %v1056
        %1228 = vmatprep.subr.bf16.mxu0 0
        %1229 = vmatpush1.bf16.msra.mxu0 %v1055
        %1230 = vmatprep.subr.bf16.mxu0 0
        %1231 = vmatpush1.bf16.msra.mxu0 %v1054
        %1232 = vmatprep.subr.bf16.mxu0 0
        %1233 = vmatpush1.bf16.msra.mxu0 %v1053
        %1234 = vmatprep.subr.bf16.mxu0 0
        %1235 = vmatpush1.bf16.msra.mxu0 %v1052
        %1236 = vmatprep.subr.bf16.mxu0 0
        %1237 = vmatpush1.bf16.msra.mxu0 %v1051
        %1238 = vmatprep.subr.bf16.mxu0 0
        %1239 = vmatpush1.bf16.msra.mxu0 %v1050
        %1240 = vmatprep.subr.bf16.mxu0 0
        %1241 = vmatpush1.bf16.msra.mxu0 %v1049
        %1242 = vmatprep.subr.bf16.mxu0 0
        %1243 = vmatpush2.bf16.msra.mxu0 %v1064
        %1244 = vmatprep.subr.bf16.mxu0 0
        %1245 = vmatpush2.bf16.msra.mxu0 %v1063
        %1246 = vmatprep.subr.bf16.mxu0 0
        %1247 = vmatpush2.bf16.msra.mxu0 %v1062
        %1248 = vmatprep.subr.bf16.mxu0 0
        %1249 = vmatpush2.bf16.msra.mxu0 %v1061
        %1250 = vmatprep.subr.bf16.mxu0 0
        %1251 = vmatpush2.bf16.msra.mxu0 %v1060
        %1252 = vmatprep.subr.bf16.mxu0 0
        %1253 = vmatpush2.bf16.msra.mxu0 %v1059
        %1254 = vmatprep.subr.bf16.mxu0 0
        %1255 = vmatpush2.bf16.msra.mxu0 %v1058
        %1256 = vmatprep.subr.bf16.mxu0 0
        %1257 = vmatpush2.bf16.msra.mxu0 %v1057
        %1258 = vmatprep.mubr.bf16.mxu0 %v854
        %1259 = vmatmul.mubr.bf16.gmra.mxu0 %v853
        %v1260 = vpop.f32.mrf.mxu0
        %v1261 = vadd.f32 %v1164, %v1260
        %v1262 = vpop.f32.mrf.mxu0
        %v1263 = vpop.f32.mrf.mxu0
        %v1264 = vadd.f32 %v1167, %v1263
        %v1265 = vpop.f32.mrf.mxu0
        %1266 = vmatprep.mubr.bf16.mxu0 %v858
        %1267 = vmatmul.mubr.bf16.gmra.mxu0 %v857
        %v1268 = vpop.f32.mrf.mxu0
        %v1269 = vadd.f32 %v1172, %v1268
        %v1270 = vpop.f32.mrf.mxu0
        %v1271 = vpop.f32.mrf.mxu0
        %v1272 = vadd.f32 %v1175, %v1271
        %v1273 = vpop.f32.mrf.mxu0
        %1274 = vmatprep.mubr.bf16.mxu0 %v862
        %1275 = vmatmul.mubr.bf16.gmra.mxu0 %v861
        %v1276 = vpop.f32.mrf.mxu0
        %v1277 = vadd.f32 %v1180, %v1276
        %v1278 = vpop.f32.mrf.mxu0
        %v1279 = vpop.f32.mrf.mxu0
        %v1280 = vadd.f32 %v1183, %v1279
        %v1281 = vpop.f32.mrf.mxu0
        %1282 = vmatprep.mubr.bf16.mxu0 %v866
        %1283 = vmatmul.mubr.bf16.gmra.mxu0 %v865
        %v1284 = vpop.f32.mrf.mxu0
        %v1285 = vadd.f32 %v1188, %v1284
        %v1286 = vpop.f32.mrf.mxu0
        %v1287 = vpop.f32.mrf.mxu0
        %v1288 = vadd.f32 %v1191, %v1287
        %v1289 = vpop.f32.mrf.mxu0
        %1290 = vmatprep.mubr.bf16.mxu0 %v871
        %1291 = vmatmul.mubr.bf16.gmra.mxu0 %v870
        %v1292 = vpop.f32.mrf.mxu0
        %v1293 = vadd.f32 %v1196, %v1292
        %v1294 = vpop.f32.mrf.mxu0
        %v1295 = vpop.f32.mrf.mxu0
        %v1296 = vadd.f32 %v1199, %v1295
        %v1297 = vpop.f32.mrf.mxu0
        %1298 = vmatprep.mubr.bf16.mxu0 %v875
        %1299 = vmatmul.mubr.bf16.gmra.mxu0 %v874
        %v1300 = vpop.f32.mrf.mxu0
        %v1301 = vadd.f32 %v1204, %v1300
        %v1302 = vpop.f32.mrf.mxu0
        %v1303 = vpop.f32.mrf.mxu0
        %v1304 = vadd.f32 %v1207, %v1303
        %v1305 = vpop.f32.mrf.mxu0
        %1306 = vmatprep.mubr.bf16.mxu0 %v879
        %1307 = vmatmul.mubr.bf16.gmra.mxu0 %v878
        %v1308 = vpop.f32.mrf.mxu0
        %v1309 = vadd.f32 %v1212, %v1308
        %v1310 = vpop.f32.mrf.mxu0
        %v1311 = vpop.f32.mrf.mxu0
        %v1312 = vadd.f32 %v1215, %v1311
        %v1313 = vpop.f32.mrf.mxu0
        %1314 = vmatprep.mubr.bf16.mxu0 %v883
        %1315 = vmatmul.mubr.bf16.gmra.mxu0 %v882
        %v1316 = vpop.f32.mrf.mxu0
        %v1317 = vadd.f32 %v1220, %v1316
        %v1318 = vpop.f32.mrf.mxu0
        %v1319 = vpop.f32.mrf.mxu0
        %v1320 = vadd.f32 %v1223, %v1319
        %v1321 = vpop.f32.mrf.mxu0
        %1322 = vdwg.mxu0
        %1323 = vmatprep.subr.bf16.mxu0 0
        %1324 = vmatpush1.bf16.msra.mxu0 0
        %1325 = vmatprep.subr.bf16.mxu0 0
        %1326 = vmatpush1.bf16.msra.mxu0 0
        %1327 = vmatprep.subr.bf16.mxu0 0
        %1328 = vmatpush1.bf16.msra.mxu0 0
        %1329 = vmatprep.subr.bf16.mxu0 0
        %1330 = vmatpush1.bf16.msra.mxu0 0
        %1331 = vmatprep.subr.bf16.mxu0 0
        %1332 = vmatpush1.bf16.msra.mxu0 %v1068
        %1333 = vmatprep.subr.bf16.mxu0 0
        %1334 = vmatpush1.bf16.msra.mxu0 %v1067
        %1335 = vmatprep.subr.bf16.mxu0 0
        %1336 = vmatpush1.bf16.msra.mxu0 %v1066
        %1337 = vmatprep.subr.bf16.mxu0 0
        %1338 = vmatpush1.bf16.msra.mxu0 %v1065
        %1339 = vmatprep.subr.bf16.mxu0 0
        %1340 = vmatpush2.bf16.msra.mxu0 0
        %1341 = vmatprep.subr.bf16.mxu0 0
        %1342 = vmatpush2.bf16.msra.mxu0 0
        %1343 = vmatprep.subr.bf16.mxu0 0
        %1344 = vmatpush2.bf16.msra.mxu0 0
        %1345 = vmatprep.subr.bf16.mxu0 0
        %1346 = vmatpush2.bf16.msra.mxu0 0
        %1347 = vmatprep.subr.bf16.mxu0 0
        %1348 = vmatpush2.bf16.msra.mxu0 0
        %1349 = vmatprep.subr.bf16.mxu0 0
        %1350 = vmatpush2.bf16.msra.mxu0 0
        %1351 = vmatprep.subr.bf16.mxu0 0
        %1352 = vmatpush2.bf16.msra.mxu0 0
        %1353 = vmatprep.subr.bf16.mxu0 0
        %1354 = vmatpush2.bf16.msra.mxu0 0
        %1355 = vmatprep.mubr.bf16.mxu0 0
        %1356 = vmatmul.mubr.bf16.gmra.mxu0 %v1106
        %v1357 = vpop.f32.mrf.mxu0
        %v1358 = vadd.f32 %v1261, %v1357
        %v1359 = vpop.f32.mrf.mxu0
        %v1360 = vpop.f32.mrf.mxu0
        %v1361 = vadd.f32 %v1264, %v1360
        %v1362 = vpop.f32.mrf.mxu0
        %1363 = vmatprep.mubr.bf16.mxu0 0
        %1364 = vmatmul.mubr.bf16.gmra.mxu0 %v1109
        %v1365 = vpop.f32.mrf.mxu0
        %v1366 = vadd.f32 %v1269, %v1365
        %v1367 = vpop.f32.mrf.mxu0
        %v1368 = vpop.f32.mrf.mxu0
        %v1369 = vadd.f32 %v1272, %v1368
        %v1370 = vpop.f32.mrf.mxu0
        %1371 = vmatprep.mubr.bf16.mxu0 0
        %1372 = vmatmul.mubr.bf16.gmra.mxu0 %v1112
        %v1373 = vpop.f32.mrf.mxu0
        %v1374 = vadd.f32 %v1277, %v1373
        %v1375 = vpop.f32.mrf.mxu0
        %v1376 = vpop.f32.mrf.mxu0
        %v1377 = vadd.f32 %v1280, %v1376
        %v1378 = vpop.f32.mrf.mxu0
        %1379 = vmatprep.mubr.bf16.mxu0 0
        %1380 = vmatmul.mubr.bf16.gmra.mxu0 %v1115
        %v1381 = vpop.f32.mrf.mxu0
        %v1382 = vadd.f32 %v1285, %v1381
        %v1383 = vpop.f32.mrf.mxu0
        %v1384 = vpop.f32.mrf.mxu0
        %v1385 = vadd.f32 %v1288, %v1384
        %v1386 = vpop.f32.mrf.mxu0
        %1387 = vmatprep.mubr.bf16.mxu0 0
        %1388 = vmatmul.mubr.bf16.gmra.mxu0 %v1118
        %v1389 = vpop.f32.mrf.mxu0
        %v1390 = vadd.f32 %v1293, %v1389
        %v1391 = vpop.f32.mrf.mxu0
        %v1392 = vpop.f32.mrf.mxu0
        %v1393 = vadd.f32 %v1296, %v1392
        %v1394 = vpop.f32.mrf.mxu0
        %1395 = vmatprep.mubr.bf16.mxu0 0
        %1396 = vmatmul.mubr.bf16.gmra.mxu0 %v1121
        %v1397 = vpop.f32.mrf.mxu0
        %v1398 = vadd.f32 %v1301, %v1397
        %v1399 = vpop.f32.mrf.mxu0
        %v1400 = vpop.f32.mrf.mxu0
        %v1401 = vadd.f32 %v1304, %v1400
        %v1402 = vpop.f32.mrf.mxu0
        %1403 = vmatprep.mubr.bf16.mxu0 0
        %1404 = vmatmul.mubr.bf16.gmra.mxu0 %v1124
        %v1405 = vpop.f32.mrf.mxu0
        %v1406 = vadd.f32 %v1309, %v1405
        %v1407 = vpop.f32.mrf.mxu0
        %v1408 = vpop.f32.mrf.mxu0
        %v1409 = vadd.f32 %v1312, %v1408
        %v1410 = vpop.f32.mrf.mxu0
        %1411 = vmatprep.mubr.bf16.mxu0 0
        %1412 = vmatmul.mubr.bf16.gmra.mxu0 %v1127
        %v1413 = vpop.f32.mrf.mxu0
        %v1414 = vadd.f32 %v1317, %v1413
        %v1415 = vpop.f32.mrf.mxu0
        %v1416 = vpop.f32.mrf.mxu0
        %v1417 = vadd.f32 %v1320, %v1416
        %v1418 = vpop.f32.mrf.mxu0
        %1419 = vdwg.mxu0
        %v1420 = vmax.f32 %v1358, 0.0
        %v1421 = vmax.f32 %v1361, 0.0
        %v1422 = vmax.f32 %v1366, 0.0
        %v1423 = vmax.f32 %v1369, 0.0
        %v1424 = vmax.f32 %v1374, 0.0
        %v1425 = vmax.f32 %v1377, 0.0
        %v1426 = vmax.f32 %v1382, 0.0
        %v1427 = vmax.f32 %v1385, 0.0
        %v1428 = vmax.f32 %v1390, 0.0
        %v1429 = vmax.f32 %v1393, 0.0
        %v1430 = vmax.f32 %v1398, 0.0
        %v1431 = vmax.f32 %v1401, 0.0
        %v1432 = vmax.f32 %v1406, 0.0
        %v1433 = vmax.f32 %v1409, 0.0
        %v1434 = vmax.f32 %v1414, 0.0
        %v1435 = vmax.f32 %v1417, 0.0
        %s1436 = scalar_lea.vmem [#allocation2], 16
        %1437 = vst.msk [vmem:[%s1436 + $0x1] sm:$0xff] %vm323, %v1420
        %1438 = vst.msk [vmem:[%s1436 + $0x11] sm:$0xff] %vm323, %v1421
        %1439 = vst.msk [vmem:[%s1436 + $0x21] sm:$0xff] %vm323, %v1422
        %1440 = vst.msk [vmem:[%s1436 + $0x31] sm:$0xff] %vm323, %v1423
        %1441 = vst.msk [vmem:[%s1436 + $0x41] sm:$0xff] %vm323, %v1424
        %1442 = vst.msk [vmem:[%s1436 + $0x51] sm:$0xff] %vm323, %v1425
        %1443 = vst.msk [vmem:[%s1436 + $0x61] sm:$0xff] %vm323, %v1426
        %1444 = vst.msk [vmem:[%s1436 + $0x71] sm:$0xff] %vm323, %v1427
        %1445 = vst.msk [vmem:[%s1436 + $0xa1] sm:$0xff] %vm323, %v1428
        %1446 = vst.msk [vmem:[%s1436 + $0xb1] sm:$0xff] %vm323, %v1429
        %1447 = vst.msk [vmem:[%s1436 + $0xc1] sm:$0xff] %vm323, %v1430
        %1448 = vst.msk [vmem:[%s1436 + $0xd1] sm:$0xff] %vm323, %v1431
        %1449 = vst.msk [vmem:[%s1436 + $0xe1] sm:$0xff] %vm323, %v1432
        %1450 = vst.msk [vmem:[%s1436 + $0xf1] sm:$0xff] %vm323, %v1433
        %1451 = vst.msk [vmem:[%s1436 + $0x101] sm:$0xff] %vm323, %v1434
        %1452 = vst.msk [vmem:[%s1436 + $0x111] sm:$0xff] %vm323, %v1435
      $region36: #{forward_pallas.2} parent=31 // pred_fallthru
        _
      %p1453 = scmp.gt.s32.totalorder %s14, 0
      // Predicated region
      $region37: #{forward_pallas.2} parent=31 // pred_check
        %p1454 = pneg %p1453
      $region38: #{forward_pallas.2} parent=31 // pred_check_branch
        %1456 = sbr.rel (%p1454) target = $region40
      $region39: #{forward_pallas.2} parent=31 // pred_region
        %v1457 = vld [vmem:[#allocation2] sm:$0xff]
        %v1458 = vld [vmem:[#allocation2 + $0x8] sm:$0x3]
        %v1459 = vld [vmem:[#allocation2 + $0x10] sm:$0xff]
        %v1460 = vld [vmem:[#allocation2 + $0x18] sm:$0x3]
        %v1461 = vld [vmem:[#allocation2 + $0x20] sm:$0xff]
        %v1462 = vld [vmem:[#allocation2 + $0x28] sm:$0x3]
        %v1463 = vld [vmem:[#allocation2 + $0x30] sm:$0xff]
        %v1464 = vld [vmem:[#allocation2 + $0x38] sm:$0x3]
        %v1465 = vld [vmem:[#allocation2 + $0x40] sm:$0xff]
        %v1466 = vld [vmem:[#allocation2 + $0x48] sm:$0x3]
        %v1467 = vld [vmem:[#allocation2 + $0x50] sm:$0xff]
        %v1468 = vld [vmem:[#allocation2 + $0x58] sm:$0x3]
        %v1469 = vld [vmem:[#allocation2 + $0x60] sm:$0xff]
        %v1470 = vld [vmem:[#allocation2 + $0x68] sm:$0x3]
        %v1471 = vld [vmem:[#allocation2 + $0x70] sm:$0xff]
        %v1472 = vld [vmem:[#allocation2 + $0x78] sm:$0x3]
        %v1473 = vld [vmem:[#allocation2 + $0x80] sm:$0xff]
        %v1474 = vld [vmem:[#allocation2 + $0x88] sm:$0x3]
        %v1475 = vld [vmem:[#allocation2 + $0x90] sm:$0xff]
        %v1476 = vld [vmem:[#allocation2 + $0x98] sm:$0x3]
        %v1477 = vld [vmem:[#allocation2 + $0xa0] sm:$0xff]
        %v1478 = vld [vmem:[#allocation2 + $0xa8] sm:$0x3]
        %v1479 = vld [vmem:[#allocation2 + $0xb0] sm:$0xff]
        %v1480 = vld [vmem:[#allocation2 + $0xb8] sm:$0x3]
        %v1481 = vld [vmem:[#allocation2 + $0xc0] sm:$0xff]
        %v1482 = vld [vmem:[#allocation2 + $0xc8] sm:$0x3]
        %v1483 = vld [vmem:[#allocation2 + $0xd0] sm:$0xff]
        %v1484 = vld [vmem:[#allocation2 + $0xd8] sm:$0x3]
        %v1485 = vld [vmem:[#allocation2 + $0xe0] sm:$0xff]
        %v1486 = vld [vmem:[#allocation2 + $0xe8] sm:$0x3]
        %v1487 = vld [vmem:[#allocation2 + $0xf0] sm:$0xff]
        %v1488 = vld [vmem:[#allocation2 + $0xf8] sm:$0x3]
        %v1489 = vld [vmem:[#allocation2 + $0x100] sm:$0xff]
        %v1490 = vld [vmem:[#allocation2 + $0x108] sm:$0x3]
        %v1491 = vld [vmem:[#allocation2 + $0x110] sm:$0xff]
        %v1492 = vld [vmem:[#allocation2 + $0x118] sm:$0x3]
        %v1493 = vld [vmem:[#allocation2 + $0x120] sm:$0xff]
        %v1494 = vld [vmem:[#allocation2 + $0x128] sm:$0x3]
        %v1495 = vld [vmem:[#allocation2 + $0x130] sm:$0xff]
        %v1496 = vld [vmem:[#allocation2 + $0x138] sm:$0x3]
        %vm1529 = vcmask 1046528
        %v1530 = vrot.slane %v1457, 1
        %v1531 = vrot.slane %v1458, 1
        %v1532 = vsel %vm1529, %v1530, %v1531
        %v1533 = vrot.slane %v1459, 1
        %v1534 = vrot.slane %v1460, 1
        %v1535 = vsel %vm1529, %v1533, %v1534
        %v1536 = vrot.slane %v1461, 1
        %v1537 = vrot.slane %v1462, 1
        %v1538 = vsel %vm1529, %v1536, %v1537
        %v1539 = vrot.slane %v1463, 1
        %v1540 = vrot.slane %v1464, 1
        %v1541 = vsel %vm1529, %v1539, %v1540
        %v1542 = vrot.slane %v1465, 1
        %v1543 = vrot.slane %v1466, 1
        %v1544 = vsel %vm1529, %v1542, %v1543
        %v1545 = vrot.slane %v1467, 1
        %v1546 = vrot.slane %v1468, 1
        %v1547 = vsel %vm1529, %v1545, %v1546
        %v1548 = vrot.slane %v1469, 1
        %v1549 = vrot.slane %v1470, 1
        %v1550 = vsel %vm1529, %v1548, %v1549
        %v1551 = vrot.slane %v1471, 1
        %v1552 = vrot.slane %v1472, 1
        %v1553 = vsel %vm1529, %v1551, %v1552
        %v1554 = vrot.slane %v1477, 1
        %v1555 = vrot.slane %v1478, 1
        %v1556 = vsel %vm1529, %v1554, %v1555
        %v1557 = vrot.slane %v1479, 1
        %v1558 = vrot.slane %v1480, 1
        %v1559 = vsel %vm1529, %v1557, %v1558
        %v1560 = vrot.slane %v1481, 1
        %v1561 = vrot.slane %v1482, 1
        %v1562 = vsel %vm1529, %v1560, %v1561
        %v1563 = vrot.slane %v1483, 1
        %v1564 = vrot.slane %v1484, 1
        %v1565 = vsel %vm1529, %v1563, %v1564
        %v1566 = vrot.slane %v1485, 1
        %v1567 = vrot.slane %v1486, 1
        %v1568 = vsel %vm1529, %v1566, %v1567
        %v1569 = vrot.slane %v1487, 1
        %v1570 = vrot.slane %v1488, 1
        %v1571 = vsel %vm1529, %v1569, %v1570
        %v1572 = vrot.slane %v1489, 1
        %v1573 = vrot.slane %v1490, 1
        %v1574 = vsel %vm1529, %v1572, %v1573
        %v1575 = vrot.slane %v1491, 1
        %v1576 = vrot.slane %v1492, 1
        %v1577 = vsel %vm1529, %v1575, %v1576
        %1578 = vrot.lane.b32.xlu0 %v1532, 64
        %v1579 = vpop.permute.xlu0 %1578
        %1580 = vrot.lane.b32.xlu0 %v1535, 64
        %v1581 = vpop.permute.xlu0 %1580
        %1582 = vrot.lane.b32.xlu0 %v1538, 64
        %v1583 = vpop.permute.xlu0 %1582
        %1584 = vrot.lane.b32.xlu0 %v1541, 64
        %v1585 = vpop.permute.xlu0 %1584
        %1586 = vrot.lane.b32.xlu0 %v1544, 64
        %v1587 = vpop.permute.xlu0 %1586
        %1588 = vrot.lane.b32.xlu0 %v1547, 64
        %v1589 = vpop.permute.xlu0 %1588
        %1590 = vrot.lane.b32.xlu0 %v1550, 64
        %v1591 = vpop.permute.xlu0 %1590
        %1592 = vrot.lane.b32.xlu0 %v1553, 64
        %v1593 = vpop.permute.xlu0 %1592
        %1594 = vrot.lane.b32.xlu0 %v1556, 64
        %v1595 = vpop.permute.xlu0 %1594
        %1596 = vrot.lane.b32.xlu0 %v1559, 64
        %v1597 = vpop.permute.xlu0 %1596
        %1598 = vrot.lane.b32.xlu0 %v1562, 64
        %v1599 = vpop.permute.xlu0 %1598
        %1600 = vrot.lane.b32.xlu0 %v1565, 64
        %v1601 = vpop.permute.xlu0 %1600
        %1602 = vrot.lane.b32.xlu0 %v1568, 64
        %v1603 = vpop.permute.xlu0 %1602
        %1604 = vrot.lane.b32.xlu0 %v1571, 64
        %v1605 = vpop.permute.xlu0 %1604
        %1606 = vrot.lane.b32.xlu0 %v1574, 64
        %v1607 = vpop.permute.xlu0 %1606
        %1608 = vrot.lane.b32.xlu0 %v1577, 64
        %v1609 = vpop.permute.xlu0 %1608
        %vm1626 = vcmask 1045504
        %v1627 = vrot.slane %v1457, 2
        %v1628 = vrot.slane %v1458, 2
        %v1629 = vsel %vm1626, %v1627, %v1628
        %v1630 = vrot.slane %v1459, 2
        %v1631 = vrot.slane %v1460, 2
        %v1632 = vsel %vm1626, %v1630, %v1631
        %v1633 = vrot.slane %v1461, 2
        %v1634 = vrot.slane %v1462, 2
        %v1635 = vsel %vm1626, %v1633, %v1634
        %v1636 = vrot.slane %v1463, 2
        %v1637 = vrot.slane %v1464, 2
        %v1638 = vsel %vm1626, %v1636, %v1637
        %v1639 = vrot.slane %v1465, 2
        %v1640 = vrot.slane %v1466, 2
        %v1641 = vsel %vm1626, %v1639, %v1640
        %v1642 = vrot.slane %v1467, 2
        %v1643 = vrot.slane %v1468, 2
        %v1644 = vsel %vm1626, %v1642, %v1643
        %v1645 = vrot.slane %v1469, 2
        %v1646 = vrot.slane %v1470, 2
        %v1647 = vsel %vm1626, %v1645, %v1646
        %v1648 = vrot.slane %v1471, 2
        %v1649 = vrot.slane %v1472, 2
        %v1650 = vsel %vm1626, %v1648, %v1649
        %v1651 = vrot.slane %v1477, 2
        %v1652 = vrot.slane %v1478, 2
        %v1653 = vsel %vm1626, %v1651, %v1652
        %v1654 = vrot.slane %v1479, 2
        %v1655 = vrot.slane %v1480, 2
        %v1656 = vsel %vm1626, %v1654, %v1655
        %v1657 = vrot.slane %v1481, 2
        %v1658 = vrot.slane %v1482, 2
        %v1659 = vsel %vm1626, %v1657, %v1658
        %v1660 = vrot.slane %v1483, 2
        %v1661 = vrot.slane %v1484, 2
        %v1662 = vsel %vm1626, %v1660, %v1661
        %v1663 = vrot.slane %v1485, 2
        %v1664 = vrot.slane %v1486, 2
        %v1665 = vsel %vm1626, %v1663, %v1664
        %v1666 = vrot.slane %v1487, 2
        %v1667 = vrot.slane %v1488, 2
        %v1668 = vsel %vm1626, %v1666, %v1667
        %v1669 = vrot.slane %v1489, 2
        %v1670 = vrot.slane %v1490, 2
        %v1671 = vsel %vm1626, %v1669, %v1670
        %v1672 = vrot.slane %v1491, 2
        %v1673 = vrot.slane %v1492, 2
        %v1674 = vsel %vm1626, %v1672, %v1673
        %1693 = vrot.lane.b32.xlu0 %v1459, 64
        %v1694 = vpop.permute.xlu0 %1693
        %1695 = vrot.lane.b32.xlu0 %v1461, 64
        %v1696 = vpop.permute.xlu0 %1695
        %1697 = vrot.lane.b32.xlu0 %v1463, 64
        %v1698 = vpop.permute.xlu0 %1697
        %1699 = vrot.lane.b32.xlu0 %v1465, 64
        %v1700 = vpop.permute.xlu0 %1699
        %1701 = vrot.lane.b32.xlu0 %v1467, 64
        %v1702 = vpop.permute.xlu0 %1701
        %1703 = vrot.lane.b32.xlu0 %v1469, 64
        %v1704 = vpop.permute.xlu0 %1703
        %1705 = vrot.lane.b32.xlu0 %v1471, 64
        %v1706 = vpop.permute.xlu0 %1705
        %1707 = vrot.lane.b32.xlu0 %v1473, 64
        %v1708 = vpop.permute.xlu0 %1707
        %1709 = vrot.lane.b32.xlu0 %v1479, 64
        %v1710 = vpop.permute.xlu0 %1709
        %1711 = vrot.lane.b32.xlu0 %v1481, 64
        %v1712 = vpop.permute.xlu0 %1711
        %1713 = vrot.lane.b32.xlu0 %v1483, 64
        %v1714 = vpop.permute.xlu0 %1713
        %1715 = vrot.lane.b32.xlu0 %v1485, 64
        %v1716 = vpop.permute.xlu0 %1715
        %1717 = vrot.lane.b32.xlu0 %v1487, 64
        %v1718 = vpop.permute.xlu0 %1717
        %1719 = vrot.lane.b32.xlu0 %v1489, 64
        %v1720 = vpop.permute.xlu0 %1719
        %1721 = vrot.lane.b32.xlu0 %v1491, 64
        %v1722 = vpop.permute.xlu0 %1721
        %1723 = vrot.lane.b32.xlu0 %v1493, 64
        %v1724 = vpop.permute.xlu0 %1723
        %v1743 = vrot.slane %v1473, 1
        %v1744 = vrot.slane %v1474, 1
        %v1745 = vsel %vm1529, %v1743, %v1744
        %v1746 = vrot.slane %v1493, 1
        %v1747 = vrot.slane %v1494, 1
        %v1748 = vsel %vm1529, %v1746, %v1747
        %v1765 = vrot.slane %v1473, 2
        %v1766 = vrot.slane %v1474, 2
        %v1767 = vsel %vm1626, %v1765, %v1766
        %v1768 = vrot.slane %v1493, 2
        %v1769 = vrot.slane %v1494, 2
        %v1770 = vsel %vm1626, %v1768, %v1769
        %1771 = vrot.lane.b32.xlu0 %v1632, 64
        %v1772 = vpop.permute.xlu0 %1771
        %1773 = vrot.lane.b32.xlu0 %v1635, 64
        %v1774 = vpop.permute.xlu0 %1773
        %1775 = vrot.lane.b32.xlu0 %v1638, 64
        %v1776 = vpop.permute.xlu0 %1775
        %1777 = vrot.lane.b32.xlu0 %v1641, 64
        %v1778 = vpop.permute.xlu0 %1777
        %1779 = vrot.lane.b32.xlu0 %v1644, 64
        %v1780 = vpop.permute.xlu0 %1779
        %1781 = vrot.lane.b32.xlu0 %v1647, 64
        %v1782 = vpop.permute.xlu0 %1781
        %1783 = vrot.lane.b32.xlu0 %v1650, 64
        %v1784 = vpop.permute.xlu0 %1783
        %1785 = vrot.lane.b32.xlu0 %v1767, 64
        %v1786 = vpop.permute.xlu0 %1785
        %1787 = vrot.lane.b32.xlu0 %v1656, 64
        %v1788 = vpop.permute.xlu0 %1787
        %1789 = vrot.lane.b32.xlu0 %v1659, 64
        %v1790 = vpop.permute.xlu0 %1789
        %1791 = vrot.lane.b32.xlu0 %v1662, 64
        %v1792 = vpop.permute.xlu0 %1791
        %1793 = vrot.lane.b32.xlu0 %v1665, 64
        %v1794 = vpop.permute.xlu0 %1793
        %1795 = vrot.lane.b32.xlu0 %v1668, 64
        %v1796 = vpop.permute.xlu0 %1795
        %1797 = vrot.lane.b32.xlu0 %v1671, 64
        %v1798 = vpop.permute.xlu0 %1797
        %1799 = vrot.lane.b32.xlu0 %v1674, 64
        %v1800 = vpop.permute.xlu0 %1799
        %1801 = vrot.lane.b32.xlu0 %v1770, 64
        %v1802 = vpop.permute.xlu0 %1801
        %v1823 = vrot.slane %v1475, 1
        %v1824 = vrot.slane %v1476, 1
        %v1825 = vsel %vm1529, %v1823, %v1824
        %v1826 = vrot.slane %v1495, 1
        %v1827 = vrot.slane %v1496, 1
        %v1828 = vsel %vm1529, %v1826, %v1827
        %1829 = vrot.lane.b32.xlu0 %v1745, 64
        %v1830 = vpop.permute.xlu0 %1829
        %1831 = vrot.lane.b32.xlu0 %v1825, 64
        %v1832 = vpop.permute.xlu0 %1831
        %1833 = vrot.lane.b32.xlu0 %v1748, 64
        %v1834 = vpop.permute.xlu0 %1833
        %1835 = vrot.lane.b32.xlu0 %v1828, 64
        %v1836 = vpop.permute.xlu0 %1835
        %v1841 = vrot.slane %v1475, 2
        %v1842 = vrot.slane %v1476, 2
        %v1843 = vsel %vm1626, %v1841, %v1842
        %v1844 = vrot.slane %v1495, 2
        %v1845 = vrot.slane %v1496, 2
        %v1846 = vsel %vm1626, %v1844, %v1845
        %vm1851 = vcmask 523264
        %v1852 = vsel %vm1851, %v1457, %v1579
        %v1853 = vsel %vm1851, %v1459, %v1581
        %v1854 = vsel %vm1851, %v1461, %v1583
        %v1855 = vsel %vm1851, %v1463, %v1585
        %v1856 = vsel %vm1851, %v1465, %v1587
        %v1857 = vsel %vm1851, %v1467, %v1589
        %v1858 = vsel %vm1851, %v1469, %v1591
        %v1859 = vsel %vm1851, %v1471, %v1593
        %v1860 = vsel %vm1851, %v1477, %v1595
        %v1861 = vsel %vm1851, %v1479, %v1597
        %v1862 = vsel %vm1851, %v1481, %v1599
        %v1863 = vsel %vm1851, %v1483, %v1601
        %v1864 = vsel %vm1851, %v1485, %v1603
        %v1865 = vsel %vm1851, %v1487, %v1605
        %v1866 = vsel %vm1851, %v1489, %v1607
        %v1867 = vsel %vm1851, %v1491, %v1609
        %v1868 = vsel %vm1851, %v1629, %v1694
        %v1869 = vsel %vm1851, %v1632, %v1696
        %v1870 = vsel %vm1851, %v1635, %v1698
        %v1871 = vsel %vm1851, %v1638, %v1700
        %v1872 = vsel %vm1851, %v1641, %v1702
        %v1873 = vsel %vm1851, %v1644, %v1704
        %v1874 = vsel %vm1851, %v1647, %v1706
        %v1875 = vsel %vm1851, %v1650, %v1708
        %v1876 = vsel %vm1851, %v1653, %v1710
        %v1877 = vsel %vm1851, %v1656, %v1712
        %v1878 = vsel %vm1851, %v1659, %v1714
        %v1879 = vsel %vm1851, %v1662, %v1716
        %v1880 = vsel %vm1851, %v1665, %v1718
        %v1881 = vsel %vm1851, %v1668, %v1720
        %v1882 = vsel %vm1851, %v1671, %v1722
        %v1883 = vsel %vm1851, %v1674, %v1724
        %v1884 = vsel %vm1851, %v1535, %v1772
        %v1885 = vsel %vm1851, %v1538, %v1774
        %v1886 = vsel %vm1851, %v1541, %v1776
        %v1887 = vsel %vm1851, %v1544, %v1778
        %v1888 = vsel %vm1851, %v1547, %v1780
        %v1889 = vsel %vm1851, %v1550, %v1782
        %v1890 = vsel %vm1851, %v1553, %v1784
        %v1891 = vsel %vm1851, %v1745, %v1786
        %v1892 = vsel %vm1851, %v1559, %v1788
        %v1893 = vsel %vm1851, %v1562, %v1790
        %v1894 = vsel %vm1851, %v1565, %v1792
        %v1895 = vsel %vm1851, %v1568, %v1794
        %v1896 = vsel %vm1851, %v1571, %v1796
        %v1897 = vsel %vm1851, %v1574, %v1798
        %v1898 = vsel %vm1851, %v1577, %v1800
        %v1899 = vsel %vm1851, %v1748, %v1802
        %v1900 = vsel %vm1851, %v1473, %v1830
        %v1901 = vsel %vm1851, %v1475, %v1832
        %v1902 = vsel %vm1851, %v1493, %v1834
        %v1903 = vsel %vm1851, %v1495, %v1836
        %v1904 = vpack.c.bf16 %v1853, %v1852
        %v1905 = vpack.c.bf16 %v1869, %v1868
        %v1906 = vpack.c.bf16 %v1885, %v1884
        %v1907 = vpack.c.bf16 %v1855, %v1854
        %v1908 = vpack.c.bf16 %v1638, %v1635
        %v1909 = vpack.c.bf16 %v1871, %v1870
        %v1910 = vpack.c.bf16 %v1887, %v1886
        %v1911 = vpack.c.bf16 %v1857, %v1856
        %v1912 = vpack.c.bf16 %v1644, %v1641
        %v1913 = vpack.c.bf16 %v1873, %v1872
        %v1914 = vpack.c.bf16 %v1889, %v1888
        %v1915 = vpack.c.bf16 %v1859, %v1858
        %v1916 = vpack.c.bf16 %v1650, %v1647
        %v1917 = vpack.c.bf16 %v1875, %v1874
        %v1918 = vpack.c.bf16 %v1891, %v1890
        %v1919 = vpack.c.bf16 %v1901, %v1900
        %v1920 = vpack.c.bf16 %v1843, %v1767
        %v1921 = vpack.c.bf16 %v1861, %v1860
        %v1922 = vpack.c.bf16 %v1877, %v1876
        %v1923 = vpack.c.bf16 %v1893, %v1892
        %v1924 = vpack.c.bf16 %v1863, %v1862
        %v1925 = vpack.c.bf16 %v1662, %v1659
        %v1926 = vpack.c.bf16 %v1879, %v1878
        %v1927 = vpack.c.bf16 %v1895, %v1894
        %v1928 = vpack.c.bf16 %v1865, %v1864
        %v1929 = vpack.c.bf16 %v1668, %v1665
        %v1930 = vpack.c.bf16 %v1881, %v1880
        %v1931 = vpack.c.bf16 %v1897, %v1896
        %v1932 = vpack.c.bf16 %v1867, %v1866
        %v1933 = vpack.c.bf16 %v1674, %v1671
        %v1934 = vpack.c.bf16 %v1883, %v1882
        %v1935 = vpack.c.bf16 %v1899, %v1898
        %v1936 = vpack.c.bf16 %v1903, %v1902
        %v1937 = vpack.c.bf16 %v1846, %v1770
        %v1938 = vlaneseq
        %v1939 = vshrl.u32 %v1938, 7
        %v1940 = vsub.s32 0, %v1939
        %v1941 = vrot.slane %v318, %v1940
        %v2014 = vunpack.c.l.b16 %v174
        %v2015 = vunpack.c.l.b16 %v175
        %v2016 = vunpack.c.l.b16 %v176
        %v2017 = vunpack.c.l.b16 %v177
        %v2018 = vunpack.c.l.b16 %v178
        %v2019 = vunpack.c.l.b16 %v179
        %v2020 = vunpack.c.l.b16 %v180
        %v2021 = vunpack.c.l.b16 %v181
        %v2022 = vunpack.c.l.b16 %v182
        %v2023 = vunpack.c.l.b16 %v183
        %v2024 = vunpack.c.l.b16 %v184
        %v2025 = vunpack.c.l.b16 %v185
        %v2026 = vunpack.c.l.b16 %v186
        %v2027 = vunpack.c.l.b16 %v187
        %v2028 = vunpack.c.l.b16 %v188
        %v2029 = vunpack.c.l.b16 %v189
        %v2030 = vunpack.c.l.b16 %v190
        %v2031 = vunpack.c.l.b16 %v191
        %v2032 = vunpack.c.l.b16 %v192
        %v2033 = vunpack.c.l.b16 %v193
        %v2034 = vunpack.c.l.b16 %v194
        %v2035 = vunpack.c.l.b16 %v195
        %v2036 = vunpack.c.l.b16 %v196
        %v2037 = vunpack.c.l.b16 %v197
        %v2038 = vunpack.c.l.b16 %v198
        %v2039 = vunpack.c.l.b16 %v199
        %v2040 = vunpack.c.l.b16 %v200
        %v2041 = vunpack.c.l.b16 %v201
        %v2042 = vunpack.c.l.b16 %v202
        %v2043 = vunpack.c.l.b16 %v203
        %v2044 = vunpack.c.l.b16 %v204
        %v2045 = vunpack.c.l.b16 %v205
        %v2046 = vunpack.c.l.b16 %v206
        %v2047 = vunpack.c.l.b16 %v207
        %v2048 = vunpack.c.l.b16 %v208
        %v2049 = vunpack.c.l.b16 %v209
        %v2050 = vunpack.c.l.b16 %v210
        %v2051 = vunpack.c.l.b16 %v211
        %v2052 = vunpack.c.l.b16 %v212
        %v2053 = vunpack.c.l.b16 %v213
        %v2054 = vunpack.c.l.b16 %v214
        %v2055 = vunpack.c.l.b16 %v215
        %v2056 = vunpack.c.l.b16 %v216
        %v2057 = vunpack.c.l.b16 %v217
        %v2058 = vunpack.c.l.b16 %v218
        %v2059 = vunpack.c.l.b16 %v219
        %v2060 = vunpack.c.l.b16 %v220
        %v2061 = vunpack.c.l.b16 %v221
        %v2062 = vunpack.c.l.b16 %v222
        %v2063 = vunpack.c.l.b16 %v223
        %v2064 = vunpack.c.l.b16 %v224
        %v2065 = vunpack.c.l.b16 %v225
        %v2066 = vunpack.c.l.b16 %v226
        %v2067 = vunpack.c.l.b16 %v227
        %v2068 = vunpack.c.l.b16 %v228
        %v2069 = vunpack.c.l.b16 %v229
        %v2070 = vunpack.c.l.b16 %v230
        %v2071 = vunpack.c.l.b16 %v231
        %v2072 = vunpack.c.l.b16 %v232
        %v2073 = vunpack.c.l.b16 %v233
        %v2074 = vunpack.c.l.b16 %v234
        %v2075 = vunpack.c.l.b16 %v235
        %v2076 = vunpack.c.l.b16 %v236
        %v2077 = vunpack.c.l.b16 %v237
        %v2078 = vunpack.c.l.b16 %v238
        %v2079 = vunpack.c.l.b16 %v239
        %v2080 = vunpack.c.l.b16 %v240
        %v2081 = vunpack.c.l.b16 %v241
        %v2082 = vunpack.c.l.b16 %v242
        %v2083 = vunpack.c.l.b16 %v243
        %v2084 = vunpack.c.l.b16 %v244
        %v2085 = vunpack.c.l.b16 %v245
        %v2086 = vpack.c.b16 %v2015, %v2014
        %v2087 = vpack.c.b16 %v2017, %v2016
        %v2088 = vpack.c.b16 %v2019, %v2018
        %v2089 = vpack.c.b16 %v2021, %v2020
        %v2090 = vpack.c.b16 %v2023, %v2022
        %v2091 = vpack.c.b16 %v2025, %v2024
        %v2092 = vpack.c.b16 %v2027, %v2026
        %v2093 = vpack.c.b16 %v2029, %v2028
        %v2094 = vpack.c.b16 %v2031, %v2030
        %v2095 = vpack.c.b16 %v2033, %v2032
        %v2096 = vpack.c.b16 %v2035, %v2034
        %v2097 = vpack.c.b16 %v2037, %v2036
        %v2098 = vpack.c.b16 %v2039, %v2038
        %v2099 = vpack.c.b16 %v2041, %v2040
        %v2100 = vpack.c.b16 %v2043, %v2042
        %v2101 = vpack.c.b16 %v2045, %v2044
        %v2102 = vpack.c.b16 %v2047, %v2046
        %v2103 = vpack.c.b16 %v2049, %v2048
        %v2104 = vpack.c.b16 %v2051, %v2050
        %v2105 = vpack.c.b16 %v2053, %v2052
        %v2106 = vpack.c.b16 %v2055, %v2054
        %v2107 = vpack.c.b16 %v2057, %v2056
        %v2108 = vpack.c.b16 %v2059, %v2058
        %v2109 = vpack.c.b16 %v2061, %v2060
        %v2110 = vpack.c.b16 %v2063, %v2062
        %v2111 = vpack.c.b16 %v2065, %v2064
        %v2112 = vpack.c.b16 %v2067, %v2066
        %v2113 = vpack.c.b16 %v2069, %v2068
        %v2114 = vpack.c.b16 %v2071, %v2070
        %v2115 = vpack.c.b16 %v2073, %v2072
        %v2116 = vpack.c.b16 %v2075, %v2074
        %v2117 = vpack.c.b16 %v2077, %v2076
        %v2118 = vpack.c.b16 %v2079, %v2078
        %v2119 = vpack.c.b16 %v2081, %v2080
        %v2120 = vpack.c.b16 %v2083, %v2082
        %v2121 = vpack.c.b16 %v2085, %v2084
        %v2159 = vsel %vm1851, %v1908, 0
        %v2162 = vsel %vm1851, %v1912, 0
        %v2165 = vsel %vm1851, %v1916, 0
        %v2168 = vsel %vm1851, %v1920, 0
        %v2171 = vsel %vm1851, %v1925, 0
        %v2174 = vsel %vm1851, %v1929, 0
        %v2177 = vsel %vm1851, %v1933, 0
        %v2180 = vsel %vm1851, %v1937, 0
        %2182 = vmatprep.subr.bf16.mxu0 0
        %2183 = vmatpush1.bf16.msra.mxu0 %v2093
        %2184 = vmatprep.subr.bf16.mxu0 0
        %2185 = vmatpush1.bf16.msra.mxu0 %v2092
        %2186 = vmatprep.subr.bf16.mxu0 0
        %2187 = vmatpush1.bf16.msra.mxu0 %v2091
        %2188 = vmatprep.subr.bf16.mxu0 0
        %2189 = vmatpush1.bf16.msra.mxu0 %v2090
        %2190 = vmatprep.subr.bf16.mxu0 0
        %2191 = vmatpush1.bf16.msra.mxu0 %v2089
        %2192 = vmatprep.subr.bf16.mxu0 0
        %2193 = vmatpush1.bf16.msra.mxu0 %v2088
        %2194 = vmatprep.subr.bf16.mxu0 0
        %2195 = vmatpush1.bf16.msra.mxu0 %v2087
        %2196 = vmatprep.subr.bf16.mxu0 0
        %2197 = vmatpush1.bf16.msra.mxu0 %v2086
        %2198 = vmatprep.subr.bf16.mxu0 0
        %2199 = vmatpush2.bf16.msra.mxu0 %v2101
        %2200 = vmatprep.subr.bf16.mxu0 0
        %2201 = vmatpush2.bf16.msra.mxu0 %v2100
        %2202 = vmatprep.subr.bf16.mxu0 0
        %2203 = vmatpush2.bf16.msra.mxu0 %v2099
        %2204 = vmatprep.subr.bf16.mxu0 0
        %2205 = vmatpush2.bf16.msra.mxu0 %v2098
        %2206 = vmatprep.subr.bf16.mxu0 0
        %2207 = vmatpush2.bf16.msra.mxu0 %v2097
        %2208 = vmatprep.subr.bf16.mxu0 0
        %2209 = vmatpush2.bf16.msra.mxu0 %v2096
        %2210 = vmatprep.subr.bf16.mxu0 0
        %2211 = vmatpush2.bf16.msra.mxu0 %v2095
        %2212 = vmatprep.subr.bf16.mxu0 0
        %2213 = vmatpush2.bf16.msra.mxu0 %v2094
        %2214 = vmatprep.mubr.bf16.mxu0 %v1905
        %2215 = vmatmul.mubr.bf16.gmra.mxu0 %v1904
        %v2216 = vpop.f32.mrf.mxu0
        %v2217 = vadd.f32 %v1941, %v2216
        %v2218 = vpop.f32.mrf.mxu0
        %v2219 = vpop.f32.mrf.mxu0
        %v2220 = vadd.f32 %v1941, %v2219
        %v2221 = vpop.f32.mrf.mxu0
        %2222 = vmatprep.mubr.bf16.mxu0 %v1909
        %2223 = vmatmul.mubr.bf16.gmra.mxu0 %v1907
        %v2224 = vpop.f32.mrf.mxu0
        %v2225 = vadd.f32 %v1941, %v2224
        %v2226 = vpop.f32.mrf.mxu0
        %v2227 = vpop.f32.mrf.mxu0
        %v2228 = vadd.f32 %v1941, %v2227
        %v2229 = vpop.f32.mrf.mxu0
        %2230 = vmatprep.mubr.bf16.mxu0 %v1913
        %2231 = vmatmul.mubr.bf16.gmra.mxu0 %v1911
        %v2232 = vpop.f32.mrf.mxu0
        %v2233 = vadd.f32 %v1941, %v2232
        %v2234 = vpop.f32.mrf.mxu0
        %v2235 = vpop.f32.mrf.mxu0
        %v2236 = vadd.f32 %v1941, %v2235
        %v2237 = vpop.f32.mrf.mxu0
        %2238 = vmatprep.mubr.bf16.mxu0 %v1917
        %2239 = vmatmul.mubr.bf16.gmra.mxu0 %v1915
        %v2240 = vpop.f32.mrf.mxu0
        %v2241 = vadd.f32 %v1941, %v2240
        %v2242 = vpop.f32.mrf.mxu0
        %v2243 = vpop.f32.mrf.mxu0
        %v2244 = vadd.f32 %v1941, %v2243
        %v2245 = vpop.f32.mrf.mxu0
        %2246 = vmatprep.mubr.bf16.mxu0 %v1922
        %2247 = vmatmul.mubr.bf16.gmra.mxu0 %v1921
        %v2248 = vpop.f32.mrf.mxu0
        %v2249 = vadd.f32 %v1941, %v2248
        %v2250 = vpop.f32.mrf.mxu0
        %v2251 = vpop.f32.mrf.mxu0
        %v2252 = vadd.f32 %v1941, %v2251
        %v2253 = vpop.f32.mrf.mxu0
        %2254 = vmatprep.mubr.bf16.mxu0 %v1926
        %2255 = vmatmul.mubr.bf16.gmra.mxu0 %v1924
        %v2256 = vpop.f32.mrf.mxu0
        %v2257 = vadd.f32 %v1941, %v2256
        %v2258 = vpop.f32.mrf.mxu0
        %v2259 = vpop.f32.mrf.mxu0
        %v2260 = vadd.f32 %v1941, %v2259
        %v2261 = vpop.f32.mrf.mxu0
        %2262 = vmatprep.mubr.bf16.mxu0 %v1930
        %2263 = vmatmul.mubr.bf16.gmra.mxu0 %v1928
        %v2264 = vpop.f32.mrf.mxu0
        %v2265 = vadd.f32 %v1941, %v2264
        %v2266 = vpop.f32.mrf.mxu0
        %v2267 = vpop.f32.mrf.mxu0
        %v2268 = vadd.f32 %v1941, %v2267
        %v2269 = vpop.f32.mrf.mxu0
        %2270 = vmatprep.mubr.bf16.mxu0 %v1934
        %2271 = vmatmul.mubr.bf16.gmra.mxu0 %v1932
        %v2272 = vpop.f32.mrf.mxu0
        %v2273 = vadd.f32 %v1941, %v2272
        %v2274 = vpop.f32.mrf.mxu0
        %v2275 = vpop.f32.mrf.mxu0
        %v2276 = vadd.f32 %v1941, %v2275
        %v2277 = vpop.f32.mrf.mxu0
        %2278 = vdwg.mxu0
        %2279 = vmatprep.subr.bf16.mxu0 0
        %2280 = vmatpush1.bf16.msra.mxu0 %v2109
        %2281 = vmatprep.subr.bf16.mxu0 0
        %2282 = vmatpush1.bf16.msra.mxu0 %v2108
        %2283 = vmatprep.subr.bf16.mxu0 0
        %2284 = vmatpush1.bf16.msra.mxu0 %v2107
        %2285 = vmatprep.subr.bf16.mxu0 0
        %2286 = vmatpush1.bf16.msra.mxu0 %v2106
        %2287 = vmatprep.subr.bf16.mxu0 0
        %2288 = vmatpush1.bf16.msra.mxu0 %v2105
        %2289 = vmatprep.subr.bf16.mxu0 0
        %2290 = vmatpush1.bf16.msra.mxu0 %v2104
        %2291 = vmatprep.subr.bf16.mxu0 0
        %2292 = vmatpush1.bf16.msra.mxu0 %v2103
        %2293 = vmatprep.subr.bf16.mxu0 0
        %2294 = vmatpush1.bf16.msra.mxu0 %v2102
        %2295 = vmatprep.subr.bf16.mxu0 0
        %2296 = vmatpush2.bf16.msra.mxu0 %v2117
        %2297 = vmatprep.subr.bf16.mxu0 0
        %2298 = vmatpush2.bf16.msra.mxu0 %v2116
        %2299 = vmatprep.subr.bf16.mxu0 0
        %2300 = vmatpush2.bf16.msra.mxu0 %v2115
        %2301 = vmatprep.subr.bf16.mxu0 0
        %2302 = vmatpush2.bf16.msra.mxu0 %v2114
        %2303 = vmatprep.subr.bf16.mxu0 0
        %2304 = vmatpush2.bf16.msra.mxu0 %v2113
        %2305 = vmatprep.subr.bf16.mxu0 0
        %2306 = vmatpush2.bf16.msra.mxu0 %v2112
        %2307 = vmatprep.subr.bf16.mxu0 0
        %2308 = vmatpush2.bf16.msra.mxu0 %v2111
        %2309 = vmatprep.subr.bf16.mxu0 0
        %2310 = vmatpush2.bf16.msra.mxu0 %v2110
        %2311 = vmatprep.mubr.bf16.mxu0 %v1907
        %2312 = vmatmul.mubr.bf16.gmra.mxu0 %v1906
        %v2313 = vpop.f32.mrf.mxu0
        %v2314 = vadd.f32 %v2217, %v2313
        %v2315 = vpop.f32.mrf.mxu0
        %v2316 = vpop.f32.mrf.mxu0
        %v2317 = vadd.f32 %v2220, %v2316
        %v2318 = vpop.f32.mrf.mxu0
        %2319 = vmatprep.mubr.bf16.mxu0 %v1911
        %2320 = vmatmul.mubr.bf16.gmra.mxu0 %v1910
        %v2321 = vpop.f32.mrf.mxu0
        %v2322 = vadd.f32 %v2225, %v2321
        %v2323 = vpop.f32.mrf.mxu0
        %v2324 = vpop.f32.mrf.mxu0
        %v2325 = vadd.f32 %v2228, %v2324
        %v2326 = vpop.f32.mrf.mxu0
        %2327 = vmatprep.mubr.bf16.mxu0 %v1915
        %2328 = vmatmul.mubr.bf16.gmra.mxu0 %v1914
        %v2329 = vpop.f32.mrf.mxu0
        %v2330 = vadd.f32 %v2233, %v2329
        %v2331 = vpop.f32.mrf.mxu0
        %v2332 = vpop.f32.mrf.mxu0
        %v2333 = vadd.f32 %v2236, %v2332
        %v2334 = vpop.f32.mrf.mxu0
        %2335 = vmatprep.mubr.bf16.mxu0 %v1919
        %2336 = vmatmul.mubr.bf16.gmra.mxu0 %v1918
        %v2337 = vpop.f32.mrf.mxu0
        %v2338 = vadd.f32 %v2241, %v2337
        %v2339 = vpop.f32.mrf.mxu0
        %v2340 = vpop.f32.mrf.mxu0
        %v2341 = vadd.f32 %v2244, %v2340
        %v2342 = vpop.f32.mrf.mxu0
        %2343 = vmatprep.mubr.bf16.mxu0 %v1924
        %2344 = vmatmul.mubr.bf16.gmra.mxu0 %v1923
        %v2345 = vpop.f32.mrf.mxu0
        %v2346 = vadd.f32 %v2249, %v2345
        %v2347 = vpop.f32.mrf.mxu0
        %v2348 = vpop.f32.mrf.mxu0
        %v2349 = vadd.f32 %v2252, %v2348
        %v2350 = vpop.f32.mrf.mxu0
        %2351 = vmatprep.mubr.bf16.mxu0 %v1928
        %2352 = vmatmul.mubr.bf16.gmra.mxu0 %v1927
        %v2353 = vpop.f32.mrf.mxu0
        %v2354 = vadd.f32 %v2257, %v2353
        %v2355 = vpop.f32.mrf.mxu0
        %v2356 = vpop.f32.mrf.mxu0
        %v2357 = vadd.f32 %v2260, %v2356
        %v2358 = vpop.f32.mrf.mxu0
        %2359 = vmatprep.mubr.bf16.mxu0 %v1932
        %2360 = vmatmul.mubr.bf16.gmra.mxu0 %v1931
        %v2361 = vpop.f32.mrf.mxu0
        %v2362 = vadd.f32 %v2265, %v2361
        %v2363 = vpop.f32.mrf.mxu0
        %v2364 = vpop.f32.mrf.mxu0
        %v2365 = vadd.f32 %v2268, %v2364
        %v2366 = vpop.f32.mrf.mxu0
        %2367 = vmatprep.mubr.bf16.mxu0 %v1936
        %2368 = vmatmul.mubr.bf16.gmra.mxu0 %v1935
        %v2369 = vpop.f32.mrf.mxu0
        %v2370 = vadd.f32 %v2273, %v2369
        %v2371 = vpop.f32.mrf.mxu0
        %v2372 = vpop.f32.mrf.mxu0
        %v2373 = vadd.f32 %v2276, %v2372
        %v2374 = vpop.f32.mrf.mxu0
        %2375 = vdwg.mxu0
        %2376 = vmatprep.subr.bf16.mxu0 0
        %2377 = vmatpush1.bf16.msra.mxu0 0
        %2378 = vmatprep.subr.bf16.mxu0 0
        %2379 = vmatpush1.bf16.msra.mxu0 0
        %2380 = vmatprep.subr.bf16.mxu0 0
        %2381 = vmatpush1.bf16.msra.mxu0 0
        %2382 = vmatprep.subr.bf16.mxu0 0
        %2383 = vmatpush1.bf16.msra.mxu0 0
        %2384 = vmatprep.subr.bf16.mxu0 0
        %2385 = vmatpush1.bf16.msra.mxu0 %v2121
        %2386 = vmatprep.subr.bf16.mxu0 0
        %2387 = vmatpush1.bf16.msra.mxu0 %v2120
        %2388 = vmatprep.subr.bf16.mxu0 0
        %2389 = vmatpush1.bf16.msra.mxu0 %v2119
        %2390 = vmatprep.subr.bf16.mxu0 0
        %2391 = vmatpush1.bf16.msra.mxu0 %v2118
        %2392 = vmatprep.subr.bf16.mxu0 0
        %2393 = vmatpush2.bf16.msra.mxu0 0
        %2394 = vmatprep.subr.bf16.mxu0 0
        %2395 = vmatpush2.bf16.msra.mxu0 0
        %2396 = vmatprep.subr.bf16.mxu0 0
        %2397 = vmatpush2.bf16.msra.mxu0 0
        %2398 = vmatprep.subr.bf16.mxu0 0
        %2399 = vmatpush2.bf16.msra.mxu0 0
        %2400 = vmatprep.subr.bf16.mxu0 0
        %2401 = vmatpush2.bf16.msra.mxu0 0
        %2402 = vmatprep.subr.bf16.mxu0 0
        %2403 = vmatpush2.bf16.msra.mxu0 0
        %2404 = vmatprep.subr.bf16.mxu0 0
        %2405 = vmatpush2.bf16.msra.mxu0 0
        %2406 = vmatprep.subr.bf16.mxu0 0
        %2407 = vmatpush2.bf16.msra.mxu0 0
        %2408 = vmatprep.mubr.bf16.mxu0 0
        %2409 = vmatmul.mubr.bf16.gmra.mxu0 %v2159
        %v2410 = vpop.f32.mrf.mxu0
        %v2411 = vadd.f32 %v2314, %v2410
        %v2412 = vpop.f32.mrf.mxu0
        %v2413 = vpop.f32.mrf.mxu0
        %v2414 = vadd.f32 %v2317, %v2413
        %v2415 = vpop.f32.mrf.mxu0
        %2416 = vmatprep.mubr.bf16.mxu0 0
        %2417 = vmatmul.mubr.bf16.gmra.mxu0 %v2162
        %v2418 = vpop.f32.mrf.mxu0
        %v2419 = vadd.f32 %v2322, %v2418
        %v2420 = vpop.f32.mrf.mxu0
        %v2421 = vpop.f32.mrf.mxu0
        %v2422 = vadd.f32 %v2325, %v2421
        %v2423 = vpop.f32.mrf.mxu0
        %2424 = vmatprep.mubr.bf16.mxu0 0
        %2425 = vmatmul.mubr.bf16.gmra.mxu0 %v2165
        %v2426 = vpop.f32.mrf.mxu0
        %v2427 = vadd.f32 %v2330, %v2426
        %v2428 = vpop.f32.mrf.mxu0
        %v2429 = vpop.f32.mrf.mxu0
        %v2430 = vadd.f32 %v2333, %v2429
        %v2431 = vpop.f32.mrf.mxu0
        %2432 = vmatprep.mubr.bf16.mxu0 0
        %2433 = vmatmul.mubr.bf16.gmra.mxu0 %v2168
        %v2434 = vpop.f32.mrf.mxu0
        %v2435 = vadd.f32 %v2338, %v2434
        %v2436 = vpop.f32.mrf.mxu0
        %v2437 = vpop.f32.mrf.mxu0
        %v2438 = vadd.f32 %v2341, %v2437
        %v2439 = vpop.f32.mrf.mxu0
        %2440 = vmatprep.mubr.bf16.mxu0 0
        %2441 = vmatmul.mubr.bf16.gmra.mxu0 %v2171
        %v2442 = vpop.f32.mrf.mxu0
        %v2443 = vadd.f32 %v2346, %v2442
        %v2444 = vpop.f32.mrf.mxu0
        %v2445 = vpop.f32.mrf.mxu0
        %v2446 = vadd.f32 %v2349, %v2445
        %v2447 = vpop.f32.mrf.mxu0
        %2448 = vmatprep.mubr.bf16.mxu0 0
        %2449 = vmatmul.mubr.bf16.gmra.mxu0 %v2174
        %v2450 = vpop.f32.mrf.mxu0
        %v2451 = vadd.f32 %v2354, %v2450
        %v2452 = vpop.f32.mrf.mxu0
        %v2453 = vpop.f32.mrf.mxu0
        %v2454 = vadd.f32 %v2357, %v2453
        %v2455 = vpop.f32.mrf.mxu0
        %2456 = vmatprep.mubr.bf16.mxu0 0
        %2457 = vmatmul.mubr.bf16.gmra.mxu0 %v2177
        %v2458 = vpop.f32.mrf.mxu0
        %v2459 = vadd.f32 %v2362, %v2458
        %v2460 = vpop.f32.mrf.mxu0
        %v2461 = vpop.f32.mrf.mxu0
        %v2462 = vadd.f32 %v2365, %v2461
        %v2463 = vpop.f32.mrf.mxu0
        %2464 = vmatprep.mubr.bf16.mxu0 0
        %2465 = vmatmul.mubr.bf16.gmra.mxu0 %v2180
        %v2466 = vpop.f32.mrf.mxu0
        %v2467 = vadd.f32 %v2370, %v2466
        %v2468 = vpop.f32.mrf.mxu0
        %v2469 = vpop.f32.mrf.mxu0
        %v2470 = vadd.f32 %v2373, %v2469
        %v2471 = vpop.f32.mrf.mxu0
        %2472 = vdwg.mxu0
        %v2473 = vmax.f32 %v2411, 0.0
        %v2474 = vmax.f32 %v2414, 0.0
        %v2475 = vmax.f32 %v2419, 0.0
        %v2476 = vmax.f32 %v2422, 0.0
        %v2477 = vmax.f32 %v2427, 0.0
        %v2478 = vmax.f32 %v2430, 0.0
        %v2479 = vmax.f32 %v2435, 0.0
        %v2480 = vmax.f32 %v2438, 0.0
        %v2481 = vmax.f32 %v2443, 0.0
        %v2482 = vmax.f32 %v2446, 0.0
        %v2483 = vmax.f32 %v2451, 0.0
        %v2484 = vmax.f32 %v2454, 0.0
        %v2485 = vmax.f32 %v2459, 0.0
        %v2486 = vmax.f32 %v2462, 0.0
        %v2487 = vmax.f32 %v2467, 0.0
        %v2488 = vmax.f32 %v2470, 0.0
        %s2489 = scalar_lea.vmem [#allocation3], 16
        %2490 = vst.msk [vmem:[%s2489 + $0x1] sm:$0xff] %vm1851, %v2473
        %2491 = vst.msk [vmem:[%s2489 + $0x11] sm:$0xff] %vm1851, %v2474
        %2492 = vst.msk [vmem:[%s2489 + $0x21] sm:$0xff] %vm1851, %v2475
        %2493 = vst.msk [vmem:[%s2489 + $0x31] sm:$0xff] %vm1851, %v2476
        %2494 = vst.msk [vmem:[%s2489 + $0x41] sm:$0xff] %vm1851, %v2477
        %2495 = vst.msk [vmem:[%s2489 + $0x51] sm:$0xff] %vm1851, %v2478
        %2496 = vst.msk [vmem:[%s2489 + $0x61] sm:$0xff] %vm1851, %v2479
        %2497 = vst.msk [vmem:[%s2489 + $0x71] sm:$0xff] %vm1851, %v2480
        %2498 = vst.msk [vmem:[%s2489 + $0xa1] sm:$0xff] %vm1851, %v2481
        %2499 = vst.msk [vmem:[%s2489 + $0xb1] sm:$0xff] %vm1851, %v2482
        %2500 = vst.msk [vmem:[%s2489 + $0xc1] sm:$0xff] %vm1851, %v2483
        %2501 = vst.msk [vmem:[%s2489 + $0xd1] sm:$0xff] %vm1851, %v2484
        %2502 = vst.msk [vmem:[%s2489 + $0xe1] sm:$0xff] %vm1851, %v2485
        %2503 = vst.msk [vmem:[%s2489 + $0xf1] sm:$0xff] %vm1851, %v2486
        %2504 = vst.msk [vmem:[%s2489 + $0x101] sm:$0xff] %vm1851, %v2487
        %2505 = vst.msk [vmem:[%s2489 + $0x111] sm:$0xff] %vm1851, %v2488
        %v2506 = vld [vmem:[#allocation3] sm:$0xff]
        %v2507 = vld [vmem:[#allocation3 + $0x8] sm:$0x3]
        %v2508 = vld [vmem:[#allocation3 + $0x10] sm:$0xff]
        %v2509 = vld [vmem:[#allocation3 + $0x18] sm:$0x3]
        %v2510 = vld [vmem:[#allocation3 + $0x20] sm:$0xff]
        %v2511 = vld [vmem:[#allocation3 + $0x28] sm:$0x3]
        %v2512 = vld [vmem:[#allocation3 + $0x30] sm:$0xff]
        %v2513 = vld [vmem:[#allocation3 + $0x38] sm:$0x3]
        %v2514 = vld [vmem:[#allocation3 + $0x40] sm:$0xff]
        %v2515 = vld [vmem:[#allocation3 + $0x48] sm:$0x3]
        %v2516 = vld [vmem:[#allocation3 + $0x50] sm:$0xff]
        %v2517 = vld [vmem:[#allocation3 + $0x58] sm:$0x3]
        %v2518 = vld [vmem:[#allocation3 + $0x60] sm:$0xff]
        %v2519 = vld [vmem:[#allocation3 + $0x68] sm:$0x3]
        %v2520 = vld [vmem:[#allocation3 + $0x70] sm:$0xff]
        %v2521 = vld [vmem:[#allocation3 + $0x78] sm:$0x3]
        %v2522 = vld [vmem:[#allocation3 + $0x80] sm:$0xff]
        %v2523 = vld [vmem:[#allocation3 + $0x88] sm:$0x3]
        %v2524 = vld [vmem:[#allocation3 + $0x90] sm:$0xff]
        %v2525 = vld [vmem:[#allocation3 + $0x98] sm:$0x3]
        %v2526 = vld [vmem:[#allocation3 + $0xa0] sm:$0xff]
        %v2527 = vld [vmem:[#allocation3 + $0xa8] sm:$0x3]
        %v2528 = vld [vmem:[#allocation3 + $0xb0] sm:$0xff]
        %v2529 = vld [vmem:[#allocation3 + $0xb8] sm:$0x3]
        %v2530 = vld [vmem:[#allocation3 + $0xc0] sm:$0xff]
        %v2531 = vld [vmem:[#allocation3 + $0xc8] sm:$0x3]
        %v2532 = vld [vmem:[#allocation3 + $0xd0] sm:$0xff]
        %v2533 = vld [vmem:[#allocation3 + $0xd8] sm:$0x3]
        %v2534 = vld [vmem:[#allocation3 + $0xe0] sm:$0xff]
        %v2535 = vld [vmem:[#allocation3 + $0xe8] sm:$0x3]
        %v2536 = vld [vmem:[#allocation3 + $0xf0] sm:$0xff]
        %v2537 = vld [vmem:[#allocation3 + $0xf8] sm:$0x3]
        %v2538 = vld [vmem:[#allocation3 + $0x100] sm:$0xff]
        %v2539 = vld [vmem:[#allocation3 + $0x108] sm:$0x3]
        %v2540 = vld [vmem:[#allocation3 + $0x110] sm:$0xff]
        %v2541 = vld [vmem:[#allocation3 + $0x118] sm:$0x3]
        %v2542 = vld [vmem:[#allocation3 + $0x120] sm:$0xff]
        %v2543 = vld [vmem:[#allocation3 + $0x128] sm:$0x3]
        %v2544 = vld [vmem:[#allocation3 + $0x130] sm:$0xff]
        %v2545 = vld [vmem:[#allocation3 + $0x138] sm:$0x3]
        %v2578 = vrot.slane %v2506, 1
        %v2579 = vrot.slane %v2507, 1
        %v2580 = vsel %vm1529, %v2578, %v2579
        %v2581 = vrot.slane %v2508, 1
        %v2582 = vrot.slane %v2509, 1
        %v2583 = vsel %vm1529, %v2581, %v2582
        %v2584 = vrot.slane %v2510, 1
        %v2585 = vrot.slane %v2511, 1
        %v2586 = vsel %vm1529, %v2584, %v2585
        %v2587 = vrot.slane %v2512, 1
        %v2588 = vrot.slane %v2513, 1
        %v2589 = vsel %vm1529, %v2587, %v2588
        %v2590 = vrot.slane %v2514, 1
        %v2591 = vrot.slane %v2515, 1
        %v2592 = vsel %vm1529, %v2590, %v2591
        %v2593 = vrot.slane %v2516, 1
        %v2594 = vrot.slane %v2517, 1
        %v2595 = vsel %vm1529, %v2593, %v2594
        %v2596 = vrot.slane %v2518, 1
        %v2597 = vrot.slane %v2519, 1
        %v2598 = vsel %vm1529, %v2596, %v2597
        %v2599 = vrot.slane %v2520, 1
        %v2600 = vrot.slane %v2521, 1
        %v2601 = vsel %vm1529, %v2599, %v2600
        %v2602 = vrot.slane %v2526, 1
        %v2603 = vrot.slane %v2527, 1
        %v2604 = vsel %vm1529, %v2602, %v2603
        %v2605 = vrot.slane %v2528, 1
        %v2606 = vrot.slane %v2529, 1
        %v2607 = vsel %vm1529, %v2605, %v2606
        %v2608 = vrot.slane %v2530, 1
        %v2609 = vrot.slane %v2531, 1
        %v2610 = vsel %vm1529, %v2608, %v2609
        %v2611 = vrot.slane %v2532, 1
        %v2612 = vrot.slane %v2533, 1
        %v2613 = vsel %vm1529, %v2611, %v2612
        %v2614 = vrot.slane %v2534, 1
        %v2615 = vrot.slane %v2535, 1
        %v2616 = vsel %vm1529, %v2614, %v2615
        %v2617 = vrot.slane %v2536, 1
        %v2618 = vrot.slane %v2537, 1
        %v2619 = vsel %vm1529, %v2617, %v2618
        %v2620 = vrot.slane %v2538, 1
        %v2621 = vrot.slane %v2539, 1
        %v2622 = vsel %vm1529, %v2620, %v2621
        %v2623 = vrot.slane %v2540, 1
        %v2624 = vrot.slane %v2541, 1
        %v2625 = vsel %vm1529, %v2623, %v2624
        %2626 = vrot.lane.b32.xlu0 %v2580, 64
        %v2627 = vpop.permute.xlu0 %2626
        %2628 = vrot.lane.b32.xlu0 %v2583, 64
        %v2629 = vpop.permute.xlu0 %2628
        %2630 = vrot.lane.b32.xlu0 %v2586, 64
        %v2631 = vpop.permute.xlu0 %2630
        %2632 = vrot.lane.b32.xlu0 %v2589, 64
        %v2633 = vpop.permute.xlu0 %2632
        %2634 = vrot.lane.b32.xlu0 %v2592, 64
        %v2635 = vpop.permute.xlu0 %2634
        %2636 = vrot.lane.b32.xlu0 %v2595, 64
        %v2637 = vpop.permute.xlu0 %2636
        %2638 = vrot.lane.b32.xlu0 %v2598, 64
        %v2639 = vpop.permute.xlu0 %2638
        %2640 = vrot.lane.b32.xlu0 %v2601, 64
        %v2641 = vpop.permute.xlu0 %2640
        %2642 = vrot.lane.b32.xlu0 %v2604, 64
        %v2643 = vpop.permute.xlu0 %2642
        %2644 = vrot.lane.b32.xlu0 %v2607, 64
        %v2645 = vpop.permute.xlu0 %2644
        %2646 = vrot.lane.b32.xlu0 %v2610, 64
        %v2647 = vpop.permute.xlu0 %2646
        %2648 = vrot.lane.b32.xlu0 %v2613, 64
        %v2649 = vpop.permute.xlu0 %2648
        %2650 = vrot.lane.b32.xlu0 %v2616, 64
        %v2651 = vpop.permute.xlu0 %2650
        %2652 = vrot.lane.b32.xlu0 %v2619, 64
        %v2653 = vpop.permute.xlu0 %2652
        %2654 = vrot.lane.b32.xlu0 %v2622, 64
        %v2655 = vpop.permute.xlu0 %2654
        %2656 = vrot.lane.b32.xlu0 %v2625, 64
        %v2657 = vpop.permute.xlu0 %2656
        %v2674 = vrot.slane %v2506, 2
        %v2675 = vrot.slane %v2507, 2
        %v2676 = vsel %vm1626, %v2674, %v2675
        %v2677 = vrot.slane %v2508, 2
        %v2678 = vrot.slane %v2509, 2
        %v2679 = vsel %vm1626, %v2677, %v2678
        %v2680 = vrot.slane %v2510, 2
        %v2681 = vrot.slane %v2511, 2
        %v2682 = vsel %vm1626, %v2680, %v2681
        %v2683 = vrot.slane %v2512, 2
        %v2684 = vrot.slane %v2513, 2
        %v2685 = vsel %vm1626, %v2683, %v2684
        %v2686 = vrot.slane %v2514, 2
        %v2687 = vrot.slane %v2515, 2
        %v2688 = vsel %vm1626, %v2686, %v2687
        %v2689 = vrot.slane %v2516, 2
        %v2690 = vrot.slane %v2517, 2
        %v2691 = vsel %vm1626, %v2689, %v2690
        %v2692 = vrot.slane %v2518, 2
        %v2693 = vrot.slane %v2519, 2
        %v2694 = vsel %vm1626, %v2692, %v2693
        %v2695 = vrot.slane %v2520, 2
        %v2696 = vrot.slane %v2521, 2
        %v2697 = vsel %vm1626, %v2695, %v2696
        %v2698 = vrot.slane %v2526, 2
        %v2699 = vrot.slane %v2527, 2
        %v2700 = vsel %vm1626, %v2698, %v2699
        %v2701 = vrot.slane %v2528, 2
        %v2702 = vrot.slane %v2529, 2
        %v2703 = vsel %vm1626, %v2701, %v2702
        %v2704 = vrot.slane %v2530, 2
        %v2705 = vrot.slane %v2531, 2
        %v2706 = vsel %vm1626, %v2704, %v2705
        %v2707 = vrot.slane %v2532, 2
        %v2708 = vrot.slane %v2533, 2
        %v2709 = vsel %vm1626, %v2707, %v2708
        %v2710 = vrot.slane %v2534, 2
        %v2711 = vrot.slane %v2535, 2
        %v2712 = vsel %vm1626, %v2710, %v2711
        %v2713 = vrot.slane %v2536, 2
        %v2714 = vrot.slane %v2537, 2
        %v2715 = vsel %vm1626, %v2713, %v2714
        %v2716 = vrot.slane %v2538, 2
        %v2717 = vrot.slane %v2539, 2
        %v2718 = vsel %vm1626, %v2716, %v2717
        %v2719 = vrot.slane %v2540, 2
        %v2720 = vrot.slane %v2541, 2
        %v2721 = vsel %vm1626, %v2719, %v2720
        %2740 = vrot.lane.b32.xlu0 %v2508, 64
        %v2741 = vpop.permute.xlu0 %2740
        %2742 = vrot.lane.b32.xlu0 %v2510, 64
        %v2743 = vpop.permute.xlu0 %2742
        %2744 = vrot.lane.b32.xlu0 %v2512, 64
        %v2745 = vpop.permute.xlu0 %2744
        %2746 = vrot.lane.b32.xlu0 %v2514, 64
        %v2747 = vpop.permute.xlu0 %2746
        %2748 = vrot.lane.b32.xlu0 %v2516, 64
        %v2749 = vpop.permute.xlu0 %2748
        %2750 = vrot.lane.b32.xlu0 %v2518, 64
        %v2751 = vpop.permute.xlu0 %2750
        %2752 = vrot.lane.b32.xlu0 %v2520, 64
        %v2753 = vpop.permute.xlu0 %2752
        %2754 = vrot.lane.b32.xlu0 %v2522, 64
        %v2755 = vpop.permute.xlu0 %2754
        %2756 = vrot.lane.b32.xlu0 %v2528, 64
        %v2757 = vpop.permute.xlu0 %2756
        %2758 = vrot.lane.b32.xlu0 %v2530, 64
        %v2759 = vpop.permute.xlu0 %2758
        %2760 = vrot.lane.b32.xlu0 %v2532, 64
        %v2761 = vpop.permute.xlu0 %2760
        %2762 = vrot.lane.b32.xlu0 %v2534, 64
        %v2763 = vpop.permute.xlu0 %2762
        %2764 = vrot.lane.b32.xlu0 %v2536, 64
        %v2765 = vpop.permute.xlu0 %2764
        %2766 = vrot.lane.b32.xlu0 %v2538, 64
        %v2767 = vpop.permute.xlu0 %2766
        %2768 = vrot.lane.b32.xlu0 %v2540, 64
        %v2769 = vpop.permute.xlu0 %2768
        %2770 = vrot.lane.b32.xlu0 %v2542, 64
        %v2771 = vpop.permute.xlu0 %2770
        %v2790 = vrot.slane %v2522, 1
        %v2791 = vrot.slane %v2523, 1
        %v2792 = vsel %vm1529, %v2790, %v2791
        %v2793 = vrot.slane %v2542, 1
        %v2794 = vrot.slane %v2543, 1
        %v2795 = vsel %vm1529, %v2793, %v2794
        %v2812 = vrot.slane %v2522, 2
        %v2813 = vrot.slane %v2523, 2
        %v2814 = vsel %vm1626, %v2812, %v2813
        %v2815 = vrot.slane %v2542, 2
        %v2816 = vrot.slane %v2543, 2
        %v2817 = vsel %vm1626, %v2815, %v2816
        %2818 = vrot.lane.b32.xlu0 %v2679, 64
        %v2819 = vpop.permute.xlu0 %2818
        %2820 = vrot.lane.b32.xlu0 %v2682, 64
        %v2821 = vpop.permute.xlu0 %2820
        %2822 = vrot.lane.b32.xlu0 %v2685, 64
        %v2823 = vpop.permute.xlu0 %2822
        %2824 = vrot.lane.b32.xlu0 %v2688, 64
        %v2825 = vpop.permute.xlu0 %2824
        %2826 = vrot.lane.b32.xlu0 %v2691, 64
        %v2827 = vpop.permute.xlu0 %2826
        %2828 = vrot.lane.b32.xlu0 %v2694, 64
        %v2829 = vpop.permute.xlu0 %2828
        %2830 = vrot.lane.b32.xlu0 %v2697, 64
        %v2831 = vpop.permute.xlu0 %2830
        %2832 = vrot.lane.b32.xlu0 %v2814, 64
        %v2833 = vpop.permute.xlu0 %2832
        %2834 = vrot.lane.b32.xlu0 %v2703, 64
        %v2835 = vpop.permute.xlu0 %2834
        %2836 = vrot.lane.b32.xlu0 %v2706, 64
        %v2837 = vpop.permute.xlu0 %2836
        %2838 = vrot.lane.b32.xlu0 %v2709, 64
        %v2839 = vpop.permute.xlu0 %2838
        %2840 = vrot.lane.b32.xlu0 %v2712, 64
        %v2841 = vpop.permute.xlu0 %2840
        %2842 = vrot.lane.b32.xlu0 %v2715, 64
        %v2843 = vpop.permute.xlu0 %2842
        %2844 = vrot.lane.b32.xlu0 %v2718, 64
        %v2845 = vpop.permute.xlu0 %2844
        %2846 = vrot.lane.b32.xlu0 %v2721, 64
        %v2847 = vpop.permute.xlu0 %2846
        %2848 = vrot.lane.b32.xlu0 %v2817, 64
        %v2849 = vpop.permute.xlu0 %2848
        %v2870 = vrot.slane %v2524, 1
        %v2871 = vrot.slane %v2525, 1
        %v2872 = vsel %vm1529, %v2870, %v2871
        %v2873 = vrot.slane %v2544, 1
        %v2874 = vrot.slane %v2545, 1
        %v2875 = vsel %vm1529, %v2873, %v2874
        %2876 = vrot.lane.b32.xlu0 %v2792, 64
        %v2877 = vpop.permute.xlu0 %2876
        %2878 = vrot.lane.b32.xlu0 %v2872, 64
        %v2879 = vpop.permute.xlu0 %2878
        %2880 = vrot.lane.b32.xlu0 %v2795, 64
        %v2881 = vpop.permute.xlu0 %2880
        %2882 = vrot.lane.b32.xlu0 %v2875, 64
        %v2883 = vpop.permute.xlu0 %2882
        %v2888 = vrot.slane %v2524, 2
        %v2889 = vrot.slane %v2525, 2
        %v2890 = vsel %vm1626, %v2888, %v2889
        %v2891 = vrot.slane %v2544, 2
        %v2892 = vrot.slane %v2545, 2
        %v2893 = vsel %vm1626, %v2891, %v2892
        %v2898 = vsel %vm1851, %v2506, %v2627
        %v2899 = vsel %vm1851, %v2508, %v2629
        %v2900 = vsel %vm1851, %v2510, %v2631
        %v2901 = vsel %vm1851, %v2512, %v2633
        %v2902 = vsel %vm1851, %v2514, %v2635
        %v2903 = vsel %vm1851, %v2516, %v2637
        %v2904 = vsel %vm1851, %v2518, %v2639
        %v2905 = vsel %vm1851, %v2520, %v2641
        %v2906 = vsel %vm1851, %v2526, %v2643
        %v2907 = vsel %vm1851, %v2528, %v2645
        %v2908 = vsel %vm1851, %v2530, %v2647
        %v2909 = vsel %vm1851, %v2532, %v2649
        %v2910 = vsel %vm1851, %v2534, %v2651
        %v2911 = vsel %vm1851, %v2536, %v2653
        %v2912 = vsel %vm1851, %v2538, %v2655
        %v2913 = vsel %vm1851, %v2540, %v2657
        %v2914 = vsel %vm1851, %v2676, %v2741
        %v2915 = vsel %vm1851, %v2679, %v2743
        %v2916 = vsel %vm1851, %v2682, %v2745
        %v2917 = vsel %vm1851, %v2685, %v2747
        %v2918 = vsel %vm1851, %v2688, %v2749
        %v2919 = vsel %vm1851, %v2691, %v2751
        %v2920 = vsel %vm1851, %v2694, %v2753
        %v2921 = vsel %vm1851, %v2697, %v2755
        %v2922 = vsel %vm1851, %v2700, %v2757
        %v2923 = vsel %vm1851, %v2703, %v2759
        %v2924 = vsel %vm1851, %v2706, %v2761
        %v2925 = vsel %vm1851, %v2709, %v2763
        %v2926 = vsel %vm1851, %v2712, %v2765
        %v2927 = vsel %vm1851, %v2715, %v2767
        %v2928 = vsel %vm1851, %v2718, %v2769
        %v2929 = vsel %vm1851, %v2721, %v2771
        %v2930 = vsel %vm1851, %v2583, %v2819
        %v2931 = vsel %vm1851, %v2586, %v2821
        %v2932 = vsel %vm1851, %v2589, %v2823
        %v2933 = vsel %vm1851, %v2592, %v2825
        %v2934 = vsel %vm1851, %v2595, %v2827
        %v2935 = vsel %vm1851, %v2598, %v2829
        %v2936 = vsel %vm1851, %v2601, %v2831
        %v2937 = vsel %vm1851, %v2792, %v2833
        %v2938 = vsel %vm1851, %v2607, %v2835
        %v2939 = vsel %vm1851, %v2610, %v2837
        %v2940 = vsel %vm1851, %v2613, %v2839
        %v2941 = vsel %vm1851, %v2616, %v2841
        %v2942 = vsel %vm1851, %v2619, %v2843
        %v2943 = vsel %vm1851, %v2622, %v2845
        %v2944 = vsel %vm1851, %v2625, %v2847
        %v2945 = vsel %vm1851, %v2795, %v2849
        %v2946 = vsel %vm1851, %v2522, %v2877
        %v2947 = vsel %vm1851, %v2524, %v2879
        %v2948 = vsel %vm1851, %v2542, %v2881
        %v2949 = vsel %vm1851, %v2544, %v2883
        %v2950 = vpack.c.bf16 %v2899, %v2898
        %v2951 = vpack.c.bf16 %v2915, %v2914
        %v2952 = vpack.c.bf16 %v2931, %v2930
        %v2953 = vpack.c.bf16 %v2901, %v2900
        %v2954 = vpack.c.bf16 %v2685, %v2682
        %v2955 = vpack.c.bf16 %v2917, %v2916
        %v2956 = vpack.c.bf16 %v2933, %v2932
        %v2957 = vpack.c.bf16 %v2903, %v2902
        %v2958 = vpack.c.bf16 %v2691, %v2688
        %v2959 = vpack.c.bf16 %v2919, %v2918
        %v2960 = vpack.c.bf16 %v2935, %v2934
        %v2961 = vpack.c.bf16 %v2905, %v2904
        %v2962 = vpack.c.bf16 %v2697, %v2694
        %v2963 = vpack.c.bf16 %v2921, %v2920
        %v2964 = vpack.c.bf16 %v2937, %v2936
        %v2965 = vpack.c.bf16 %v2947, %v2946
        %v2966 = vpack.c.bf16 %v2890, %v2814
        %v2967 = vpack.c.bf16 %v2907, %v2906
        %v2968 = vpack.c.bf16 %v2923, %v2922
        %v2969 = vpack.c.bf16 %v2939, %v2938
        %v2970 = vpack.c.bf16 %v2909, %v2908
        %v2971 = vpack.c.bf16 %v2709, %v2706
        %v2972 = vpack.c.bf16 %v2925, %v2924
        %v2973 = vpack.c.bf16 %v2941, %v2940
        %v2974 = vpack.c.bf16 %v2911, %v2910
        %v2975 = vpack.c.bf16 %v2715, %v2712
        %v2976 = vpack.c.bf16 %v2927, %v2926
        %v2977 = vpack.c.bf16 %v2943, %v2942
        %v2978 = vpack.c.bf16 %v2913, %v2912
        %v2979 = vpack.c.bf16 %v2721, %v2718
        %v2980 = vpack.c.bf16 %v2929, %v2928
        %v2981 = vpack.c.bf16 %v2945, %v2944
        %v2982 = vpack.c.bf16 %v2949, %v2948
        %v2983 = vpack.c.bf16 %v2893, %v2817
        %v2984 = vlaneseq
        %v2985 = vshrl.u32 %v2984, 7
        %v2986 = vsub.s32 1, %v2985
        %v2987 = vrot.slane %v318, %v2986
        %v3060 = vunpack.c.l.b16 %v246
        %v3061 = vunpack.c.l.b16 %v247
        %v3062 = vunpack.c.l.b16 %v248
        %v3063 = vunpack.c.l.b16 %v249
        %v3064 = vunpack.c.l.b16 %v250
        %v3065 = vunpack.c.l.b16 %v251
        %v3066 = vunpack.c.l.b16 %v252
        %v3067 = vunpack.c.l.b16 %v253
        %v3068 = vunpack.c.l.b16 %v254
        %v3069 = vunpack.c.l.b16 %v255
        %v3070 = vunpack.c.l.b16 %v256
        %v3071 = vunpack.c.l.b16 %v257
        %v3072 = vunpack.c.l.b16 %v258
        %v3073 = vunpack.c.l.b16 %v259
        %v3074 = vunpack.c.l.b16 %v260
        %v3075 = vunpack.c.l.b16 %v261
        %v3076 = vunpack.c.l.b16 %v262
        %v3077 = vunpack.c.l.b16 %v263
        %v3078 = vunpack.c.l.b16 %v264
        %v3079 = vunpack.c.l.b16 %v265
        %v3080 = vunpack.c.l.b16 %v266
        %v3081 = vunpack.c.l.b16 %v267
        %v3082 = vunpack.c.l.b16 %v268
        %v3083 = vunpack.c.l.b16 %v269
        %v3084 = vunpack.c.l.b16 %v270
        %v3085 = vunpack.c.l.b16 %v271
        %v3086 = vunpack.c.l.b16 %v272
        %v3087 = vunpack.c.l.b16 %v273
        %v3088 = vunpack.c.l.b16 %v274
        %v3089 = vunpack.c.l.b16 %v275
        %v3090 = vunpack.c.l.b16 %v276
        %v3091 = vunpack.c.l.b16 %v277
        %v3092 = vunpack.c.l.b16 %v278
        %v3093 = vunpack.c.l.b16 %v279
        %v3094 = vunpack.c.l.b16 %v280
        %v3095 = vunpack.c.l.b16 %v281
        %v3096 = vunpack.c.l.b16 %v282
        %v3097 = vunpack.c.l.b16 %v283
        %v3098 = vunpack.c.l.b16 %v284
        %v3099 = vunpack.c.l.b16 %v285
        %v3100 = vunpack.c.l.b16 %v286
        %v3101 = vunpack.c.l.b16 %v287
        %v3102 = vunpack.c.l.b16 %v288
        %v3103 = vunpack.c.l.b16 %v289
        %v3104 = vunpack.c.l.b16 %v290
        %v3105 = vunpack.c.l.b16 %v291
        %v3106 = vunpack.c.l.b16 %v292
        %v3107 = vunpack.c.l.b16 %v293
        %v3108 = vunpack.c.l.b16 %v294
        %v3109 = vunpack.c.l.b16 %v295
        %v3110 = vunpack.c.l.b16 %v296
        %v3111 = vunpack.c.l.b16 %v297
        %v3112 = vunpack.c.l.b16 %v298
        %v3113 = vunpack.c.l.b16 %v299
        %v3114 = vunpack.c.l.b16 %v300
        %v3115 = vunpack.c.l.b16 %v301
        %v3116 = vunpack.c.l.b16 %v302
        %v3117 = vunpack.c.l.b16 %v303
        %v3118 = vunpack.c.l.b16 %v304
        %v3119 = vunpack.c.l.b16 %v305
        %v3120 = vunpack.c.l.b16 %v306
        %v3121 = vunpack.c.l.b16 %v307
        %v3122 = vunpack.c.l.b16 %v308
        %v3123 = vunpack.c.l.b16 %v309
        %v3124 = vunpack.c.l.b16 %v310
        %v3125 = vunpack.c.l.b16 %v311
        %v3126 = vunpack.c.l.b16 %v312
        %v3127 = vunpack.c.l.b16 %v313
        %v3128 = vunpack.c.l.b16 %v314
        %v3129 = vunpack.c.l.b16 %v315
        %v3130 = vunpack.c.l.b16 %v316
        %v3131 = vunpack.c.l.b16 %v317
        %v3132 = vpack.c.b16 %v3061, %v3060
        %v3133 = vpack.c.b16 %v3063, %v3062
        %v3134 = vpack.c.b16 %v3065, %v3064
        %v3135 = vpack.c.b16 %v3067, %v3066
        %v3136 = vpack.c.b16 %v3069, %v3068
        %v3137 = vpack.c.b16 %v3071, %v3070
        %v3138 = vpack.c.b16 %v3073, %v3072
        %v3139 = vpack.c.b16 %v3075, %v3074
        %v3140 = vpack.c.b16 %v3077, %v3076
        %v3141 = vpack.c.b16 %v3079, %v3078
        %v3142 = vpack.c.b16 %v3081, %v3080
        %v3143 = vpack.c.b16 %v3083, %v3082
        %v3144 = vpack.c.b16 %v3085, %v3084
        %v3145 = vpack.c.b16 %v3087, %v3086
        %v3146 = vpack.c.b16 %v3089, %v3088
        %v3147 = vpack.c.b16 %v3091, %v3090
        %v3148 = vpack.c.b16 %v3093, %v3092
        %v3149 = vpack.c.b16 %v3095, %v3094
        %v3150 = vpack.c.b16 %v3097, %v3096
        %v3151 = vpack.c.b16 %v3099, %v3098
        %v3152 = vpack.c.b16 %v3101, %v3100
        %v3153 = vpack.c.b16 %v3103, %v3102
        %v3154 = vpack.c.b16 %v3105, %v3104
        %v3155 = vpack.c.b16 %v3107, %v3106
        %v3156 = vpack.c.b16 %v3109, %v3108
        %v3157 = vpack.c.b16 %v3111, %v3110
        %v3158 = vpack.c.b16 %v3113, %v3112
        %v3159 = vpack.c.b16 %v3115, %v3114
        %v3160 = vpack.c.b16 %v3117, %v3116
        %v3161 = vpack.c.b16 %v3119, %v3118
        %v3162 = vpack.c.b16 %v3121, %v3120
        %v3163 = vpack.c.b16 %v3123, %v3122
        %v3164 = vpack.c.b16 %v3125, %v3124
        %v3165 = vpack.c.b16 %v3127, %v3126
        %v3166 = vpack.c.b16 %v3129, %v3128
        %v3167 = vpack.c.b16 %v3131, %v3130
        %v3205 = vsel %vm1851, %v2954, 0
        %v3208 = vsel %vm1851, %v2958, 0
        %v3211 = vsel %vm1851, %v2962, 0
        %v3214 = vsel %vm1851, %v2966, 0
        %v3217 = vsel %vm1851, %v2971, 0
        %v3220 = vsel %vm1851, %v2975, 0
        %v3223 = vsel %vm1851, %v2979, 0
        %v3226 = vsel %vm1851, %v2983, 0
        %3228 = vmatprep.subr.bf16.mxu0 0
        %3229 = vmatpush1.bf16.msra.mxu0 %v3139
        %3230 = vmatprep.subr.bf16.mxu0 0
        %3231 = vmatpush1.bf16.msra.mxu0 %v3138
        %3232 = vmatprep.subr.bf16.mxu0 0
        %3233 = vmatpush1.bf16.msra.mxu0 %v3137
        %3234 = vmatprep.subr.bf16.mxu0 0
        %3235 = vmatpush1.bf16.msra.mxu0 %v3136
        %3236 = vmatprep.subr.bf16.mxu0 0
        %3237 = vmatpush1.bf16.msra.mxu0 %v3135
        %3238 = vmatprep.subr.bf16.mxu0 0
        %3239 = vmatpush1.bf16.msra.mxu0 %v3134
        %3240 = vmatprep.subr.bf16.mxu0 0
        %3241 = vmatpush1.bf16.msra.mxu0 %v3133
        %3242 = vmatprep.subr.bf16.mxu0 0
        %3243 = vmatpush1.bf16.msra.mxu0 %v3132
        %3244 = vmatprep.subr.bf16.mxu0 0
        %3245 = vmatpush2.bf16.msra.mxu0 %v3147
        %3246 = vmatprep.subr.bf16.mxu0 0
        %3247 = vmatpush2.bf16.msra.mxu0 %v3146
        %3248 = vmatprep.subr.bf16.mxu0 0
        %3249 = vmatpush2.bf16.msra.mxu0 %v3145
        %3250 = vmatprep.subr.bf16.mxu0 0
        %3251 = vmatpush2.bf16.msra.mxu0 %v3144
        %3252 = vmatprep.subr.bf16.mxu0 0
        %3253 = vmatpush2.bf16.msra.mxu0 %v3143
        %3254 = vmatprep.subr.bf16.mxu0 0
        %3255 = vmatpush2.bf16.msra.mxu0 %v3142
        %3256 = vmatprep.subr.bf16.mxu0 0
        %3257 = vmatpush2.bf16.msra.mxu0 %v3141
        %3258 = vmatprep.subr.bf16.mxu0 0
        %3259 = vmatpush2.bf16.msra.mxu0 %v3140
        %3260 = vmatprep.mubr.bf16.mxu0 %v2951
        %3261 = vmatmul.mubr.bf16.gmra.mxu0 %v2950
        %v3262 = vpop.f32.mrf.mxu0
        %v3263 = vadd.f32 %v2987, %v3262
        %v3264 = vpop.f32.mrf.mxu0
        %v3265 = vpop.f32.mrf.mxu0
        %v3266 = vadd.f32 %v2987, %v3265
        %v3267 = vpop.f32.mrf.mxu0
        %3268 = vmatprep.mubr.bf16.mxu0 %v2955
        %3269 = vmatmul.mubr.bf16.gmra.mxu0 %v2953
        %v3270 = vpop.f32.mrf.mxu0
        %v3271 = vadd.f32 %v2987, %v3270
        %v3272 = vpop.f32.mrf.mxu0
        %v3273 = vpop.f32.mrf.mxu0
        %v3274 = vadd.f32 %v2987, %v3273
        %v3275 = vpop.f32.mrf.mxu0
        %3276 = vmatprep.mubr.bf16.mxu0 %v2959
        %3277 = vmatmul.mubr.bf16.gmra.mxu0 %v2957
        %v3278 = vpop.f32.mrf.mxu0
        %v3279 = vadd.f32 %v2987, %v3278
        %v3280 = vpop.f32.mrf.mxu0
        %v3281 = vpop.f32.mrf.mxu0
        %v3282 = vadd.f32 %v2987, %v3281
        %v3283 = vpop.f32.mrf.mxu0
        %3284 = vmatprep.mubr.bf16.mxu0 %v2963
        %3285 = vmatmul.mubr.bf16.gmra.mxu0 %v2961
        %v3286 = vpop.f32.mrf.mxu0
        %v3287 = vadd.f32 %v2987, %v3286
        %v3288 = vpop.f32.mrf.mxu0
        %v3289 = vpop.f32.mrf.mxu0
        %v3290 = vadd.f32 %v2987, %v3289
        %v3291 = vpop.f32.mrf.mxu0
        %3292 = vmatprep.mubr.bf16.mxu0 %v2968
        %3293 = vmatmul.mubr.bf16.gmra.mxu0 %v2967
        %v3294 = vpop.f32.mrf.mxu0
        %v3295 = vadd.f32 %v2987, %v3294
        %v3296 = vpop.f32.mrf.mxu0
        %v3297 = vpop.f32.mrf.mxu0
        %v3298 = vadd.f32 %v2987, %v3297
        %v3299 = vpop.f32.mrf.mxu0
        %3300 = vmatprep.mubr.bf16.mxu0 %v2972
        %3301 = vmatmul.mubr.bf16.gmra.mxu0 %v2970
        %v3302 = vpop.f32.mrf.mxu0
        %v3303 = vadd.f32 %v2987, %v3302
        %v3304 = vpop.f32.mrf.mxu0
        %v3305 = vpop.f32.mrf.mxu0
        %v3306 = vadd.f32 %v2987, %v3305
        %v3307 = vpop.f32.mrf.mxu0
        %3308 = vmatprep.mubr.bf16.mxu0 %v2976
        %3309 = vmatmul.mubr.bf16.gmra.mxu0 %v2974
        %v3310 = vpop.f32.mrf.mxu0
        %v3311 = vadd.f32 %v2987, %v3310
        %v3312 = vpop.f32.mrf.mxu0
        %v3313 = vpop.f32.mrf.mxu0
        %v3314 = vadd.f32 %v2987, %v3313
        %v3315 = vpop.f32.mrf.mxu0
        %3316 = vmatprep.mubr.bf16.mxu0 %v2980
        %3317 = vmatmul.mubr.bf16.gmra.mxu0 %v2978
        %v3318 = vpop.f32.mrf.mxu0
        %v3319 = vadd.f32 %v2987, %v3318
        %v3320 = vpop.f32.mrf.mxu0
        %v3321 = vpop.f32.mrf.mxu0
        %v3322 = vadd.f32 %v2987, %v3321
        %v3323 = vpop.f32.mrf.mxu0
        %3324 = vdwg.mxu0
        %3325 = vmatprep.subr.bf16.mxu0 0
        %3326 = vmatpush1.bf16.msra.mxu0 %v3155
        %3327 = vmatprep.subr.bf16.mxu0 0
        %3328 = vmatpush1.bf16.msra.mxu0 %v3154
        %3329 = vmatprep.subr.bf16.mxu0 0
        %3330 = vmatpush1.bf16.msra.mxu0 %v3153
        %3331 = vmatprep.subr.bf16.mxu0 0
        %3332 = vmatpush1.bf16.msra.mxu0 %v3152
        %3333 = vmatprep.subr.bf16.mxu0 0
        %3334 = vmatpush1.bf16.msra.mxu0 %v3151
        %3335 = vmatprep.subr.bf16.mxu0 0
        %3336 = vmatpush1.bf16.msra.mxu0 %v3150
        %3337 = vmatprep.subr.bf16.mxu0 0
        %3338 = vmatpush1.bf16.msra.mxu0 %v3149
        %3339 = vmatprep.subr.bf16.mxu0 0
        %3340 = vmatpush1.bf16.msra.mxu0 %v3148
        %3341 = vmatprep.subr.bf16.mxu0 0
        %3342 = vmatpush2.bf16.msra.mxu0 %v3163
        %3343 = vmatprep.subr.bf16.mxu0 0
        %3344 = vmatpush2.bf16.msra.mxu0 %v3162
        %3345 = vmatprep.subr.bf16.mxu0 0
        %3346 = vmatpush2.bf16.msra.mxu0 %v3161
        %3347 = vmatprep.subr.bf16.mxu0 0
        %3348 = vmatpush2.bf16.msra.mxu0 %v3160
        %3349 = vmatprep.subr.bf16.mxu0 0
        %3350 = vmatpush2.bf16.msra.mxu0 %v3159
        %3351 = vmatprep.subr.bf16.mxu0 0
        %3352 = vmatpush2.bf16.msra.mxu0 %v3158
        %3353 = vmatprep.subr.bf16.mxu0 0
        %3354 = vmatpush2.bf16.msra.mxu0 %v3157
        %3355 = vmatprep.subr.bf16.mxu0 0
        %3356 = vmatpush2.bf16.msra.mxu0 %v3156
        %3357 = vmatprep.mubr.bf16.mxu0 %v2953
        %3358 = vmatmul.mubr.bf16.gmra.mxu0 %v2952
        %v3359 = vpop.f32.mrf.mxu0
        %v3360 = vadd.f32 %v3263, %v3359
        %v3361 = vpop.f32.mrf.mxu0
        %v3362 = vpop.f32.mrf.mxu0
        %v3363 = vadd.f32 %v3266, %v3362
        %v3364 = vpop.f32.mrf.mxu0
        %3365 = vmatprep.mubr.bf16.mxu0 %v2957
        %3366 = vmatmul.mubr.bf16.gmra.mxu0 %v2956
        %v3367 = vpop.f32.mrf.mxu0
        %v3368 = vadd.f32 %v3271, %v3367
        %v3369 = vpop.f32.mrf.mxu0
        %v3370 = vpop.f32.mrf.mxu0
        %v3371 = vadd.f32 %v3274, %v3370
        %v3372 = vpop.f32.mrf.mxu0
        %3373 = vmatprep.mubr.bf16.mxu0 %v2961
        %3374 = vmatmul.mubr.bf16.gmra.mxu0 %v2960
        %v3375 = vpop.f32.mrf.mxu0
        %v3376 = vadd.f32 %v3279, %v3375
        %v3377 = vpop.f32.mrf.mxu0
        %v3378 = vpop.f32.mrf.mxu0
        %v3379 = vadd.f32 %v3282, %v3378
        %v3380 = vpop.f32.mrf.mxu0
        %3381 = vmatprep.mubr.bf16.mxu0 %v2965
        %3382 = vmatmul.mubr.bf16.gmra.mxu0 %v2964
        %v3383 = vpop.f32.mrf.mxu0
        %v3384 = vadd.f32 %v3287, %v3383
        %v3385 = vpop.f32.mrf.mxu0
        %v3386 = vpop.f32.mrf.mxu0
        %v3387 = vadd.f32 %v3290, %v3386
        %v3388 = vpop.f32.mrf.mxu0
        %3389 = vmatprep.mubr.bf16.mxu0 %v2970
        %3390 = vmatmul.mubr.bf16.gmra.mxu0 %v2969
        %v3391 = vpop.f32.mrf.mxu0
        %v3392 = vadd.f32 %v3295, %v3391
        %v3393 = vpop.f32.mrf.mxu0
        %v3394 = vpop.f32.mrf.mxu0
        %v3395 = vadd.f32 %v3298, %v3394
        %v3396 = vpop.f32.mrf.mxu0
        %3397 = vmatprep.mubr.bf16.mxu0 %v2974
        %3398 = vmatmul.mubr.bf16.gmra.mxu0 %v2973
        %v3399 = vpop.f32.mrf.mxu0
        %v3400 = vadd.f32 %v3303, %v3399
        %v3401 = vpop.f32.mrf.mxu0
        %v3402 = vpop.f32.mrf.mxu0
        %v3403 = vadd.f32 %v3306, %v3402
        %v3404 = vpop.f32.mrf.mxu0
        %3405 = vmatprep.mubr.bf16.mxu0 %v2978
        %3406 = vmatmul.mubr.bf16.gmra.mxu0 %v2977
        %v3407 = vpop.f32.mrf.mxu0
        %v3408 = vadd.f32 %v3311, %v3407
        %v3409 = vpop.f32.mrf.mxu0
        %v3410 = vpop.f32.mrf.mxu0
        %v3411 = vadd.f32 %v3314, %v3410
        %v3412 = vpop.f32.mrf.mxu0
        %3413 = vmatprep.mubr.bf16.mxu0 %v2982
        %3414 = vmatmul.mubr.bf16.gmra.mxu0 %v2981
        %v3415 = vpop.f32.mrf.mxu0
        %v3416 = vadd.f32 %v3319, %v3415
        %v3417 = vpop.f32.mrf.mxu0
        %v3418 = vpop.f32.mrf.mxu0
        %v3419 = vadd.f32 %v3322, %v3418
        %v3420 = vpop.f32.mrf.mxu0
        %3421 = vdwg.mxu0
        %3422 = vmatprep.subr.bf16.mxu0 0
        %3423 = vmatpush1.bf16.msra.mxu0 0
        %3424 = vmatprep.subr.bf16.mxu0 0
        %3425 = vmatpush1.bf16.msra.mxu0 0
        %3426 = vmatprep.subr.bf16.mxu0 0
        %3427 = vmatpush1.bf16.msra.mxu0 0
        %3428 = vmatprep.subr.bf16.mxu0 0
        %3429 = vmatpush1.bf16.msra.mxu0 0
        %3430 = vmatprep.subr.bf16.mxu0 0
        %3431 = vmatpush1.bf16.msra.mxu0 %v3167
        %3432 = vmatprep.subr.bf16.mxu0 0
        %3433 = vmatpush1.bf16.msra.mxu0 %v3166
        %3434 = vmatprep.subr.bf16.mxu0 0
        %3435 = vmatpush1.bf16.msra.mxu0 %v3165
        %3436 = vmatprep.subr.bf16.mxu0 0
        %3437 = vmatpush1.bf16.msra.mxu0 %v3164
        %3438 = vmatprep.subr.bf16.mxu0 0
        %3439 = vmatpush2.bf16.msra.mxu0 0
        %3440 = vmatprep.subr.bf16.mxu0 0
        %3441 = vmatpush2.bf16.msra.mxu0 0
        %3442 = vmatprep.subr.bf16.mxu0 0
        %3443 = vmatpush2.bf16.msra.mxu0 0
        %3444 = vmatprep.subr.bf16.mxu0 0
        %3445 = vmatpush2.bf16.msra.mxu0 0
        %3446 = vmatprep.subr.bf16.mxu0 0
        %3447 = vmatpush2.bf16.msra.mxu0 0
        %3448 = vmatprep.subr.bf16.mxu0 0
        %3449 = vmatpush2.bf16.msra.mxu0 0
        %3450 = vmatprep.subr.bf16.mxu0 0
        %3451 = vmatpush2.bf16.msra.mxu0 0
        %3452 = vmatprep.subr.bf16.mxu0 0
        %3453 = vmatpush2.bf16.msra.mxu0 0
        %3454 = vmatprep.mubr.bf16.mxu0 0
        %3455 = vmatmul.mubr.bf16.gmra.mxu0 %v3205
        %v3456 = vpop.f32.mrf.mxu0
        %v3457 = vadd.f32 %v3360, %v3456
        %v3458 = vpop.f32.mrf.mxu0
        %v3459 = vpop.f32.mrf.mxu0
        %v3460 = vadd.f32 %v3363, %v3459
        %v3461 = vpop.f32.mrf.mxu0
        %3462 = vmatprep.mubr.bf16.mxu0 0
        %3463 = vmatmul.mubr.bf16.gmra.mxu0 %v3208
        %v3464 = vpop.f32.mrf.mxu0
        %v3465 = vadd.f32 %v3368, %v3464
        %v3466 = vpop.f32.mrf.mxu0
        %v3467 = vpop.f32.mrf.mxu0
        %v3468 = vadd.f32 %v3371, %v3467
        %v3469 = vpop.f32.mrf.mxu0
        %3470 = vmatprep.mubr.bf16.mxu0 0
        %3471 = vmatmul.mubr.bf16.gmra.mxu0 %v3211
        %v3472 = vpop.f32.mrf.mxu0
        %v3473 = vadd.f32 %v3376, %v3472
        %v3474 = vpop.f32.mrf.mxu0
        %v3475 = vpop.f32.mrf.mxu0
        %v3476 = vadd.f32 %v3379, %v3475
        %v3477 = vpop.f32.mrf.mxu0
        %3478 = vmatprep.mubr.bf16.mxu0 0
        %3479 = vmatmul.mubr.bf16.gmra.mxu0 %v3214
        %v3480 = vpop.f32.mrf.mxu0
        %v3481 = vadd.f32 %v3384, %v3480
        %v3482 = vpop.f32.mrf.mxu0
        %v3483 = vpop.f32.mrf.mxu0
        %v3484 = vadd.f32 %v3387, %v3483
        %v3485 = vpop.f32.mrf.mxu0
        %3486 = vmatprep.mubr.bf16.mxu0 0
        %3487 = vmatmul.mubr.bf16.gmra.mxu0 %v3217
        %v3488 = vpop.f32.mrf.mxu0
        %v3489 = vadd.f32 %v3392, %v3488
        %v3490 = vpop.f32.mrf.mxu0
        %v3491 = vpop.f32.mrf.mxu0
        %v3492 = vadd.f32 %v3395, %v3491
        %v3493 = vpop.f32.mrf.mxu0
        %3494 = vmatprep.mubr.bf16.mxu0 0
        %3495 = vmatmul.mubr.bf16.gmra.mxu0 %v3220
        %v3496 = vpop.f32.mrf.mxu0
        %v3497 = vadd.f32 %v3400, %v3496
        %v3498 = vpop.f32.mrf.mxu0
        %v3499 = vpop.f32.mrf.mxu0
        %v3500 = vadd.f32 %v3403, %v3499
        %v3501 = vpop.f32.mrf.mxu0
        %3502 = vmatprep.mubr.bf16.mxu0 0
        %3503 = vmatmul.mubr.bf16.gmra.mxu0 %v3223
        %v3504 = vpop.f32.mrf.mxu0
        %v3505 = vadd.f32 %v3408, %v3504
        %v3506 = vpop.f32.mrf.mxu0
        %v3507 = vpop.f32.mrf.mxu0
        %v3508 = vadd.f32 %v3411, %v3507
        %v3509 = vpop.f32.mrf.mxu0
        %3510 = vmatprep.mubr.bf16.mxu0 0
        %3511 = vmatmul.mubr.bf16.gmra.mxu0 %v3226
        %v3512 = vpop.f32.mrf.mxu0
        %v3513 = vadd.f32 %v3416, %v3512
        %v3514 = vpop.f32.mrf.mxu0
        %v3515 = vpop.f32.mrf.mxu0
        %v3516 = vadd.f32 %v3419, %v3515
        %v3517 = vpop.f32.mrf.mxu0
        %3518 = vdwg.mxu0
        %v3519 = vadd.f32 %v3457, %v1535
        %v3520 = vadd.f32 %v3460, %v1538
        %v3521 = vadd.f32 %v3465, %v1541
        %v3522 = vadd.f32 %v3468, %v1544
        %v3523 = vadd.f32 %v3473, %v1547
        %v3524 = vadd.f32 %v3476, %v1550
        %v3525 = vadd.f32 %v3481, %v1553
        %v3526 = vadd.f32 %v3484, %v1745
        %v3527 = vadd.f32 %v3489, %v1559
        %v3528 = vadd.f32 %v3492, %v1562
        %v3529 = vadd.f32 %v3497, %v1565
        %v3530 = vadd.f32 %v3500, %v1568
        %v3531 = vadd.f32 %v3505, %v1571
        %v3532 = vadd.f32 %v3508, %v1574
        %v3533 = vadd.f32 %v3513, %v1577
        %v3534 = vadd.f32 %v3516, %v1748
        %s3535 = scalar_lea.vmem [#allocation2], 16
        %3536 = vst.msk [vmem:[%s3535 + $0x1] sm:$0xff] %vm1851, %v3519
        %3537 = vst.msk [vmem:[%s3535 + $0x11] sm:$0xff] %vm1851, %v3520
        %3538 = vst.msk [vmem:[%s3535 + $0x21] sm:$0xff] %vm1851, %v3521
        %3539 = vst.msk [vmem:[%s3535 + $0x31] sm:$0xff] %vm1851, %v3522
        %3540 = vst.msk [vmem:[%s3535 + $0x41] sm:$0xff] %vm1851, %v3523
        %3541 = vst.msk [vmem:[%s3535 + $0x51] sm:$0xff] %vm1851, %v3524
        %3542 = vst.msk [vmem:[%s3535 + $0x61] sm:$0xff] %vm1851, %v3525
        %3543 = vst.msk [vmem:[%s3535 + $0x71] sm:$0xff] %vm1851, %v3526
        %3544 = vst.msk [vmem:[%s3535 + $0xa1] sm:$0xff] %vm1851, %v3527
        %3545 = vst.msk [vmem:[%s3535 + $0xb1] sm:$0xff] %vm1851, %v3528
        %3546 = vst.msk [vmem:[%s3535 + $0xc1] sm:$0xff] %vm1851, %v3529
        %3547 = vst.msk [vmem:[%s3535 + $0xd1] sm:$0xff] %vm1851, %v3530
        %3548 = vst.msk [vmem:[%s3535 + $0xe1] sm:$0xff] %vm1851, %v3531
        %3549 = vst.msk [vmem:[%s3535 + $0xf1] sm:$0xff] %vm1851, %v3532
        %3550 = vst.msk [vmem:[%s3535 + $0x101] sm:$0xff] %vm1851, %v3533
        %3551 = vst.msk [vmem:[%s3535 + $0x111] sm:$0xff] %vm1851, %v3534
      $region40: #{forward_pallas.2} parent=31 // pred_fallthru
        _
      %p3552 = scmp.eq.s32.totalorder %s14, 16
      // Predicated region
      $region41: #{forward_pallas.2} parent=31 // pred_check
        %p3553 = pneg %p3552
      $region42: #{forward_pallas.2} parent=31 // pred_check_branch
        %3555 = sbr.rel (%p3553) target = $region44
      $region43: #{forward_pallas.2} parent=31 // pred_region
        %v3556 = vld [vmem:[#allocation2] sm:$0xff]
        %v3557 = vld [vmem:[#allocation2 + $0x8] sm:$0x3]
        %v3558 = vld [vmem:[#allocation2 + $0x10] sm:$0xff]
        %v3559 = vld [vmem:[#allocation2 + $0x18] sm:$0x3]
        %v3560 = vld [vmem:[#allocation2 + $0x20] sm:$0xff]
        %v3561 = vld [vmem:[#allocation2 + $0x28] sm:$0x3]
        %v3562 = vld [vmem:[#allocation2 + $0x30] sm:$0xff]
        %v3563 = vld [vmem:[#allocation2 + $0x38] sm:$0x3]
        %v3564 = vld [vmem:[#allocation2 + $0x40] sm:$0xff]
        %v3565 = vld [vmem:[#allocation2 + $0x48] sm:$0x3]
        %v3566 = vld [vmem:[#allocation2 + $0x50] sm:$0xff]
        %v3567 = vld [vmem:[#allocation2 + $0x58] sm:$0x3]
        %v3568 = vld [vmem:[#allocation2 + $0x60] sm:$0xff]
        %v3569 = vld [vmem:[#allocation2 + $0x68] sm:$0x3]
        %v3570 = vld [vmem:[#allocation2 + $0x70] sm:$0xff]
        %v3571 = vld [vmem:[#allocation2 + $0x78] sm:$0x3]
        %v3572 = vld [vmem:[#allocation2 + $0x80] sm:$0xff]
        %v3573 = vld [vmem:[#allocation2 + $0x88] sm:$0x3]
        %v3574 = vld [vmem:[#allocation2 + $0x90] sm:$0xff]
        %v3575 = vld [vmem:[#allocation2 + $0x98] sm:$0x3]
        %v3576 = vld [vmem:[#allocation2 + $0xa0] sm:$0xff]
        %v3577 = vld [vmem:[#allocation2 + $0xa8] sm:$0x3]
        %v3578 = vld [vmem:[#allocation2 + $0xb0] sm:$0xff]
        %v3579 = vld [vmem:[#allocation2 + $0xb8] sm:$0x3]
        %v3580 = vld [vmem:[#allocation2 + $0xc0] sm:$0xff]
        %v3581 = vld [vmem:[#allocation2 + $0xc8] sm:$0x3]
        %v3582 = vld [vmem:[#allocation2 + $0xd0] sm:$0xff]
        %v3583 = vld [vmem:[#allocation2 + $0xd8] sm:$0x3]
        %v3584 = vld [vmem:[#allocation2 + $0xe0] sm:$0xff]
        %v3585 = vld [vmem:[#allocation2 + $0xe8] sm:$0x3]
        %v3586 = vld [vmem:[#allocation2 + $0xf0] sm:$0xff]
        %v3587 = vld [vmem:[#allocation2 + $0xf8] sm:$0x3]
        %v3588 = vld [vmem:[#allocation2 + $0x100] sm:$0xff]
        %v3589 = vld [vmem:[#allocation2 + $0x108] sm:$0x3]
        %v3590 = vld [vmem:[#allocation2 + $0x110] sm:$0xff]
        %v3591 = vld [vmem:[#allocation2 + $0x118] sm:$0x3]
        %v3592 = vld [vmem:[#allocation2 + $0x120] sm:$0xff]
        %v3593 = vld [vmem:[#allocation2 + $0x128] sm:$0x3]
        %v3594 = vld [vmem:[#allocation2 + $0x130] sm:$0xff]
        %v3595 = vld [vmem:[#allocation2 + $0x138] sm:$0x3]
        %vm3596 = vcmask 523264
        %3597 = vst.msk [vmem:[%s3] sm:$0xff] %vm3596, %v3556
        %vm3598 = vcmask 517120
        %3599 = vst.msk [vmem:[%s3 + $0x8] sm:$0x3] %vm3598, %v3557
        %3600 = vst.msk [vmem:[%s3 + $0x10] sm:$0xff] %vm3596, %v3558
        %3601 = vst.msk [vmem:[%s3 + $0x18] sm:$0x3] %vm3598, %v3559
        %3602 = vst.msk [vmem:[%s3 + $0x20] sm:$0xff] %vm3596, %v3560
        %3603 = vst.msk [vmem:[%s3 + $0x28] sm:$0x3] %vm3598, %v3561
        %3604 = vst.msk [vmem:[%s3 + $0x30] sm:$0xff] %vm3596, %v3562
        %3605 = vst.msk [vmem:[%s3 + $0x38] sm:$0x3] %vm3598, %v3563
        %3606 = vst.msk [vmem:[%s3 + $0x40] sm:$0xff] %vm3596, %v3564
        %3607 = vst.msk [vmem:[%s3 + $0x48] sm:$0x3] %vm3598, %v3565
        %3608 = vst.msk [vmem:[%s3 + $0x50] sm:$0xff] %vm3596, %v3566
        %3609 = vst.msk [vmem:[%s3 + $0x58] sm:$0x3] %vm3598, %v3567
        %3610 = vst.msk [vmem:[%s3 + $0x60] sm:$0xff] %vm3596, %v3568
        %3611 = vst.msk [vmem:[%s3 + $0x68] sm:$0x3] %vm3598, %v3569
        %3612 = vst.msk [vmem:[%s3 + $0x70] sm:$0xff] %vm3596, %v3570
        %3613 = vst.msk [vmem:[%s3 + $0x78] sm:$0x3] %vm3598, %v3571
        %3614 = vst.msk [vmem:[%s3 + $0x80] sm:$0xff] %vm3596, %v3572
        %3615 = vst.msk [vmem:[%s3 + $0x88] sm:$0x3] %vm3598, %v3573
        %3616 = vst.msk [vmem:[%s3 + $0x90] sm:$0xff] %vm3596, %v3574
        %3617 = vst.msk [vmem:[%s3 + $0x98] sm:$0x3] %vm3598, %v3575
        %3618 = vst.msk [vmem:[%s3 + $0xa0] sm:$0xff] %vm3596, %v3576
        %3619 = vst.msk [vmem:[%s3 + $0xa8] sm:$0x3] %vm3598, %v3577
        %3620 = vst.msk [vmem:[%s3 + $0xb0] sm:$0xff] %vm3596, %v3578
        %3621 = vst.msk [vmem:[%s3 + $0xb8] sm:$0x3] %vm3598, %v3579
        %3622 = vst.msk [vmem:[%s3 + $0xc0] sm:$0xff] %vm3596, %v3580
        %3623 = vst.msk [vmem:[%s3 + $0xc8] sm:$0x3] %vm3598, %v3581
        %3624 = vst.msk [vmem:[%s3 + $0xd0] sm:$0xff] %vm3596, %v3582
        %3625 = vst.msk [vmem:[%s3 + $0xd8] sm:$0x3] %vm3598, %v3583
        %3626 = vst.msk [vmem:[%s3 + $0xe0] sm:$0xff] %vm3596, %v3584
        %3627 = vst.msk [vmem:[%s3 + $0xe8] sm:$0x3] %vm3598, %v3585
        %3628 = vst.msk [vmem:[%s3 + $0xf0] sm:$0xff] %vm3596, %v3586
        %3629 = vst.msk [vmem:[%s3 + $0xf8] sm:$0x3] %vm3598, %v3587
        %3630 = vst.msk [vmem:[%s3 + $0x100] sm:$0xff] %vm3596, %v3588
        %3631 = vst.msk [vmem:[%s3 + $0x108] sm:$0x3] %vm3598, %v3589
        %3632 = vst.msk [vmem:[%s3 + $0x110] sm:$0xff] %vm3596, %v3590
        %3633 = vst.msk [vmem:[%s3 + $0x118] sm:$0x3] %vm3598, %v3591
        %3634 = vst.msk [vmem:[%s3 + $0x120] sm:$0xff] %vm3596, %v3592
        %3635 = vst.msk [vmem:[%s3 + $0x128] sm:$0x3] %vm3598, %v3593
        %3636 = vst.msk [vmem:[%s3 + $0x130] sm:$0xff] %vm3596, %v3594
        %3637 = vst.msk [vmem:[%s3 + $0x138] sm:$0x3] %vm3598, %v3595
      $region44: #{forward_pallas.2} parent=31 // pred_fallthru
        _
      // Predicated region
      $region45: #{forward_pallas.2} parent=31 // pred_check
        %p3638 = pneg %p100
      $region46: #{forward_pallas.2} parent=31 // pred_check_branch
        %3640 = sbr.rel (%p3638) target = $region48
      $region47: #{forward_pallas.2} parent=31 // pred_region
        _
      $region48: #{forward_pallas.2} parent=31 // pred_fallthru
        _
      // Predicated region
      $region49: #{forward_pallas.2} parent=31 // pred_check
        %p3641 = pneg %p100
      $region50: #{forward_pallas.2} parent=31 // pred_check_branch
        %3643 = sbr.rel (%p3641) target = $region52
      $region51: #{forward_pallas.2} parent=31 // pred_region
        _
      $region52: #{forward_pallas.2} parent=31 // pred_fallthru
        _
    $region32: #{forward_pallas.2} parent=5 // pred_fallthru
      _
    %p3644 = scmp.le.s32.totalorder 2, %s9
    // Predicated region
    $region53: #{forward_pallas.2} parent=5 // pred_check
      %p3645 = pneg %p3644
    $region54: #{forward_pallas.2} parent=5 // pred_check_branch
      %3647 = sbr.rel (%p3645) target = $region56
    $region55: #{forward_pallas.2} parent=5 // pred_region
      %s3648 = ssub.s32 %s9, 2
    $region56: #{forward_pallas.2} parent=5 // pred_fallthru
      _
  $region6: #{forward_pallas.2} parent=0 // loop_footer
    %s13 = sadd.s32 1, %s9
  $region7: #{forward_pallas.2} parent=0 // loop_footer_branch
    %8 = sbr.rel target = $region3
  $region8: #{forward_pallas.2} parent=0 // loop_exit
    _

</llo_original>
